<compile_context>
chip_gen: v7x
topology: tpu7x:2x2x1
jax: 0.10.0
libtpu: 0.0.40
codegen_flags: <defaults>
</compile_context>

<pallas_src>
import numpy as np
import jax
import jax.numpy as jnp
from jax.experimental import pallas as pl
from jax.experimental.pallas import tpu as pltpu


# ----------------------------------------------------------------------------
# Fused kernel: fc -> ConvT1 -> ConvT2 (once, j==0) ; ConvT3 streamed per slab
# ----------------------------------------------------------------------------
def _decoder_kernel(z_ref, wfc_ref, bfc_ref, m1_ref, c1_ref, m2_ref, c2_ref,
                    m3_ref, c3_ref, o_ref, h2_ref):
    f32 = jnp.float32
    bf16 = jnp.bfloat16
    j = pl.program_id(0)

    @pl.when(j == 0)
    def _():
        # fc + ReLU (tiny K = z_dim; kept in f32)
        h = jnp.dot(z_ref[...], wfc_ref[...],
                    preferred_element_type=f32) + bfc_ref[...]
        h = jnp.maximum(h, 0.0)
        # ConvTranspose2d #1 (stride 1, pad 1) as dense GEMM + ReLU
        h = jnp.dot(h.astype(bf16), m1_ref[...],
                    preferred_element_type=f32) + c1_ref[...]
        h = jnp.maximum(h, 0.0)
        # ConvTranspose2d #2 (stride 2, pad 2) as dense GEMM + ReLU
        h = jnp.dot(h.astype(bf16), m2_ref[...],
                    preferred_element_type=f32) + c2_ref[...]
        # stash bf16 activation for the streamed last layer
        h2_ref[...] = jnp.maximum(h, 0.0).astype(bf16)

    # ConvTranspose2d #3 (stride 2, pad 1): one lane-dense output column slab
    # per grid step; the slab's weight DMA overlaps the j==0 compute above.
    y = jnp.dot(h2_ref[...], m3_ref[...],
                preferred_element_type=f32) + c3_ref[...]
    # exact sigmoid: denom >= 1, so output stays in (0, 1]
    o_ref[...] = pl.reciprocal(1.0 + jnp.exp(-y)).astype(o_ref.dtype)


def _pick_col_tile(n):
    """Pick a lane-dense column-slab width for the streamed last layer."""
    for tn in (512, 256, 128):
        if n % tn == 0 and n // tn >= 2:
            return tn
    return n   # fall back to a single step


def decoder_forward(z, ops):
    """z: (B, z_dim) f32 -> (B, c_dim, sqrt(x_dim), sqrt(x_dim)) f32."""
    B = z.shape[0]
    k3, n3 = ops["m3"].shape
    tn = _pick_col_tile(n3)
    grid = (n3 // tn,)

    def full_block(a):
        nd = a.ndim
        return pl.BlockSpec(a.shape, lambda j, _nd=nd: (0,) * _nd)

    in_specs = [
        full_block(z),
        full_block(ops["wfc"]), full_block(ops["bfc"]),
        full_block(ops["m1"]), full_block(ops["c1"]),
        full_block(ops["m2"]), full_block(ops["c2"]),
        pl.BlockSpec((k3, tn), lambda j: (0, j)),   # m3: streamed per slab
        pl.BlockSpec((1, tn), lambda j: (0, j)),    # c3: streamed per slab
    ]
    out = pl.pallas_call(
        _decoder_kernel,
        out_shape=jax.ShapeDtypeStruct((B, n3), jnp.float32),
        grid_spec=pltpu.PrefetchScalarGridSpec(
            num_scalar_prefetch=0,
            grid=grid,
            in_specs=in_specs,
            out_specs=pl.BlockSpec((B, tn), lambda j: (0, j)),
            scratch_shapes=[pltpu.VMEM((B, k3), jnp.bfloat16)],  # h2 carry
        ),
        compiler_params=pltpu.CompilerParams(
            # sequential: h2 scratch written at j==0 is read by later steps
            dimension_semantics=("arbitrary",),
            vmem_limit_bytes=16 * 1024 * 1024,   # bf16 weights: ~5 MiB needed
        ),
    )(z, ops["wfc"], ops["bfc"], ops["m1"], ops["c1"],
      ops["m2"], ops["c2"], ops["m3"], ops["c3"])
    c, oh, ow = ops["out_chw"]
    return out.reshape(B, c, oh, ow)   # flat (co, oh, ow) C-order == NCHW


# ----------------------------------------------------------------------------
# Weight preparation (host-side, once): ConvTranspose2d as a dense linear map
# on the per-sample flattened NCHW activation.
#   out[co, oh, ow] = bias[co] + sum_{ci, kh, kw} x[ci, ih, iw] * w[ci, co, kh, kw]
#   with oh = ih*stride + kh - padding, ow = iw*stride + kw - padding.
# ----------------------------------------------------------------------------
def _convt_as_matrix(w, b, stride, padding, H, W):
    w = np.asarray(w, np.float32)
    b = np.asarray(b, np.float32)
    Cin, Cout, KH, KW = w.shape
    OH = (H - 1) * stride - 2 * padding + KH
    OW = (W - 1) * stride - 2 * padding + KW
    M = np.zeros((Cin, H, W, Cout, OH, OW), np.float32)
    for ih in range(H):
        for kh in range(KH):
            oh = ih * stride + kh - padding
            if oh < 0 or oh >= OH:
                continue
            for iw in range(W):
                for kw in range(KW):
                    ow = iw * stride + kw - padding
                    if ow < 0 or ow >= OW:
                        continue
                    M[:, ih, iw, :, oh, ow] += w[:, :, kh, kw]
    M = M.reshape(Cin * H * W, Cout * OH * OW)
    cvec = np.repeat(b, OH * OW).reshape(1, Cout * OH * OW)   # (co, oh, ow) C-order
    return jnp.asarray(M), jnp.asarray(cvec), (Cout, OH, OW)


def prepare_decoder(params, *, x_dim, filt):
    s = int(np.sqrt(x_dim) / 4)
    m1, c1, (_, h1, w1) = _convt_as_matrix(params["w1"], params["b1"], 1, 1, s, s)
    m2, c2, (_, h2, w2) = _convt_as_matrix(params["w2"], params["b2"], 2, 2, h1, w1)
    m3, c3, chw3 = _convt_as_matrix(params["w3"], params["b3"], 2, 1, h2, w2)
    return dict(
        wfc=params["fc_w"].astype(jnp.float32),
        bfc=params["fc_b"].reshape(1, -1).astype(jnp.float32),
        # bf16 GEMM operands: halves HBM/VMEM weight traffic (DMA-bound at
        # small batch); accumulation stays f32 inside the kernel.
        m1=m1.astype(jnp.bfloat16), c1=c1,
        m2=m2.astype(jnp.bfloat16), c2=c2,
        m3=m3.astype(jnp.bfloat16), c3=c3,
        out_chw=chw3,
    )


# ----------------------------------------------------------------------------
# Parameters (PyTorch layouts) and a pure-JAX reference for validation
# ----------------------------------------------------------------------------
def init_decoder_params(key, z_dim, c_dim, x_dim, filt):
    keys = jax.random.split(key, 8)
    fc_out = filt * x_dim // 16

    def u(k, shape, fan_in):
        bound = 1.0 / np.sqrt(fan_in)
        return jax.random.uniform(k, shape, jnp.float32, -bound, bound)

    return dict(
        fc_w=u(keys[0], (z_dim, fc_out), z_dim),        # Linear weight (in, out)
        fc_b=u(keys[1], (fc_out,), z_dim),
        # ConvTranspose2d weights, PyTorch layout (Cin, Cout, KH, KW);
        # fan_in = Cout*KH*KW to match torch's kaiming bound for ConvTranspose.
        w1=u(keys[2], (filt, filt, 4, 4), filt * 16),
        b1=u(keys[3], (filt,), filt * 16),
        w2=u(keys[4], (filt, filt, 4, 4), filt * 16),
        b2=u(keys[5], (filt,), filt * 16),
        w3=u(keys[6], (filt, c_dim, 4, 4), c_dim * 16),
        b3=u(keys[7], (c_dim,), c_dim * 16),
    )


def _reference_forward(z, params, *, x_dim, filt):
    B = z.shape[0]
    s = int(np.sqrt(x_dim) / 4)
    h = jnp.maximum(z @ params["fc_w"] + params["fc_b"], 0.0)
    x = h.reshape(B, filt, s, s)

    def convt(x, w, b, stride, padding):
        K = w.shape[2]
        wf = jnp.flip(w, (2, 3)).transpose(1, 0, 2, 3)   # (Cout, Cin, KH, KW)
        y = jax.lax.conv_general_dilated(
            x, wf, window_strides=(1, 1),
            padding=[(K - 1 - padding, K - 1 - padding)] * 2,
            lhs_dilation=(stride, stride),
            dimension_numbers=("NCHW", "OIHW", "NCHW"))
        return y + b.reshape(1, -1, 1, 1)

    x = jnp.maximum(convt(x, params["w1"], params["b1"], 1, 1), 0.0)
    x = jnp.maximum(convt(x, params["w2"], params["b2"], 2, 2), 0.0)
    return jax.nn.sigmoid(convt(x, params["w3"], params["b3"], 2, 1))


if __name__ == "__main__":
    # small shapes: batch=2, z_dim=8, c_dim=3, x_dim=256 (16x16 image), 16 filters
    z_dim, c_dim, x_dim, filt = 8, 3, 256, 16
    key = jax.random.PRNGKey(0)
    kz, kp = jax.random.split(key)
    z = jax.random.normal(kz, (2, z_dim), jnp.float32)
    params = init_decoder_params(kp, z_dim, c_dim, x_dim, filt)
    ops = prepare_decoder(params, x_dim=x_dim, filt=filt)

    out = decoder_forward(z, ops)
    out = jax.block_until_ready(out)

    side = int(np.sqrt(x_dim))
    assert out.shape == (2, c_dim, side, side), out.shape
    assert bool(jnp.all(jnp.isfinite(out)))
    # exact reciprocal => strictly inside [0, 1]
    assert bool(jnp.all((out >= 0.0) & (out <= 1.0)))

    ref = jax.block_until_ready(_reference_forward(z, params, x_dim=x_dim, filt=filt))
    # bf16 GEMM operands with f32 accumulation: comfortably within 2e-2
    np.testing.assert_allclose(np.asarray(out), np.asarray(ref), atol=2e-2, rtol=2e-2)
    print("KERNEL_OK")
</pallas_src>

<mosaic_0001>
module attributes {stable_mosaic.version = 11 : i64} {
  func.func @_decoder_kernel(%arg0: i32, %arg1: memref<2x8xf32, #tpu.memory_space<vmem>>, %arg2: memref<8x256xf32, #tpu.memory_space<vmem>>, %arg3: memref<1x256xf32, #tpu.memory_space<vmem>>, %arg4: memref<256x400xbf16, #tpu.memory_space<vmem>>, %arg5: memref<1x400xf32, #tpu.memory_space<vmem>>, %arg6: memref<400x1024xbf16, #tpu.memory_space<vmem>>, %arg7: memref<1x1024xf32, #tpu.memory_space<vmem>>, %arg8: memref<1024x256xbf16, #tpu.memory_space<vmem>>, %arg9: memref<1x256xf32, #tpu.memory_space<vmem>>, %arg10: memref<2x256xf32, #tpu.memory_space<vmem>>, %arg11: memref<2x1024xbf16, #tpu.memory_space<vmem>>) attributes {dimension_semantics = [#tpu.dimension_semantics<arbitrary>], iteration_bounds = array<i64: 3>, scalar_prefetch = 0 : i64, scratch_operands = 1 : i64, tpu.core_type = #tpu.core_type<tc>, window_params = [{pipeline_mode = #tpu.pipeline_mode<synchronous>, transform_indices = @transform_0, window_bounds = array<i64: 2, 8>}, {pipeline_mode = #tpu.pipeline_mode<synchronous>, transform_indices = @transform_1, window_bounds = array<i64: 8, 256>}, {pipeline_mode = #tpu.pipeline_mode<synchronous>, transform_indices = @transform_2, window_bounds = array<i64: 1, 256>}, {pipeline_mode = #tpu.pipeline_mode<synchronous>, transform_indices = @transform_3, window_bounds = array<i64: 256, 400>}, {pipeline_mode = #tpu.pipeline_mode<synchronous>, transform_indices = @transform_4, window_bounds = array<i64: 1, 400>}, {pipeline_mode = #tpu.pipeline_mode<synchronous>, transform_indices = @transform_5, window_bounds = array<i64: 400, 1024>}, {pipeline_mode = #tpu.pipeline_mode<synchronous>, transform_indices = @transform_6, window_bounds = array<i64: 1, 1024>}, {transform_indices = @transform_7, window_bounds = array<i64: 1024, 256>}, {transform_indices = @transform_8, window_bounds = array<i64: 1, 256>}, {transform_indices = @transform_9, window_bounds = array<i64: 2, 256>}]} {
    %c0_i32 = arith.constant 0 : i32
    %0 = arith.cmpi eq, %arg0, %c0_i32 : i32
    %1 = arith.extui %0 : i1 to i32
    %c0_i32_0 = arith.constant 0 : i32
    %2 = arith.cmpi ne, %1, %c0_i32_0 : i32
    scf.if %2 {
      %c0_10 = arith.constant 0 : index
      %c0_11 = arith.constant 0 : index
      %16 = vector.load %arg1[%c0_10, %c0_11] : memref<2x8xf32, #tpu.memory_space<vmem>>, vector<2x8xf32>
      %c0_12 = arith.constant 0 : index
      %c0_13 = arith.constant 0 : index
      %17 = vector.load %arg2[%c0_12, %c0_13] : memref<8x256xf32, #tpu.memory_space<vmem>>, vector<8x256xf32>
      %cst_14 = arith.constant dense<0.000000e+00> : vector<2x256xf32>
      %18 = tpu.matmul %16, %17, %cst_14 {dimension_numbers = #tpu.dot_dimension_numbers<[1], [0], [0], [1], [0, 0, 1, 1], [], []>} : vector<2x8xf32>, vector<8x256xf32>, vector<2x256xf32> -> vector<2x256xf32>
      %c0_15 = arith.constant 0 : index
      %c0_16 = arith.constant 0 : index
      %19 = vector.load %arg3[%c0_15, %c0_16] : memref<1x256xf32, #tpu.memory_space<vmem>>, vector<1x256xf32>
      %20 = vector.broadcast %19 : vector<1x256xf32> to vector<2x256xf32>
      %21 = arith.addf %18, %20 : vector<2x256xf32>
      %cst_17 = arith.constant 0.000000e+00 : f32
      %22 = vector.broadcast %cst_17 : f32 to vector<2x256xf32>
      %23 = arith.maximumf %21, %22 : vector<2x256xf32>
      %24 = arith.truncf %23 : vector<2x256xf32> to vector<2x256xbf16>
      %c0_18 = arith.constant 0 : index
      %c0_19 = arith.constant 0 : index
      %25 = vector.load %arg4[%c0_18, %c0_19] : memref<256x400xbf16, #tpu.memory_space<vmem>>, vector<256x400xbf16>
      %cst_20 = arith.constant dense<0.000000e+00> : vector<2x400xf32>
      %26 = tpu.matmul %24, %25, %cst_20 {dimension_numbers = #tpu.dot_dimension_numbers<[1], [0], [0], [1], [0, 0, 1, 1], [], []>} : vector<2x256xbf16>, vector<256x400xbf16>, vector<2x400xf32> -> vector<2x400xf32>
      %c0_21 = arith.constant 0 : index
      %c0_22 = arith.constant 0 : index
      %27 = vector.load %arg5[%c0_21, %c0_22] : memref<1x400xf32, #tpu.memory_space<vmem>>, vector<1x400xf32>
      %28 = vector.broadcast %27 : vector<1x400xf32> to vector<2x400xf32>
      %29 = arith.addf %26, %28 : vector<2x400xf32>
      %cst_23 = arith.constant 0.000000e+00 : f32
      %30 = vector.broadcast %cst_23 : f32 to vector<2x400xf32>
      %31 = arith.maximumf %29, %30 : vector<2x400xf32>
      %32 = arith.truncf %31 : vector<2x400xf32> to vector<2x400xbf16>
      %c0_24 = arith.constant 0 : index
      %c0_25 = arith.constant 0 : index
      %33 = vector.load %arg6[%c0_24, %c0_25] : memref<400x1024xbf16, #tpu.memory_space<vmem>>, vector<400x1024xbf16>
      %cst_26 = arith.constant dense<0.000000e+00> : vector<2x1024xf32>
      %34 = tpu.matmul %32, %33, %cst_26 {dimension_numbers = #tpu.dot_dimension_numbers<[1], [0], [0], [1], [0, 0, 1, 1], [], []>} : vector<2x400xbf16>, vector<400x1024xbf16>, vector<2x1024xf32> -> vector<2x1024xf32>
      %c0_27 = arith.constant 0 : index
      %c0_28 = arith.constant 0 : index
      %35 = vector.load %arg7[%c0_27, %c0_28] : memref<1x1024xf32, #tpu.memory_space<vmem>>, vector<1x1024xf32>
      %36 = vector.broadcast %35 : vector<1x1024xf32> to vector<2x1024xf32>
      %37 = arith.addf %34, %36 : vector<2x1024xf32>
      %cst_29 = arith.constant 0.000000e+00 : f32
      %38 = vector.broadcast %cst_29 : f32 to vector<2x1024xf32>
      %39 = arith.maximumf %37, %38 : vector<2x1024xf32>
      %40 = arith.truncf %39 : vector<2x1024xf32> to vector<2x1024xbf16>
      %c0_30 = arith.constant 0 : index
      %c0_31 = arith.constant 0 : index
      %41 = vector.load %arg11[%c0_30, %c0_31] : memref<2x1024xbf16, #tpu.memory_space<vmem>>, vector<2x1024xbf16>
      tpu.vector_store %arg11[%c0_30, %c0_31], %40 {strides = array<i32>} : memref<2x1024xbf16, #tpu.memory_space<vmem>>, vector<2x1024xbf16>,
    } else {
    }
    %c0 = arith.constant 0 : index
    %c0_1 = arith.constant 0 : index
    %3 = vector.load %arg11[%c0, %c0_1] : memref<2x1024xbf16, #tpu.memory_space<vmem>>, vector<2x1024xbf16>
    %c0_2 = arith.constant 0 : index
    %c0_3 = arith.constant 0 : index
    %4 = vector.load %arg8[%c0_2, %c0_3] : memref<1024x256xbf16, #tpu.memory_space<vmem>>, vector<1024x256xbf16>
    %cst = arith.constant dense<0.000000e+00> : vector<2x256xf32>
    %5 = tpu.matmul %3, %4, %cst {dimension_numbers = #tpu.dot_dimension_numbers<[1], [0], [0], [1], [0, 0, 1, 1], [], []>} : vector<2x1024xbf16>, vector<1024x256xbf16>, vector<2x256xf32> -> vector<2x256xf32>
    %c0_4 = arith.constant 0 : index
    %c0_5 = arith.constant 0 : index
    %6 = vector.load %arg9[%c0_4, %c0_5] : memref<1x256xf32, #tpu.memory_space<vmem>>, vector<1x256xf32>
    %7 = vector.broadcast %6 : vector<1x256xf32> to vector<2x256xf32>
    %8 = arith.addf %5, %7 : vector<2x256xf32>
    %cst_6 = arith.constant 0.000000e+00 : f32
    %9 = vector.broadcast %cst_6 : f32 to vector<2x256xf32>
    %10 = arith.subf %9, %8 : vector<2x256xf32>
    %11 = math.exp %10 : vector<2x256xf32>
    %cst_7 = arith.constant 1.000000e+00 : f32
    %12 = vector.broadcast %cst_7 : f32 to vector<2x256xf32>
    %13 = arith.addf %12, %11 : vector<2x256xf32>
    %14 = tpu.reciprocal %13 : vector<2x256xf32> -> vector<2x256xf32>
    %c0_8 = arith.constant 0 : index
    %c0_9 = arith.constant 0 : index
    %15 = vector.load %arg10[%c0_8, %c0_9] : memref<2x256xf32, #tpu.memory_space<vmem>>, vector<2x256xf32>
    tpu.vector_store %arg10[%c0_8, %c0_9], %14 {strides = array<i32>} : memref<2x256xf32, #tpu.memory_space<vmem>>, vector<2x256xf32>,
    return
  }
  func.func @transform_0(%arg0: i32) -> (i32, i32) {
    %c0_i32 = arith.constant 0 : i32
    %c0_i32_0 = arith.constant 0 : i32
    %c0_i32_1 = arith.constant 0 : i32
    return %c0_i32, %c0_i32_0 : i32, i32
  }
  func.func @transform_1(%arg0: i32) -> (i32, i32) {
    %c0_i32 = arith.constant 0 : i32
    %c0_i32_0 = arith.constant 0 : i32
    %c0_i32_1 = arith.constant 0 : i32
    return %c0_i32, %c0_i32_0 : i32, i32
  }
  func.func @transform_2(%arg0: i32) -> (i32, i32) {
    %c0_i32 = arith.constant 0 : i32
    %c0_i32_0 = arith.constant 0 : i32
    %c0_i32_1 = arith.constant 0 : i32
    return %c0_i32, %c0_i32_0 : i32, i32
  }
  func.func @transform_3(%arg0: i32) -> (i32, i32) {
    %c0_i32 = arith.constant 0 : i32
    %c0_i32_0 = arith.constant 0 : i32
    %c0_i32_1 = arith.constant 0 : i32
    return %c0_i32, %c0_i32_0 : i32, i32
  }
  func.func @transform_4(%arg0: i32) -> (i32, i32) {
    %c0_i32 = arith.constant 0 : i32
    %c0_i32_0 = arith.constant 0 : i32
    %c0_i32_1 = arith.constant 0 : i32
    return %c0_i32, %c0_i32_0 : i32, i32
  }
  func.func @transform_5(%arg0: i32) -> (i32, i32) {
    %c0_i32 = arith.constant 0 : i32
    %c0_i32_0 = arith.constant 0 : i32
    %c0_i32_1 = arith.constant 0 : i32
    return %c0_i32, %c0_i32_0 : i32, i32
  }
  func.func @transform_6(%arg0: i32) -> (i32, i32) {
    %c0_i32 = arith.constant 0 : i32
    %c0_i32_0 = arith.constant 0 : i32
    %c0_i32_1 = arith.constant 0 : i32
    return %c0_i32, %c0_i32_0 : i32, i32
  }
  func.func @transform_7(%arg0: i32) -> (i32, i32) {
    %c0_i32 = arith.constant 0 : i32
    %c0_i32_0 = arith.constant 0 : i32
    return %c0_i32, %arg0 : i32, i32
  }
  func.func @transform_8(%arg0: i32) -> (i32, i32) {
    %c0_i32 = arith.constant 0 : i32
    %c0_i32_0 = arith.constant 0 : i32
    return %c0_i32, %arg0 : i32, i32
  }
  func.func @transform_9(%arg0: i32) -> (i32, i32) {
    %c0_i32 = arith.constant 0 : i32
    %c0_i32_0 = arith.constant 0 : i32
    return %c0_i32, %arg0 : i32, i32
  }
}

</mosaic_0001>

<llo_original>
// kernel: tpu_custom_call.1
$region0: #{tpu_custom_call.1}
  #allocation0 [shape = 'u32[]', space=smem, size = 0x4, offset = 0x4, fixed_abs, tag = 'smem constant byte address 0x4 - core index']
  #allocation1 [shape = 'u32[144,128]{1,0:T(1,128)}', space=vmem, size = 0x12000, scoped, tag = 'internal scratch']
  #allocation2 [shape = 'bf16[2,1024]{1,0:T(2,128)(2,1)}', space=vmem, size = 0x1000, scoped, tag = 'scratch operand']
  %s0 = inlined_call_operand.hbm [shape: f32[2,8], index: 0, kind: input, shape index: {}]
  %s1 = inlined_call_operand.hbm [shape: f32[8,256], index: 1, kind: input, shape index: {}]
  %s2 = inlined_call_operand.hbm [shape: f32[1,256], index: 2, kind: input, shape index: {}]
  %s3 = inlined_call_operand.vmem [shape: bf16[256,400], index: 3, kind: input, shape index: {}]
  %s4 = inlined_call_operand.hbm [shape: f32[1,400], index: 4, kind: input, shape index: {}]
  %s5 = inlined_call_operand.hbm [shape: bf16[400,1024], index: 5, kind: input, shape index: {}]
  %s6 = inlined_call_operand.hbm [shape: f32[1,1024], index: 6, kind: input, shape index: {}]
  %s7 = inlined_call_operand.hbm [shape: bf16[1024,768], index: 7, kind: input, shape index: {}]
  %s8 = inlined_call_operand.hbm [shape: f32[1,768], index: 8, kind: input, shape index: {}]
  %s9 = inlined_call_operand.hbm [shape: f32[2,768], index: 9, kind: output, shape index: {}]
  %s10 = sld [smem:[#allocation0]]
  $region105: #{tpu_custom_call.1} parent=0
    _
  %s12 = ssub.s32 1, %s10
  %s13 = scalar_select 0, %s12, %s10
  $region1: #{tpu_custom_call.1} parent=0
    #allocation3 [shape = 'u8[1024]{0}', space=vmem, size = 0x400, scoped, tag = 'input window, operand 0, single buffered']
    #allocation4 [shape = 's32[2]{0}', space=sflag, size = 0x8, scoped, tag = 'scoped memory for tpu_custom_call.1']
    #allocation5 [shape = 's32[2]{0}', space=sflag, size = 0x8, scoped, tag = 'scoped memory for tpu_custom_call.1']
    #allocation6 [shape = 'u8[8192]{0}', space=vmem, size = 0x2000, scoped, tag = 'input window, operand 1, single buffered']
    #allocation7 [shape = 's32[1]{0}', space=sflag, size = 0x4, scoped, tag = 'scoped memory for tpu_custom_call.1']
    #allocation8 [shape = 'u8[1024]{0}', space=vmem, size = 0x400, scoped, tag = 'input window, operand 2, single buffered']
    #allocation9 [shape = 'u8[2048]{0}', space=vmem, size = 0x800, scoped, tag = 'input window, operand 4, single buffered']
    #allocation10 [shape = 's32[1]{0}', space=sflag, size = 0x4, scoped, tag = 'scoped memory for tpu_custom_call.1']
    #allocation11 [shape = 'u8[819200]{0}', space=vmem, size = 0xc8000, scoped, tag = 'input window, operand 5, single buffered']
    #allocation12 [shape = 'u8[4096]{0}', space=vmem, size = 0x1000, scoped, tag = 'input window, operand 6, single buffered']
    #allocation13 [shape = 's32[1]{0}', space=sflag, size = 0x4, scoped, tag = 'scoped memory for tpu_custom_call.1']
    #allocation14 [shape = 'u8[1048576]{0}', space=vmem, size = 0x100000, scoped, tag = 'input window, operand 7']
    #allocation15 [shape = 'u8[2048]{0}', space=vmem, size = 0x800, scoped, tag = 'input window, operand 8']
    #allocation16 [shape = 'u8[4096]{0}', space=vmem, size = 0x1000, scoped, tag = 'output window, operand 0']
    %14 = vsyncpa [#allocation4], 0
    %15 = vsyncpa [#allocation7], 0
    %16 = vsyncpa [#allocation10], 0
    %17 = vsyncpa [#allocation13], 0
    %18 = vsyncpa [#allocation5], 0
    %s19 = scalar_lea.sflag [#allocation5], 1
    %20 = vsyncpa %s19, 0
    loop: start=0, step=1, limit=5
    $region2: #{tpu_custom_call.1} parent=1 // loop_pre_header
      _
    $region3: #{tpu_custom_call.1} parent=1 // loop_header
      %s22 = sphi 0, %s26
      %p23 = scmp.ge.s32.totalorder %s22, 5
      %s30 = sphi 0, %s30
      %s32 = sphi 0, %s30
      %s33 = sphi 0, %s32
      %s47 = sphi 0, %s33
      %s51 = sphi 0, %s51
      %s53 = sphi 0, %s51
      %s54 = sphi 0, %s53
      %s68 = sphi 0, %s54
      %s72 = sphi 0, %s72
      %s74 = sphi 0, %s72
      %s75 = sphi 0, %s74
      %s89 = sphi 0, %s75
      %s93 = sphi 0, %s93
      %s95 = sphi 0, %s93
      %s96 = sphi 0, %s95
      %s110 = sphi 0, %s96
      %s114 = sphi 0, %s114
      %s116 = sphi 0, %s114
      %s117 = sphi 0, %s116
      %s131 = sphi 0, %s117
      %s135 = sphi 0, %s135
      %s137 = sphi 0, %s135
      %s138 = sphi 0, %s137
      %s152 = sphi 0, %s138
      %s156 = sphi 0, %s156
      %s158 = sphi 0, %s156
      %s159 = sphi 0, %s158
      %s173 = sphi 0, %s159
      %s179 = sphi 0, %s181
      %s182 = sphi 0, %s179
      %s183 = sphi 0, %s182
      %s199 = sphi 0, %s183
      %s205 = sphi 0, %s207
      %s208 = sphi 0, %s205
      %s209 = sphi 0, %s208
      %s225 = sphi 0, %s209
      %s231 = sphi 0, %s233
      %s234 = sphi 0, %s231
      %s235 = sphi 0, %s234
      %s251 = sphi 0, %s235
    $region4: #{tpu_custom_call.1} parent=1 // loop_header_branch
      %25 = sbr.rel (%p23) target = $region8
    $region5: #{tpu_custom_call.1} parent=1 // loop_body
      %s27 = ssub.s32 %s22, 1
      %s28 = ssub.s32 %s22, 2
      %s29 = sadd.s32 %s22, 1
      %s31 = sadd.s32 %s30, 1
      %p34 = scmp.eq.s32.totalorder %s22, 2
      %p35 = scmp.ne.s32.totalorder %s30, %s32
      %p36 = scmp.eq.s32.totalorder %s22, 0
      %p37 = por %p35, %p36
      %p38 = scmp.ne.s32.totalorder %s30, %s32
      %p39 = scmp.eq.s32.totalorder %s27, 2
      %p40 = por %p38, %p39
      %p41 = scmp.ne.s32.totalorder %s32, %s33
      %p42 = scmp.eq.s32.totalorder %s27, 0
      %p43 = por %p41, %p42
      %p44 = scmp.ne.s32.totalorder %s32, %s33
      %p45 = scmp.eq.s32.totalorder %s28, 2
      %p46 = por %p44, %p45
      %p48 = scmp.ne.s32.totalorder %s33, %s47
      %p49 = scmp.eq.s32.totalorder %s28, 0
      %p50 = por %p48, %p49
      %s52 = sadd.s32 %s51, 1
      %p55 = scmp.eq.s32.totalorder %s22, 2
      %p56 = scmp.ne.s32.totalorder %s51, %s53
      %p57 = scmp.eq.s32.totalorder %s22, 0
      %p58 = por %p56, %p57
      %p59 = scmp.ne.s32.totalorder %s51, %s53
      %p60 = scmp.eq.s32.totalorder %s27, 2
      %p61 = por %p59, %p60
      %p62 = scmp.ne.s32.totalorder %s53, %s54
      %p63 = scmp.eq.s32.totalorder %s27, 0
      %p64 = por %p62, %p63
      %p65 = scmp.ne.s32.totalorder %s53, %s54
      %p66 = scmp.eq.s32.totalorder %s28, 2
      %p67 = por %p65, %p66
      %p69 = scmp.ne.s32.totalorder %s54, %s68
      %p70 = scmp.eq.s32.totalorder %s28, 0
      %p71 = por %p69, %p70
      %s73 = sadd.s32 %s72, 1
      %p76 = scmp.eq.s32.totalorder %s22, 2
      %p77 = scmp.ne.s32.totalorder %s72, %s74
      %p78 = scmp.eq.s32.totalorder %s22, 0
      %p79 = por %p77, %p78
      %p80 = scmp.ne.s32.totalorder %s72, %s74
      %p81 = scmp.eq.s32.totalorder %s27, 2
      %p82 = por %p80, %p81
      %p83 = scmp.ne.s32.totalorder %s74, %s75
      %p84 = scmp.eq.s32.totalorder %s27, 0
      %p85 = por %p83, %p84
      %p86 = scmp.ne.s32.totalorder %s74, %s75
      %p87 = scmp.eq.s32.totalorder %s28, 2
      %p88 = por %p86, %p87
      %p90 = scmp.ne.s32.totalorder %s75, %s89
      %p91 = scmp.eq.s32.totalorder %s28, 0
      %p92 = por %p90, %p91
      %s94 = sadd.s32 %s93, 1
      %p97 = scmp.eq.s32.totalorder %s22, 2
      %p98 = scmp.ne.s32.totalorder %s93, %s95
      %p99 = scmp.eq.s32.totalorder %s22, 0
      %p100 = por %p98, %p99
      %p101 = scmp.ne.s32.totalorder %s93, %s95
      %p102 = scmp.eq.s32.totalorder %s27, 2
      %p103 = por %p101, %p102
      %p104 = scmp.ne.s32.totalorder %s95, %s96
      %p105 = scmp.eq.s32.totalorder %s27, 0
      %p106 = por %p104, %p105
      %p107 = scmp.ne.s32.totalorder %s95, %s96
      %p108 = scmp.eq.s32.totalorder %s28, 2
      %p109 = por %p107, %p108
      %p111 = scmp.ne.s32.totalorder %s96, %s110
      %p112 = scmp.eq.s32.totalorder %s28, 0
      %p113 = por %p111, %p112
      %s115 = sadd.s32 %s114, 1
      %p118 = scmp.eq.s32.totalorder %s22, 2
      %p119 = scmp.ne.s32.totalorder %s114, %s116
      %p120 = scmp.eq.s32.totalorder %s22, 0
      %p121 = por %p119, %p120
      %p122 = scmp.ne.s32.totalorder %s114, %s116
      %p123 = scmp.eq.s32.totalorder %s27, 2
      %p124 = por %p122, %p123
      %p125 = scmp.ne.s32.totalorder %s116, %s117
      %p126 = scmp.eq.s32.totalorder %s27, 0
      %p127 = por %p125, %p126
      %p128 = scmp.ne.s32.totalorder %s116, %s117
      %p129 = scmp.eq.s32.totalorder %s28, 2
      %p130 = por %p128, %p129
      %p132 = scmp.ne.s32.totalorder %s117, %s131
      %p133 = scmp.eq.s32.totalorder %s28, 0
      %p134 = por %p132, %p133
      %s136 = sadd.s32 %s135, 1
      %p139 = scmp.eq.s32.totalorder %s22, 2
      %p140 = scmp.ne.s32.totalorder %s135, %s137
      %p141 = scmp.eq.s32.totalorder %s22, 0
      %p142 = por %p140, %p141
      %p143 = scmp.ne.s32.totalorder %s135, %s137
      %p144 = scmp.eq.s32.totalorder %s27, 2
      %p145 = por %p143, %p144
      %p146 = scmp.ne.s32.totalorder %s137, %s138
      %p147 = scmp.eq.s32.totalorder %s27, 0
      %p148 = por %p146, %p147
      %p149 = scmp.ne.s32.totalorder %s137, %s138
      %p150 = scmp.eq.s32.totalorder %s28, 2
      %p151 = por %p149, %p150
      %p153 = scmp.ne.s32.totalorder %s138, %s152
      %p154 = scmp.eq.s32.totalorder %s28, 0
      %p155 = por %p153, %p154
      %s157 = sadd.s32 %s156, 1
      %p160 = scmp.eq.s32.totalorder %s22, 2
      %p161 = scmp.ne.s32.totalorder %s156, %s158
      %p162 = scmp.eq.s32.totalorder %s22, 0
      %p163 = por %p161, %p162
      %p164 = scmp.ne.s32.totalorder %s156, %s158
      %p165 = scmp.eq.s32.totalorder %s27, 2
      %p166 = por %p164, %p165
      %p167 = scmp.ne.s32.totalorder %s158, %s159
      %p168 = scmp.eq.s32.totalorder %s27, 0
      %p169 = por %p167, %p168
      %p170 = scmp.ne.s32.totalorder %s158, %s159
      %p171 = scmp.eq.s32.totalorder %s28, 2
      %p172 = por %p170, %p171
      %p174 = scmp.ne.s32.totalorder %s159, %s173
      %p175 = scmp.eq.s32.totalorder %s28, 0
      %p176 = por %p174, %p175
      %s177 = ssub.s32 %s22, %s29
      %p178 = scmp.eq.s32.totalorder %s177, 0
      %s180 = sadd.s32 %s179, 1
      %s181 = scalar_select %p178, %s179, %s180
      %p184 = pneg %p178
      %p185 = scmp.eq.s32.totalorder %s22, 2
      %p186 = por %p184, %p185
      %p187 = scmp.ne.s32.totalorder %s179, %s182
      %p188 = scmp.eq.s32.totalorder %s22, 0
      %p189 = por %p187, %p188
      %p190 = scmp.ne.s32.totalorder %s179, %s182
      %p191 = scmp.eq.s32.totalorder %s27, 2
      %p192 = por %p190, %p191
      %p193 = scmp.ne.s32.totalorder %s182, %s183
      %p194 = scmp.eq.s32.totalorder %s27, 0
      %p195 = por %p193, %p194
      %p196 = scmp.ne.s32.totalorder %s182, %s183
      %p197 = scmp.eq.s32.totalorder %s28, 2
      %p198 = por %p196, %p197
      %p200 = scmp.ne.s32.totalorder %s183, %s199
      %p201 = scmp.eq.s32.totalorder %s28, 0
      %p202 = por %p200, %p201
      %s203 = ssub.s32 %s22, %s29
      %p204 = scmp.eq.s32.totalorder %s203, 0
      %s206 = sadd.s32 %s205, 1
      %s207 = scalar_select %p204, %s205, %s206
      %p210 = pneg %p204
      %p211 = scmp.eq.s32.totalorder %s22, 2
      %p212 = por %p210, %p211
      %p213 = scmp.ne.s32.totalorder %s205, %s208
      %p214 = scmp.eq.s32.totalorder %s22, 0
      %p215 = por %p213, %p214
      %p216 = scmp.ne.s32.totalorder %s205, %s208
      %p217 = scmp.eq.s32.totalorder %s27, 2
      %p218 = por %p216, %p217
      %p219 = scmp.ne.s32.totalorder %s208, %s209
      %p220 = scmp.eq.s32.totalorder %s27, 0
      %p221 = por %p219, %p220
      %p222 = scmp.ne.s32.totalorder %s208, %s209
      %p223 = scmp.eq.s32.totalorder %s28, 2
      %p224 = por %p222, %p223
      %p226 = scmp.ne.s32.totalorder %s209, %s225
      %p227 = scmp.eq.s32.totalorder %s28, 0
      %p228 = por %p226, %p227
      %s229 = ssub.s32 %s22, %s29
      %p230 = scmp.eq.s32.totalorder %s229, 0
      %s232 = sadd.s32 %s231, 1
      %s233 = scalar_select %p230, %s231, %s232
      %p236 = pneg %p230
      %p237 = scmp.eq.s32.totalorder %s22, 2
      %p238 = por %p236, %p237
      %p239 = scmp.ne.s32.totalorder %s231, %s234
      %p240 = scmp.eq.s32.totalorder %s22, 0
      %p241 = por %p239, %p240
      %p242 = scmp.ne.s32.totalorder %s231, %s234
      %p243 = scmp.eq.s32.totalorder %s27, 2
      %p244 = por %p242, %p243
      %p245 = scmp.ne.s32.totalorder %s234, %s235
      %p246 = scmp.eq.s32.totalorder %s27, 0
      %p247 = por %p245, %p246
      %p248 = scmp.ne.s32.totalorder %s234, %s235
      %p249 = scmp.eq.s32.totalorder %s28, 2
      %p250 = por %p248, %p249
      %p252 = scmp.ne.s32.totalorder %s235, %s251
      %p253 = scmp.eq.s32.totalorder %s28, 0
      %p254 = por %p252, %p253
      %p255 = scmp.le.s32.totalorder 1, %s22
      %p256 = scmp.lt.s32.totalorder %s22, 4
      %p257 = pnand %p255, %p256
      %p258 = pneg %p257
      // Predicated region
      $region9: #{tpu_custom_call.1} parent=5 // pred_check
        _
      $region10: #{tpu_custom_call.1} parent=5 // pred_check_branch
        %260 = sbr.rel (%p257) target = $region12
      $region11: #{tpu_custom_call.1} parent=5 // pred_region
        %s261 = ssub.s32 %s22, 1
        // Predicated region
        $region13: #{tpu_custom_call.1} parent=11 // pred_check
          %p262 = pneg %p43
        $region14: #{tpu_custom_call.1} parent=11 // pred_check_branch
          %264 = sbr.rel (%p262) target = $region16
        $region15: #{tpu_custom_call.1} parent=11 // pred_region
          %s266 = ssub.s32 32, 32
          %267 = vsyncadd [#allocation4], %s266
          %s269 = sshll.u32 [#allocation3], 4
          %s270 = int_to_ptr.vmem [resolvable:$true] %s269
          %272 = dma.hbm_to_vmem [thread:$0]  %s0, 32, %s270, [#allocation4]
        $region16: #{tpu_custom_call.1} parent=11 // pred_fallthru
          _
        // Predicated region
        $region17: #{tpu_custom_call.1} parent=11 // pred_check
          %p273 = pneg %p64
        $region18: #{tpu_custom_call.1} parent=11 // pred_check_branch
          %275 = sbr.rel (%p273) target = $region20
        $region19: #{tpu_custom_call.1} parent=11 // pred_region
          %s277 = ssub.s32 256, 256
          %278 = vsyncadd [#allocation7], %s277
          %s280 = sshll.u32 [#allocation6], 4
          %s281 = int_to_ptr.vmem [resolvable:$true] %s280
          %283 = dma.hbm_to_vmem [thread:$0]  %s1, 256, %s281, [#allocation7]
        $region20: #{tpu_custom_call.1} parent=11 // pred_fallthru
          _
        // Predicated region
        $region21: #{tpu_custom_call.1} parent=11 // pred_check
          %p284 = pneg %p85
        $region22: #{tpu_custom_call.1} parent=11 // pred_check_branch
          %286 = sbr.rel (%p284) target = $region24
        $region23: #{tpu_custom_call.1} parent=11 // pred_region
          %s288 = ssub.s32 32, 32
          %289 = vsyncadd [#allocation7], %s288
          %s291 = sshll.u32 [#allocation8], 4
          %s292 = int_to_ptr.vmem [resolvable:$true] %s291
          %294 = dma.hbm_to_vmem [thread:$0]  %s2, 32, %s292, [#allocation7]
        $region24: #{tpu_custom_call.1} parent=11 // pred_fallthru
          _
        // Predicated region
        $region25: #{tpu_custom_call.1} parent=11 // pred_check
          %p295 = pneg %p106
        $region26: #{tpu_custom_call.1} parent=11 // pred_check_branch
          %297 = sbr.rel (%p295) target = $region28
        $region27: #{tpu_custom_call.1} parent=11 // pred_region
          _
        $region28: #{tpu_custom_call.1} parent=11 // pred_fallthru
          _
        // Predicated region
        $region29: #{tpu_custom_call.1} parent=11 // pred_check
          %p298 = pneg %p127
        $region30: #{tpu_custom_call.1} parent=11 // pred_check_branch
          %300 = sbr.rel (%p298) target = $region32
        $region31: #{tpu_custom_call.1} parent=11 // pred_region
          %s302 = ssub.s32 64, 64
          %303 = vsyncadd [#allocation10], %s302
          %s305 = sshll.u32 [#allocation9], 4
          %s306 = int_to_ptr.vmem [resolvable:$true] %s305
          %308 = dma.hbm_to_vmem [thread:$0]  %s4, 64, %s306, [#allocation10]
        $region32: #{tpu_custom_call.1} parent=11 // pred_fallthru
          _
        // Predicated region
        $region33: #{tpu_custom_call.1} parent=11 // pred_check
          %p309 = pneg %p148
        $region34: #{tpu_custom_call.1} parent=11 // pred_check_branch
          %311 = sbr.rel (%p309) target = $region36
        $region35: #{tpu_custom_call.1} parent=11 // pred_region
          %s313 = ssub.s32 25600, 25600
          %314 = vsyncadd [#allocation10], %s313
          %s315 = sshll.u32 [#allocation11], 4
          %s316 = int_to_ptr.vmem [resolvable:$true] %s315
          %321 = dma.hbm_to_vmem [thread:$0]  %s5, 25600, %s316, [#allocation10], 512, 512, 32
        $region36: #{tpu_custom_call.1} parent=11 // pred_fallthru
          _
        // Predicated region
        $region37: #{tpu_custom_call.1} parent=11 // pred_check
          %p322 = pneg %p169
        $region38: #{tpu_custom_call.1} parent=11 // pred_check_branch
          %324 = sbr.rel (%p322) target = $region40
        $region39: #{tpu_custom_call.1} parent=11 // pred_region
          %s326 = ssub.s32 128, 128
          %327 = vsyncadd [#allocation13], %s326
          %s329 = sshll.u32 [#allocation12], 4
          %s330 = int_to_ptr.vmem [resolvable:$true] %s329
          %332 = dma.hbm_to_vmem [thread:$0]  %s6, 128, %s330, [#allocation13]
        $region40: #{tpu_custom_call.1} parent=11 // pred_fallthru
          _
      $region12: #{tpu_custom_call.1} parent=5 // pred_fallthru
        _
      %p333 = scmp.lt.s32.totalorder %s22, 3
      // Predicated region
      $region41: #{tpu_custom_call.1} parent=5 // pred_check
        %p334 = pneg %p333
      $region42: #{tpu_custom_call.1} parent=5 // pred_check_branch
        %336 = sbr.rel (%p334) target = $region44
      $region43: #{tpu_custom_call.1} parent=5 // pred_region
        // Predicated region
        $region45: #{tpu_custom_call.1} parent=43 // pred_check
          %p337 = pneg %p189
        $region46: #{tpu_custom_call.1} parent=43 // pred_check_branch
          %339 = sbr.rel (%p337) target = $region48
        $region47: #{tpu_custom_call.1} parent=43 // pred_region
          %s340 = sand.u32 %s22, 1
          %s341 = scalar_lea.sflag [#allocation4], %s340
          %s342 = sand.u32 %s179, 1
          %s343 = smul.addr %s342, 1024
          %s344 = scalar_lea.vmem [#allocation14], %s343
          %s345 = smul.u32 2, %s22
          %s347 = ssub.s32 16384, 16384
          %348 = vsyncadd %s341, %s347
          %s349 = smul.addr %s345, 64
          %s350 = scalar_lea.hbm %s7, %s349
          %s351 = sshll.u32 %s344, 4
          %s352 = int_to_ptr.vmem [resolvable:$true] %s351
          %357 = dma.hbm_to_vmem [thread:$0]  %s350, 16384, %s352, %s341, 384, 128, 8
        $region48: #{tpu_custom_call.1} parent=43 // pred_fallthru
          _
        // Predicated region
        $region49: #{tpu_custom_call.1} parent=43 // pred_check
          %p358 = pneg %p215
        $region50: #{tpu_custom_call.1} parent=43 // pred_check_branch
          %360 = sbr.rel (%p358) target = $region52
        $region51: #{tpu_custom_call.1} parent=43 // pred_region
          %s361 = sand.u32 %s22, 1
          %s362 = scalar_lea.sflag [#allocation4], %s361
          %s363 = sand.u32 %s205, 1
          %s364 = smul.addr %s363, 2
          %s365 = scalar_lea.vmem [#allocation15], %s364
          %s366 = smul.u32 2, %s22
          %s368 = ssub.s32 32, 32
          %369 = vsyncadd %s362, %s368
          %s370 = smul.addr %s366, 16
          %s371 = scalar_lea.hbm %s8, %s370
          %s373 = sshll.u32 %s365, 4
          %s374 = int_to_ptr.vmem [resolvable:$true] %s373
          %376 = dma.hbm_to_vmem [thread:$0]  %s371, 32, %s374, %s362
        $region52: #{tpu_custom_call.1} parent=43 // pred_fallthru
          _
      $region44: #{tpu_custom_call.1} parent=5 // pred_fallthru
        _
      %p377 = scmp.le.s32.totalorder 1, %s22
      %p378 = scmp.lt.s32.totalorder %s22, 4
      %p379 = pnand %p377, %p378
      %p380 = pneg %p379
      // Predicated region
      $region53: #{tpu_custom_call.1} parent=5 // pred_check
        _
      $region54: #{tpu_custom_call.1} parent=5 // pred_check_branch
        %382 = sbr.rel (%p379) target = $region56
      $region55: #{tpu_custom_call.1} parent=5 // pred_region
        %s383 = ssub.s32 %s22, 1
        // Predicated region
        $region57: #{tpu_custom_call.1} parent=55 // pred_check
          %p384 = pneg %p43
        $region58: #{tpu_custom_call.1} parent=55 // pred_check_branch
          %386 = sbr.rel (%p384) target = $region60
        $region59: #{tpu_custom_call.1} parent=55 // pred_region
          %387 = dma.done [#allocation4], 32
        $region60: #{tpu_custom_call.1} parent=55 // pred_fallthru
          _
        // Predicated region
        $region61: #{tpu_custom_call.1} parent=55 // pred_check
          %p388 = pneg %p64
        $region62: #{tpu_custom_call.1} parent=55 // pred_check_branch
          %390 = sbr.rel (%p388) target = $region64
        $region63: #{tpu_custom_call.1} parent=55 // pred_region
          %391 = dma.done [#allocation7], 256
        $region64: #{tpu_custom_call.1} parent=55 // pred_fallthru
          _
        // Predicated region
        $region65: #{tpu_custom_call.1} parent=55 // pred_check
          %p392 = pneg %p85
        $region66: #{tpu_custom_call.1} parent=55 // pred_check_branch
          %394 = sbr.rel (%p392) target = $region68
        $region67: #{tpu_custom_call.1} parent=55 // pred_region
          %395 = dma.done [#allocation7], 32
        $region68: #{tpu_custom_call.1} parent=55 // pred_fallthru
          _
        // Predicated region
        $region69: #{tpu_custom_call.1} parent=55 // pred_check
          %p396 = pneg %p127
        $region70: #{tpu_custom_call.1} parent=55 // pred_check_branch
          %398 = sbr.rel (%p396) target = $region72
        $region71: #{tpu_custom_call.1} parent=55 // pred_region
          %399 = dma.done [#allocation10], 64
        $region72: #{tpu_custom_call.1} parent=55 // pred_fallthru
          _
        // Predicated region
        $region73: #{tpu_custom_call.1} parent=55 // pred_check
          %p400 = pneg %p148
        $region74: #{tpu_custom_call.1} parent=55 // pred_check_branch
          %402 = sbr.rel (%p400) target = $region76
        $region75: #{tpu_custom_call.1} parent=55 // pred_region
          %403 = dma.done [#allocation10], 25600
        $region76: #{tpu_custom_call.1} parent=55 // pred_fallthru
          _
        // Predicated region
        $region77: #{tpu_custom_call.1} parent=55 // pred_check
          %p404 = pneg %p169
        $region78: #{tpu_custom_call.1} parent=55 // pred_check_branch
          %406 = sbr.rel (%p404) target = $region80
        $region79: #{tpu_custom_call.1} parent=55 // pred_region
          %407 = dma.done [#allocation13], 128
        $region80: #{tpu_custom_call.1} parent=55 // pred_fallthru
          _
        %s408 = sand.u32 %s27, 1
        %s409 = scalar_lea.sflag [#allocation4], %s408
        %s410 = sand.u32 %s182, 1
        %s411 = smul.addr %s410, 1024
        %s412 = scalar_lea.vmem [#allocation14], %s411
        // Predicated region
        $region81: #{tpu_custom_call.1} parent=55 // pred_check
          %p413 = pneg %p195
        $region82: #{tpu_custom_call.1} parent=55 // pred_check_branch
          %415 = sbr.rel (%p413) target = $region84
        $region83: #{tpu_custom_call.1} parent=55 // pred_region
          %416 = dma.done %s409, 16384
        $region84: #{tpu_custom_call.1} parent=55 // pred_fallthru
          _
        %s417 = sand.u32 %s27, 1
        %s418 = scalar_lea.sflag [#allocation4], %s417
        %s419 = sand.u32 %s208, 1
        %s420 = smul.addr %s419, 2
        %s421 = scalar_lea.vmem [#allocation15], %s420
        // Predicated region
        $region85: #{tpu_custom_call.1} parent=55 // pred_check
          %p422 = pneg %p221
        $region86: #{tpu_custom_call.1} parent=55 // pred_check_branch
          %424 = sbr.rel (%p422) target = $region88
        $region87: #{tpu_custom_call.1} parent=55 // pred_region
          %425 = dma.done %s418, 32
        $region88: #{tpu_custom_call.1} parent=55 // pred_fallthru
          _
        %p426 = pneg %p43
        %p427 = pneg %p40
        %p428 = pneg %p64
        %p429 = pneg %p61
        %p430 = pneg %p85
        %p431 = pneg %p82
        %p432 = pneg %p106
        %p433 = pneg %p103
        %p434 = pneg %p127
        %p435 = pneg %p124
        %p436 = pneg %p148
        %p437 = pneg %p145
        %p438 = pneg %p169
        %p439 = pneg %p166
        %s440 = sand.u32 %s27, 1
        %s441 = scalar_lea.sflag [#allocation4], %s440
        %s442 = sand.u32 %s182, 1
        %s443 = smul.addr %s442, 1024
        %s444 = scalar_lea.vmem [#allocation14], %s443
        %p445 = pneg %p195
        %p446 = pneg %p192
        %s447 = sand.u32 %s27, 1
        %s448 = scalar_lea.sflag [#allocation4], %s447
        %s449 = sand.u32 %s208, 1
        %s450 = smul.addr %s449, 2
        %s451 = scalar_lea.vmem [#allocation15], %s450
        %p452 = pneg %p221
        %p453 = pneg %p218
        %p454 = pneg %p247
        %p455 = pneg %p244
        %s456 = sand.u32 %s234, 1
        %s457 = scalar_lea.sflag [#allocation5], %s456
        %s458 = sand.u32 %s234, 1
        %s459 = smul.addr %s458, 4
        %s460 = scalar_lea.vmem [#allocation16], %s459
        %s461 = smul.u32 2, %s27
        %s462 = smul.u32 2, %s27
        %s463 = smul.u32 2, %s27
        %p465 = scmp.eq.s32.totalorder %s27, 0
        // Predicated region
        $region89: #{tpu_custom_call.1} parent=55 // pred_check
          %p466 = pneg %p465
        $region90: #{tpu_custom_call.1} parent=55 // pred_check_branch
          %468 = sbr.rel (%p466) target = $region92
        $region91: #{tpu_custom_call.1} parent=55 // pred_region
          %v469 = vld [vmem:[#allocation3] sm:$0x3]
          %v470 = vld [vmem:[#allocation6] sm:$0xff]
          %v471 = vld [vmem:[#allocation6 + $0x8] sm:$0xff]
          %v472 = vld [vmem:[#allocation8] sm:$0x3]
          %v474 = vlaneseq
          %v475 = vshrl.u32 %v474, 7
          %v476 = vsub.s32 0, %v475
          %v477 = vrot.slane %v472, %v476
          %v478 = vlaneseq
          %v479 = vshrl.u32 %v478, 7
          %v480 = vsub.s32 1, %v479
          %v481 = vrot.slane %v472, %v480
          %vm484 = vcmask 64512
          %v486 = vsel %vm484, %v469, 0
          %488 = vmatprep.subr.mxu0 %v471
          %489 = vmatpush1.msra.mxu0 %v470
          %490 = vmatprep.subr.mxu0 0.0
          %491 = vmatpush1.msra.mxu0 0.0
          %492 = vmatprep.subr.mxu0 0.0
          %493 = vmatpush1.msra.mxu0 0.0
          %494 = vmatprep.subr.mxu0 0.0
          %495 = vmatpush1.msra.mxu0 0.0
          %496 = vmatprep.subr.mxu0 0.0
          %497 = vmatpush1.msra.mxu0 0.0
          %498 = vmatprep.subr.mxu0 0.0
          %499 = vmatpush1.msra.mxu0 0.0
          %500 = vmatprep.subr.mxu0 0.0
          %501 = vmatpush1.msra.mxu0 0.0
          %502 = vmatprep.subr.mxu0 0.0
          %503 = vmatpush1.msra.mxu0 0.0
          %504 = vmatprep.subr.mxu0 0.0
          %505 = vmatpush1.msra.mxu0 0.0
          %506 = vmatprep.subr.mxu0 0.0
          %507 = vmatpush1.msra.mxu0 0.0
          %508 = vmatprep.subr.mxu0 0.0
          %509 = vmatpush1.msra.mxu0 0.0
          %510 = vmatprep.subr.mxu0 0.0
          %511 = vmatpush1.msra.mxu0 0.0
          %512 = vmatprep.subr.mxu0 0.0
          %513 = vmatpush1.msra.mxu0 0.0
          %514 = vmatprep.subr.mxu0 0.0
          %515 = vmatpush1.msra.mxu0 0.0
          %516 = vmatprep.subr.mxu0 0.0
          %517 = vmatpush1.msra.mxu0 0.0
          %518 = vmatprep.subr.mxu0 0.0
          %519 = vmatpush1.msra.mxu0 0.0
          %520 = vmatprep.subr.mxu0 0.0
          %521 = vmatpush1.msra.mxu0 0.0
          %522 = vmatprep.subr.mxu0 0.0
          %523 = vmatpush1.msra.mxu0 0.0
          %524 = vmatprep.subr.mxu0 0.0
          %525 = vmatpush1.msra.mxu0 0.0
          %526 = vmatprep.subr.mxu0 0.0
          %527 = vmatpush1.msra.mxu0 0.0
          %528 = vmatprep.subr.mxu0 0.0
          %529 = vmatpush1.msra.mxu0 0.0
          %530 = vmatprep.subr.mxu0 0.0
          %531 = vmatpush1.msra.mxu0 0.0
          %532 = vmatprep.subr.mxu0 0.0
          %533 = vmatpush1.msra.mxu0 0.0
          %534 = vmatprep.subr.mxu0 0.0
          %535 = vmatpush1.msra.mxu0 0.0
          %536 = vmatprep.subr.mxu0 0.0
          %537 = vmatpush1.msra.mxu0 0.0
          %538 = vmatprep.subr.mxu0 0.0
          %539 = vmatpush1.msra.mxu0 0.0
          %540 = vmatprep.subr.mxu0 0.0
          %541 = vmatpush1.msra.mxu0 0.0
          %542 = vmatprep.subr.mxu0 0.0
          %543 = vmatpush1.msra.mxu0 0.0
          %544 = vmatprep.subr.mxu0 0.0
          %545 = vmatpush1.msra.mxu0 0.0
          %546 = vmatprep.subr.mxu0 0.0
          %547 = vmatpush1.msra.mxu0 0.0
          %548 = vmatprep.subr.mxu0 0.0
          %549 = vmatpush1.msra.mxu0 0.0
          %550 = vmatprep.subr.mxu0 0.0
          %551 = vmatpush1.msra.mxu0 0.0
          %552 = vmatprep.mubr.f32.mxu0 0.0
          %553 = vmatmul.mubr.f32.gmra.mrb[0].mxu0 %v486
          %v554 = vpop.f32.mrb[0].mxu0
          %v555 = vadd.f32 %v477, %v554
          %v556 = vpop.f32.mrb[0].mxu0
          %v557 = vadd.f32 %v481, %v556
          %558 = vdwg.mxu0
          %v559 = vmax.f32 %v555, 0.0
          %v560 = vmax.f32 %v557, 0.0
          %v561 = vpack.c.bf16 %v559, %v559
          %v562 = vpack.c.bf16 %v560, %v560
          %v563 = vld [vmem:[%s3] sm:$0xff]
          %v564 = vld [vmem:[%s3 + $0x8] sm:$0xff]
          %v565 = vld [vmem:[%s3 + $0x10] sm:$0xff]
          %v566 = vld [vmem:[%s3 + $0x18] sm:$0xff]
          %v567 = vld [vmem:[%s3 + $0x20] sm:$0xff]
          %v568 = vld [vmem:[%s3 + $0x28] sm:$0xff]
          %v569 = vld [vmem:[%s3 + $0x30] sm:$0xff]
          %v570 = vld [vmem:[%s3 + $0x38] sm:$0xff]
          %v571 = vld [vmem:[%s3 + $0x40] sm:$0xff]
          %v572 = vld [vmem:[%s3 + $0x48] sm:$0xff]
          %v573 = vld [vmem:[%s3 + $0x50] sm:$0xff]
          %v574 = vld [vmem:[%s3 + $0x58] sm:$0xff]
          %v575 = vld [vmem:[%s3 + $0x60] sm:$0xff]
          %v576 = vld [vmem:[%s3 + $0x68] sm:$0xff]
          %v577 = vld [vmem:[%s3 + $0x70] sm:$0xff]
          %v578 = vld [vmem:[%s3 + $0x78] sm:$0xff]
          %v579 = vld [vmem:[%s3 + $0x80] sm:$0xff]
          %v580 = vld [vmem:[%s3 + $0x88] sm:$0xff]
          %v581 = vld [vmem:[%s3 + $0x90] sm:$0xff]
          %v582 = vld [vmem:[%s3 + $0x98] sm:$0xff]
          %v583 = vld [vmem:[%s3 + $0xa0] sm:$0xff]
          %v584 = vld [vmem:[%s3 + $0xa8] sm:$0xff]
          %v585 = vld [vmem:[%s3 + $0xb0] sm:$0xff]
          %v586 = vld [vmem:[%s3 + $0xb8] sm:$0xff]
          %v587 = vld [vmem:[%s3 + $0xc0] sm:$0xff]
          %v588 = vld [vmem:[%s3 + $0xc8] sm:$0xff]
          %v589 = vld [vmem:[%s3 + $0xd0] sm:$0xff]
          %v590 = vld [vmem:[%s3 + $0xd8] sm:$0xff]
          %v591 = vld [vmem:[%s3 + $0xe0] sm:$0xff]
          %v592 = vld [vmem:[%s3 + $0xe8] sm:$0xff]
          %v593 = vld [vmem:[%s3 + $0xf0] sm:$0xff]
          %v594 = vld [vmem:[%s3 + $0xf8] sm:$0xff]
          %v595 = vld [vmem:[%s3 + $0x100] sm:$0xff]
          %v596 = vld [vmem:[%s3 + $0x108] sm:$0xff]
          %v597 = vld [vmem:[%s3 + $0x110] sm:$0xff]
          %v598 = vld [vmem:[%s3 + $0x118] sm:$0xff]
          %v599 = vld [vmem:[%s3 + $0x120] sm:$0xff]
          %v600 = vld [vmem:[%s3 + $0x128] sm:$0xff]
          %v601 = vld [vmem:[%s3 + $0x130] sm:$0xff]
          %v602 = vld [vmem:[%s3 + $0x138] sm:$0xff]
          %v603 = vld [vmem:[%s3 + $0x140] sm:$0xff]
          %v604 = vld [vmem:[%s3 + $0x148] sm:$0xff]
          %v605 = vld [vmem:[%s3 + $0x150] sm:$0xff]
          %v606 = vld [vmem:[%s3 + $0x158] sm:$0xff]
          %v607 = vld [vmem:[%s3 + $0x160] sm:$0xff]
          %v608 = vld [vmem:[%s3 + $0x168] sm:$0xff]
          %v609 = vld [vmem:[%s3 + $0x170] sm:$0xff]
          %v610 = vld [vmem:[%s3 + $0x178] sm:$0xff]
          %v611 = vld [vmem:[%s3 + $0x180] sm:$0xff]
          %v612 = vld [vmem:[%s3 + $0x188] sm:$0xff]
          %v613 = vld [vmem:[%s3 + $0x190] sm:$0xff]
          %v614 = vld [vmem:[%s3 + $0x198] sm:$0xff]
          %v615 = vld [vmem:[%s3 + $0x1a0] sm:$0xff]
          %v616 = vld [vmem:[%s3 + $0x1a8] sm:$0xff]
          %v617 = vld [vmem:[%s3 + $0x1b0] sm:$0xff]
          %v618 = vld [vmem:[%s3 + $0x1b8] sm:$0xff]
          %v619 = vld [vmem:[%s3 + $0x1c0] sm:$0xff]
          %v620 = vld [vmem:[%s3 + $0x1c8] sm:$0xff]
          %v621 = vld [vmem:[%s3 + $0x1d0] sm:$0xff]
          %v622 = vld [vmem:[%s3 + $0x1d8] sm:$0xff]
          %v623 = vld [vmem:[%s3 + $0x1e0] sm:$0xff]
          %v624 = vld [vmem:[%s3 + $0x1e8] sm:$0xff]
          %v625 = vld [vmem:[%s3 + $0x1f0] sm:$0xff]
          %v626 = vld [vmem:[%s3 + $0x1f8] sm:$0xff]
          %v627 = vld [vmem:[#allocation9] sm:$0xf]
          %v629 = vlaneseq
          %v630 = vshrl.u32 %v629, 7
          %v631 = vsub.s32 0, %v630
          %v632 = vrot.slane %v627, %v631
          %v633 = vlaneseq
          %v634 = vshrl.u32 %v633, 7
          %v635 = vsub.s32 1, %v634
          %v636 = vrot.slane %v627, %v635
          %v637 = vlaneseq
          %v638 = vshrl.u32 %v637, 7
          %v639 = vsub.s32 2, %v638
          %v640 = vrot.slane %v627, %v639
          %v641 = vlaneseq
          %v642 = vshrl.u32 %v641, 7
          %v643 = vsub.s32 3, %v642
          %v644 = vrot.slane %v627, %v643
          %v713 = vunpack.c.l.b16 %v563
          %v714 = vunpack.c.h.b16 %v563
          %v715 = vunpack.c.l.b16 %v564
          %v716 = vunpack.c.h.b16 %v564
          %v717 = vunpack.c.l.b16 %v565
          %v718 = vunpack.c.h.b16 %v565
          %v719 = vunpack.c.l.b16 %v566
          %v720 = vunpack.c.h.b16 %v566
          %v721 = vunpack.c.l.b16 %v567
          %v722 = vunpack.c.h.b16 %v567
          %v723 = vunpack.c.l.b16 %v568
          %v724 = vunpack.c.h.b16 %v568
          %v725 = vunpack.c.l.b16 %v569
          %v726 = vunpack.c.h.b16 %v569
          %v727 = vunpack.c.l.b16 %v570
          %v728 = vunpack.c.h.b16 %v570
          %v729 = vunpack.c.l.b16 %v571
          %v730 = vunpack.c.h.b16 %v571
          %v731 = vunpack.c.l.b16 %v572
          %v732 = vunpack.c.h.b16 %v572
          %v733 = vunpack.c.l.b16 %v573
          %v734 = vunpack.c.h.b16 %v573
          %v735 = vunpack.c.l.b16 %v574
          %v736 = vunpack.c.h.b16 %v574
          %v737 = vunpack.c.l.b16 %v575
          %v738 = vunpack.c.h.b16 %v575
          %v739 = vunpack.c.l.b16 %v576
          %v740 = vunpack.c.h.b16 %v576
          %v741 = vunpack.c.l.b16 %v577
          %v742 = vunpack.c.h.b16 %v577
          %v743 = vunpack.c.l.b16 %v578
          %v744 = vunpack.c.h.b16 %v578
          %v745 = vunpack.c.l.b16 %v579
          %v746 = vunpack.c.h.b16 %v579
          %v747 = vunpack.c.l.b16 %v580
          %v748 = vunpack.c.h.b16 %v580
          %v749 = vunpack.c.l.b16 %v581
          %v750 = vunpack.c.h.b16 %v581
          %v751 = vunpack.c.l.b16 %v582
          %v752 = vunpack.c.h.b16 %v582
          %v753 = vunpack.c.l.b16 %v583
          %v754 = vunpack.c.h.b16 %v583
          %v755 = vunpack.c.l.b16 %v584
          %v756 = vunpack.c.h.b16 %v584
          %v757 = vunpack.c.l.b16 %v585
          %v758 = vunpack.c.h.b16 %v585
          %v759 = vunpack.c.l.b16 %v586
          %v760 = vunpack.c.h.b16 %v586
          %v761 = vunpack.c.l.b16 %v587
          %v762 = vunpack.c.h.b16 %v587
          %v763 = vunpack.c.l.b16 %v588
          %v764 = vunpack.c.h.b16 %v588
          %v765 = vunpack.c.l.b16 %v589
          %v766 = vunpack.c.h.b16 %v589
          %v767 = vunpack.c.l.b16 %v590
          %v768 = vunpack.c.h.b16 %v590
          %v769 = vunpack.c.l.b16 %v591
          %v770 = vunpack.c.h.b16 %v591
          %v771 = vunpack.c.l.b16 %v592
          %v772 = vunpack.c.h.b16 %v592
          %v773 = vunpack.c.l.b16 %v593
          %v774 = vunpack.c.h.b16 %v593
          %v775 = vunpack.c.l.b16 %v594
          %v776 = vunpack.c.h.b16 %v594
          %v777 = vunpack.c.l.b16 %v595
          %v778 = vunpack.c.h.b16 %v595
          %v779 = vunpack.c.l.b16 %v596
          %v780 = vunpack.c.h.b16 %v596
          %v781 = vunpack.c.l.b16 %v597
          %v782 = vunpack.c.h.b16 %v597
          %v783 = vunpack.c.l.b16 %v598
          %v784 = vunpack.c.h.b16 %v598
          %v785 = vunpack.c.l.b16 %v599
          %v786 = vunpack.c.h.b16 %v599
          %v787 = vunpack.c.l.b16 %v600
          %v788 = vunpack.c.h.b16 %v600
          %v789 = vunpack.c.l.b16 %v601
          %v790 = vunpack.c.h.b16 %v601
          %v791 = vunpack.c.l.b16 %v602
          %v792 = vunpack.c.h.b16 %v602
          %v793 = vunpack.c.l.b16 %v603
          %v794 = vunpack.c.h.b16 %v603
          %v795 = vunpack.c.l.b16 %v604
          %v796 = vunpack.c.h.b16 %v604
          %v797 = vunpack.c.l.b16 %v605
          %v798 = vunpack.c.h.b16 %v605
          %v799 = vunpack.c.l.b16 %v606
          %v800 = vunpack.c.h.b16 %v606
          %v801 = vunpack.c.l.b16 %v607
          %v802 = vunpack.c.h.b16 %v607
          %v803 = vunpack.c.l.b16 %v608
          %v804 = vunpack.c.h.b16 %v608
          %v805 = vunpack.c.l.b16 %v609
          %v806 = vunpack.c.h.b16 %v609
          %v807 = vunpack.c.l.b16 %v610
          %v808 = vunpack.c.h.b16 %v610
          %v809 = vunpack.c.l.b16 %v611
          %v810 = vunpack.c.h.b16 %v611
          %v811 = vunpack.c.l.b16 %v612
          %v812 = vunpack.c.h.b16 %v612
          %v813 = vunpack.c.l.b16 %v613
          %v814 = vunpack.c.h.b16 %v613
          %v815 = vunpack.c.l.b16 %v614
          %v816 = vunpack.c.h.b16 %v614
          %v817 = vunpack.c.l.b16 %v615
          %v818 = vunpack.c.h.b16 %v615
          %v819 = vunpack.c.l.b16 %v616
          %v820 = vunpack.c.h.b16 %v616
          %v821 = vunpack.c.l.b16 %v617
          %v822 = vunpack.c.h.b16 %v617
          %v823 = vunpack.c.l.b16 %v618
          %v824 = vunpack.c.h.b16 %v618
          %v825 = vunpack.c.l.b16 %v619
          %v826 = vunpack.c.h.b16 %v619
          %v827 = vunpack.c.l.b16 %v620
          %v828 = vunpack.c.h.b16 %v620
          %v829 = vunpack.c.l.b16 %v621
          %v830 = vunpack.c.h.b16 %v621
          %v831 = vunpack.c.l.b16 %v622
          %v832 = vunpack.c.h.b16 %v622
          %v833 = vunpack.c.l.b16 %v623
          %v834 = vunpack.c.h.b16 %v623
          %v835 = vunpack.c.l.b16 %v624
          %v836 = vunpack.c.h.b16 %v624
          %v837 = vunpack.c.l.b16 %v625
          %v838 = vunpack.c.h.b16 %v625
          %v839 = vunpack.c.l.b16 %v626
          %v840 = vunpack.c.h.b16 %v626
          %v841 = vpack.c.b16 %v717, %v713
          %v842 = vpack.c.b16 %v718, %v714
          %v843 = vpack.c.b16 %v719, %v715
          %v844 = vpack.c.b16 %v720, %v716
          %v845 = vpack.c.b16 %v725, %v721
          %v846 = vpack.c.b16 %v726, %v722
          %v847 = vpack.c.b16 %v727, %v723
          %v848 = vpack.c.b16 %v728, %v724
          %v849 = vpack.c.b16 %v733, %v729
          %v850 = vpack.c.b16 %v734, %v730
          %v851 = vpack.c.b16 %v735, %v731
          %v852 = vpack.c.b16 %v736, %v732
          %v853 = vpack.c.b16 %v741, %v737
          %v854 = vpack.c.b16 %v742, %v738
          %v855 = vpack.c.b16 %v743, %v739
          %v856 = vpack.c.b16 %v744, %v740
          %v857 = vpack.c.b16 %v749, %v745
          %v858 = vpack.c.b16 %v750, %v746
          %v859 = vpack.c.b16 %v751, %v747
          %v860 = vpack.c.b16 %v752, %v748
          %v861 = vpack.c.b16 %v757, %v753
          %v862 = vpack.c.b16 %v758, %v754
          %v863 = vpack.c.b16 %v759, %v755
          %v864 = vpack.c.b16 %v760, %v756
          %v865 = vpack.c.b16 %v765, %v761
          %v866 = vpack.c.b16 %v766, %v762
          %v867 = vpack.c.b16 %v767, %v763
          %v868 = vpack.c.b16 %v768, %v764
          %v869 = vpack.c.b16 %v773, %v769
          %v870 = vpack.c.b16 %v774, %v770
          %v871 = vpack.c.b16 %v775, %v771
          %v872 = vpack.c.b16 %v776, %v772
          %v873 = vpack.c.b16 %v781, %v777
          %v874 = vpack.c.b16 %v782, %v778
          %v875 = vpack.c.b16 %v783, %v779
          %v876 = vpack.c.b16 %v784, %v780
          %v877 = vpack.c.b16 %v789, %v785
          %v878 = vpack.c.b16 %v790, %v786
          %v879 = vpack.c.b16 %v791, %v787
          %v880 = vpack.c.b16 %v792, %v788
          %v881 = vpack.c.b16 %v797, %v793
          %v882 = vpack.c.b16 %v798, %v794
          %v883 = vpack.c.b16 %v799, %v795
          %v884 = vpack.c.b16 %v800, %v796
          %v885 = vpack.c.b16 %v805, %v801
          %v886 = vpack.c.b16 %v806, %v802
          %v887 = vpack.c.b16 %v807, %v803
          %v888 = vpack.c.b16 %v808, %v804
          %v889 = vpack.c.b16 %v813, %v809
          %v890 = vpack.c.b16 %v814, %v810
          %v891 = vpack.c.b16 %v815, %v811
          %v892 = vpack.c.b16 %v816, %v812
          %v893 = vpack.c.b16 %v821, %v817
          %v894 = vpack.c.b16 %v822, %v818
          %v895 = vpack.c.b16 %v823, %v819
          %v896 = vpack.c.b16 %v824, %v820
          %v897 = vpack.c.b16 %v829, %v825
          %v898 = vpack.c.b16 %v830, %v826
          %v899 = vpack.c.b16 %v831, %v827
          %v900 = vpack.c.b16 %v832, %v828
          %v901 = vpack.c.b16 %v837, %v833
          %v902 = vpack.c.b16 %v838, %v834
          %v903 = vpack.c.b16 %v839, %v835
          %v904 = vpack.c.b16 %v840, %v836
          %969 = vmatprep.subr.bf16.mxu0 %v842
          %970 = vmatpush1.bf16.msra.mxu0 %v841
          %971 = vmatprep.subr.bf16.mxu0 %v846
          %972 = vmatpush1.bf16.msra.mxu0 %v845
          %973 = vmatprep.subr.bf16.mxu0 %v850
          %974 = vmatpush1.bf16.msra.mxu0 %v849
          %975 = vmatprep.subr.bf16.mxu0 %v854
          %976 = vmatpush1.bf16.msra.mxu0 %v853
          %977 = vmatprep.subr.bf16.mxu0 %v858
          %978 = vmatpush1.bf16.msra.mxu0 %v857
          %979 = vmatprep.subr.bf16.mxu0 %v862
          %980 = vmatpush1.bf16.msra.mxu0 %v861
          %981 = vmatprep.subr.bf16.mxu0 %v866
          %982 = vmatpush1.bf16.msra.mxu0 %v865
          %983 = vmatprep.subr.bf16.mxu0 %v870
          %984 = vmatpush1.bf16.msra.mxu0 %v869
          %985 = vmatprep.subr.bf16.mxu0 %v874
          %986 = vmatpush1.bf16.msra.mxu0 %v873
          %987 = vmatprep.subr.bf16.mxu0 %v878
          %988 = vmatpush1.bf16.msra.mxu0 %v877
          %989 = vmatprep.subr.bf16.mxu0 %v882
          %990 = vmatpush1.bf16.msra.mxu0 %v881
          %991 = vmatprep.subr.bf16.mxu0 %v886
          %992 = vmatpush1.bf16.msra.mxu0 %v885
          %993 = vmatprep.subr.bf16.mxu0 %v890
          %994 = vmatpush1.bf16.msra.mxu0 %v889
          %995 = vmatprep.subr.bf16.mxu0 %v894
          %996 = vmatpush1.bf16.msra.mxu0 %v893
          %997 = vmatprep.subr.bf16.mxu0 %v898
          %998 = vmatpush1.bf16.msra.mxu0 %v897
          %999 = vmatprep.subr.bf16.mxu0 %v902
          %1000 = vmatpush1.bf16.msra.mxu0 %v901
          %1001 = vmatprep.mubr.bf16.mxu0 %v562
          %1002 = vmatmul.mubr.bf16.gmra.mrb[0].mxu0 %v561
          %v1003 = vpop.f32.mrb[0].mxu0
          %v1004 = vadd.f32 %v632, %v1003
          %v1005 = vpop.f32.mrb[0].mxu0
          %v1006 = vadd.f32 %v636, %v1005
          %v1007 = vpop.f32.mrb[0].mxu0
          %v1008 = vpop.f32.mrb[0].mxu0
          %1009 = vdwg.mxu0
          %1010 = vmatprep.subr.bf16.mxu0 %v844
          %1011 = vmatpush1.bf16.msra.mxu0 %v843
          %1012 = vmatprep.subr.bf16.mxu0 %v848
          %1013 = vmatpush1.bf16.msra.mxu0 %v847
          %1014 = vmatprep.subr.bf16.mxu0 %v852
          %1015 = vmatpush1.bf16.msra.mxu0 %v851
          %1016 = vmatprep.subr.bf16.mxu0 %v856
          %1017 = vmatpush1.bf16.msra.mxu0 %v855
          %1018 = vmatprep.subr.bf16.mxu0 %v860
          %1019 = vmatpush1.bf16.msra.mxu0 %v859
          %1020 = vmatprep.subr.bf16.mxu0 %v864
          %1021 = vmatpush1.bf16.msra.mxu0 %v863
          %1022 = vmatprep.subr.bf16.mxu0 %v868
          %1023 = vmatpush1.bf16.msra.mxu0 %v867
          %1024 = vmatprep.subr.bf16.mxu0 %v872
          %1025 = vmatpush1.bf16.msra.mxu0 %v871
          %1026 = vmatprep.subr.bf16.mxu0 %v876
          %1027 = vmatpush1.bf16.msra.mxu0 %v875
          %1028 = vmatprep.subr.bf16.mxu0 %v880
          %1029 = vmatpush1.bf16.msra.mxu0 %v879
          %1030 = vmatprep.subr.bf16.mxu0 %v884
          %1031 = vmatpush1.bf16.msra.mxu0 %v883
          %1032 = vmatprep.subr.bf16.mxu0 %v888
          %1033 = vmatpush1.bf16.msra.mxu0 %v887
          %1034 = vmatprep.subr.bf16.mxu0 %v892
          %1035 = vmatpush1.bf16.msra.mxu0 %v891
          %1036 = vmatprep.subr.bf16.mxu0 %v896
          %1037 = vmatpush1.bf16.msra.mxu0 %v895
          %1038 = vmatprep.subr.bf16.mxu0 %v900
          %1039 = vmatpush1.bf16.msra.mxu0 %v899
          %1040 = vmatprep.subr.bf16.mxu0 %v904
          %1041 = vmatpush1.bf16.msra.mxu0 %v903
          %1042 = vmatprep.mubr.bf16.mxu0 %v562
          %1043 = vmatmul.mubr.bf16.gmra.mrb[0].mxu0 %v561
          %v1044 = vpop.f32.mrb[0].mxu0
          %v1045 = vadd.f32 %v640, %v1044
          %v1046 = vpop.f32.mrb[0].mxu0
          %v1047 = vadd.f32 %v644, %v1046
          %v1048 = vpop.f32.mrb[0].mxu0
          %v1049 = vpop.f32.mrb[0].mxu0
          %1050 = vdwg.mxu0
          %v1051 = vmax.f32 %v1004, 0.0
          %v1052 = vmax.f32 %v1006, 0.0
          %v1053 = vmax.f32 %v1045, 0.0
          %v1054 = vmax.f32 %v1047, 0.0
          %v1055 = vpack.c.bf16 %v1051, %v1051
          %v1056 = vpack.c.bf16 %v1052, %v1052
          %v1057 = vpack.c.bf16 %v1053, %v1053
          %v1058 = vpack.c.bf16 %v1054, %v1054
          %v1059 = vld [vmem:[#allocation11] sm:$0xff]
          %v1060 = vld [vmem:[#allocation11 + $0x8] sm:$0xff]
          %v1061 = vld [vmem:[#allocation11 + $0x10] sm:$0xff]
          %v1062 = vld [vmem:[#allocation11 + $0x18] sm:$0xff]
          %v1063 = vld [vmem:[#allocation11 + $0x20] sm:$0xff]
          %v1064 = vld [vmem:[#allocation11 + $0x28] sm:$0xff]
          %v1065 = vld [vmem:[#allocation11 + $0x30] sm:$0xff]
          %v1066 = vld [vmem:[#allocation11 + $0x38] sm:$0xff]
          %v1067 = vld [vmem:[#allocation11 + $0x40] sm:$0xff]
          %v1068 = vld [vmem:[#allocation11 + $0x48] sm:$0xff]
          %v1069 = vld [vmem:[#allocation11 + $0x50] sm:$0xff]
          %v1070 = vld [vmem:[#allocation11 + $0x58] sm:$0xff]
          %v1071 = vld [vmem:[#allocation11 + $0x60] sm:$0xff]
          %v1072 = vld [vmem:[#allocation11 + $0x68] sm:$0xff]
          %v1073 = vld [vmem:[#allocation11 + $0x70] sm:$0xff]
          %v1074 = vld [vmem:[#allocation11 + $0x78] sm:$0xff]
          %v1075 = vld [vmem:[#allocation11 + $0x80] sm:$0xff]
          %v1076 = vld [vmem:[#allocation11 + $0x88] sm:$0xff]
          %v1077 = vld [vmem:[#allocation11 + $0x90] sm:$0xff]
          %v1078 = vld [vmem:[#allocation11 + $0x98] sm:$0xff]
          %v1079 = vld [vmem:[#allocation11 + $0xa0] sm:$0xff]
          %v1080 = vld [vmem:[#allocation11 + $0xa8] sm:$0xff]
          %v1081 = vld [vmem:[#allocation11 + $0xb0] sm:$0xff]
          %v1082 = vld [vmem:[#allocation11 + $0xb8] sm:$0xff]
          %v1083 = vld [vmem:[#allocation11 + $0xc0] sm:$0xff]
          %v1084 = vld [vmem:[#allocation11 + $0xc8] sm:$0xff]
          %v1085 = vld [vmem:[#allocation11 + $0xd0] sm:$0xff]
          %v1086 = vld [vmem:[#allocation11 + $0xd8] sm:$0xff]
          %v1087 = vld [vmem:[#allocation11 + $0xe0] sm:$0xff]
          %v1088 = vld [vmem:[#allocation11 + $0xe8] sm:$0xff]
          %v1089 = vld [vmem:[#allocation11 + $0xf0] sm:$0xff]
          %v1090 = vld [vmem:[#allocation11 + $0xf8] sm:$0xff]
          %v1091 = vld [vmem:[#allocation11 + $0x100] sm:$0xff]
          %v1092 = vld [vmem:[#allocation11 + $0x108] sm:$0xff]
          %v1093 = vld [vmem:[#allocation11 + $0x110] sm:$0xff]
          %v1094 = vld [vmem:[#allocation11 + $0x118] sm:$0xff]
          %v1095 = vld [vmem:[#allocation11 + $0x120] sm:$0xff]
          %v1096 = vld [vmem:[#allocation11 + $0x128] sm:$0xff]
          %v1097 = vld [vmem:[#allocation11 + $0x130] sm:$0xff]
          %v1098 = vld [vmem:[#allocation11 + $0x138] sm:$0xff]
          %v1099 = vld [vmem:[#allocation11 + $0x140] sm:$0xff]
          %v1100 = vld [vmem:[#allocation11 + $0x148] sm:$0xff]
          %v1101 = vld [vmem:[#allocation11 + $0x150] sm:$0xff]
          %v1102 = vld [vmem:[#allocation11 + $0x158] sm:$0xff]
          %v1103 = vld [vmem:[#allocation11 + $0x160] sm:$0xff]
          %v1104 = vld [vmem:[#allocation11 + $0x168] sm:$0xff]
          %v1105 = vld [vmem:[#allocation11 + $0x170] sm:$0xff]
          %v1106 = vld [vmem:[#allocation11 + $0x178] sm:$0xff]
          %v1107 = vld [vmem:[#allocation11 + $0x180] sm:$0xff]
          %v1108 = vld [vmem:[#allocation11 + $0x188] sm:$0xff]
          %v1109 = vld [vmem:[#allocation11 + $0x190] sm:$0xff]
          %v1110 = vld [vmem:[#allocation11 + $0x198] sm:$0xff]
          %v1111 = vld [vmem:[#allocation11 + $0x1a0] sm:$0xff]
          %v1112 = vld [vmem:[#allocation11 + $0x1a8] sm:$0xff]
          %v1113 = vld [vmem:[#allocation11 + $0x1b0] sm:$0xff]
          %v1114 = vld [vmem:[#allocation11 + $0x1b8] sm:$0xff]
          %v1115 = vld [vmem:[#allocation11 + $0x1c0] sm:$0xff]
          %v1116 = vld [vmem:[#allocation11 + $0x1c8] sm:$0xff]
          %v1117 = vld [vmem:[#allocation11 + $0x1d0] sm:$0xff]
          %v1118 = vld [vmem:[#allocation11 + $0x1d8] sm:$0xff]
          %v1119 = vld [vmem:[#allocation11 + $0x1e0] sm:$0xff]
          %v1120 = vld [vmem:[#allocation11 + $0x1e8] sm:$0xff]
          %v1121 = vld [vmem:[#allocation11 + $0x1f0] sm:$0xff]
          %v1122 = vld [vmem:[#allocation11 + $0x1f8] sm:$0xff]
          %v1123 = vld [vmem:[#allocation11 + $0x200] sm:$0xff]
          %v1124 = vld [vmem:[#allocation11 + $0x208] sm:$0xff]
          %v1125 = vld [vmem:[#allocation11 + $0x210] sm:$0xff]
          %v1126 = vld [vmem:[#allocation11 + $0x218] sm:$0xff]
          %v1127 = vld [vmem:[#allocation11 + $0x220] sm:$0xff]
          %v1128 = vld [vmem:[#allocation11 + $0x228] sm:$0xff]
          %v1129 = vld [vmem:[#allocation11 + $0x230] sm:$0xff]
          %v1130 = vld [vmem:[#allocation11 + $0x238] sm:$0xff]
          %v1131 = vld [vmem:[#allocation11 + $0x240] sm:$0xff]
          %v1132 = vld [vmem:[#allocation11 + $0x248] sm:$0xff]
          %v1133 = vld [vmem:[#allocation11 + $0x250] sm:$0xff]
          %v1134 = vld [vmem:[#allocation11 + $0x258] sm:$0xff]
          %v1135 = vld [vmem:[#allocation11 + $0x260] sm:$0xff]
          %v1136 = vld [vmem:[#allocation11 + $0x268] sm:$0xff]
          %v1137 = vld [vmem:[#allocation11 + $0x270] sm:$0xff]
          %v1138 = vld [vmem:[#allocation11 + $0x278] sm:$0xff]
          %v1139 = vld [vmem:[#allocation11 + $0x280] sm:$0xff]
          %v1140 = vld [vmem:[#allocation11 + $0x288] sm:$0xff]
          %v1141 = vld [vmem:[#allocation11 + $0x290] sm:$0xff]
          %v1142 = vld [vmem:[#allocation11 + $0x298] sm:$0xff]
          %v1143 = vld [vmem:[#allocation11 + $0x2a0] sm:$0xff]
          %v1144 = vld [vmem:[#allocation11 + $0x2a8] sm:$0xff]
          %v1145 = vld [vmem:[#allocation11 + $0x2b0] sm:$0xff]
          %v1146 = vld [vmem:[#allocation11 + $0x2b8] sm:$0xff]
          %v1147 = vld [vmem:[#allocation11 + $0x2c0] sm:$0xff]
          %v1148 = vld [vmem:[#allocation11 + $0x2c8] sm:$0xff]
          %v1149 = vld [vmem:[#allocation11 + $0x2d0] sm:$0xff]
          %v1150 = vld [vmem:[#allocation11 + $0x2d8] sm:$0xff]
          %v1151 = vld [vmem:[#allocation11 + $0x2e0] sm:$0xff]
          %v1152 = vld [vmem:[#allocation11 + $0x2e8] sm:$0xff]
          %v1153 = vld [vmem:[#allocation11 + $0x2f0] sm:$0xff]
          %v1154 = vld [vmem:[#allocation11 + $0x2f8] sm:$0xff]
          %v1155 = vld [vmem:[#allocation11 + $0x300] sm:$0xff]
          %v1156 = vld [vmem:[#allocation11 + $0x308] sm:$0xff]
          %v1157 = vld [vmem:[#allocation11 + $0x310] sm:$0xff]
          %v1158 = vld [vmem:[#allocation11 + $0x318] sm:$0xff]
          %v1159 = vld [vmem:[#allocation11 + $0x320] sm:$0xff]
          %v1160 = vld [vmem:[#allocation11 + $0x328] sm:$0xff]
          %v1161 = vld [vmem:[#allocation11 + $0x330] sm:$0xff]
          %v1162 = vld [vmem:[#allocation11 + $0x338] sm:$0xff]
          %v1163 = vld [vmem:[#allocation11 + $0x340] sm:$0xff]
          %v1164 = vld [vmem:[#allocation11 + $0x348] sm:$0xff]
          %v1165 = vld [vmem:[#allocation11 + $0x350] sm:$0xff]
          %v1166 = vld [vmem:[#allocation11 + $0x358] sm:$0xff]
          %v1167 = vld [vmem:[#allocation11 + $0x360] sm:$0xff]
          %v1168 = vld [vmem:[#allocation11 + $0x368] sm:$0xff]
          %v1169 = vld [vmem:[#allocation11 + $0x370] sm:$0xff]
          %v1170 = vld [vmem:[#allocation11 + $0x378] sm:$0xff]
          %v1171 = vld [vmem:[#allocation11 + $0x380] sm:$0xff]
          %v1172 = vld [vmem:[#allocation11 + $0x388] sm:$0xff]
          %v1173 = vld [vmem:[#allocation11 + $0x390] sm:$0xff]
          %v1174 = vld [vmem:[#allocation11 + $0x398] sm:$0xff]
          %v1175 = vld [vmem:[#allocation11 + $0x3a0] sm:$0xff]
          %v1176 = vld [vmem:[#allocation11 + $0x3a8] sm:$0xff]
          %v1177 = vld [vmem:[#allocation11 + $0x3b0] sm:$0xff]
          %v1178 = vld [vmem:[#allocation11 + $0x3b8] sm:$0xff]
          %v1179 = vld [vmem:[#allocation11 + $0x3c0] sm:$0xff]
          %v1180 = vld [vmem:[#allocation11 + $0x3c8] sm:$0xff]
          %v1181 = vld [vmem:[#allocation11 + $0x3d0] sm:$0xff]
          %v1182 = vld [vmem:[#allocation11 + $0x3d8] sm:$0xff]
          %v1183 = vld [vmem:[#allocation11 + $0x3e0] sm:$0xff]
          %v1184 = vld [vmem:[#allocation11 + $0x3e8] sm:$0xff]
          %v1185 = vld [vmem:[#allocation11 + $0x3f0] sm:$0xff]
          %v1186 = vld [vmem:[#allocation11 + $0x3f8] sm:$0xff]
          %v1187 = vld [vmem:[#allocation11 + $0x400] sm:$0xff]
          %v1188 = vld [vmem:[#allocation11 + $0x408] sm:$0xff]
          %v1189 = vld [vmem:[#allocation11 + $0x410] sm:$0xff]
          %v1190 = vld [vmem:[#allocation11 + $0x418] sm:$0xff]
          %v1191 = vld [vmem:[#allocation11 + $0x420] sm:$0xff]
          %v1192 = vld [vmem:[#allocation11 + $0x428] sm:$0xff]
          %v1193 = vld [vmem:[#allocation11 + $0x430] sm:$0xff]
          %v1194 = vld [vmem:[#allocation11 + $0x438] sm:$0xff]
          %v1195 = vld [vmem:[#allocation11 + $0x440] sm:$0xff]
          %v1196 = vld [vmem:[#allocation11 + $0x448] sm:$0xff]
          %v1197 = vld [vmem:[#allocation11 + $0x450] sm:$0xff]
          %v1198 = vld [vmem:[#allocation11 + $0x458] sm:$0xff]
          %v1199 = vld [vmem:[#allocation11 + $0x460] sm:$0xff]
          %v1200 = vld [vmem:[#allocation11 + $0x468] sm:$0xff]
          %v1201 = vld [vmem:[#allocation11 + $0x470] sm:$0xff]
          %v1202 = vld [vmem:[#allocation11 + $0x478] sm:$0xff]
          %v1203 = vld [vmem:[#allocation11 + $0x480] sm:$0xff]
          %v1204 = vld [vmem:[#allocation11 + $0x488] sm:$0xff]
          %v1205 = vld [vmem:[#allocation11 + $0x490] sm:$0xff]
          %v1206 = vld [vmem:[#allocation11 + $0x498] sm:$0xff]
          %v1207 = vld [vmem:[#allocation11 + $0x4a0] sm:$0xff]
          %v1208 = vld [vmem:[#allocation11 + $0x4a8] sm:$0xff]
          %v1209 = vld [vmem:[#allocation11 + $0x4b0] sm:$0xff]
          %v1210 = vld [vmem:[#allocation11 + $0x4b8] sm:$0xff]
          %v1211 = vld [vmem:[#allocation11 + $0x4c0] sm:$0xff]
          %v1212 = vld [vmem:[#allocation11 + $0x4c8] sm:$0xff]
          %v1213 = vld [vmem:[#allocation11 + $0x4d0] sm:$0xff]
          %v1214 = vld [vmem:[#allocation11 + $0x4d8] sm:$0xff]
          %v1215 = vld [vmem:[#allocation11 + $0x4e0] sm:$0xff]
          %v1216 = vld [vmem:[#allocation11 + $0x4e8] sm:$0xff]
          %v1217 = vld [vmem:[#allocation11 + $0x4f0] sm:$0xff]
          %v1218 = vld [vmem:[#allocation11 + $0x4f8] sm:$0xff]
          %v1219 = vld [vmem:[#allocation11 + $0x500] sm:$0xff]
          %v1220 = vld [vmem:[#allocation11 + $0x508] sm:$0xff]
          %v1221 = vld [vmem:[#allocation11 + $0x510] sm:$0xff]
          %v1222 = vld [vmem:[#allocation11 + $0x518] sm:$0xff]
          %v1223 = vld [vmem:[#allocation11 + $0x520] sm:$0xff]
          %v1224 = vld [vmem:[#allocation11 + $0x528] sm:$0xff]
          %v1225 = vld [vmem:[#allocation11 + $0x530] sm:$0xff]
          %v1226 = vld [vmem:[#allocation11 + $0x538] sm:$0xff]
          %v1227 = vld [vmem:[#allocation11 + $0x540] sm:$0xff]
          %v1228 = vld [vmem:[#allocation11 + $0x548] sm:$0xff]
          %v1229 = vld [vmem:[#allocation11 + $0x550] sm:$0xff]
          %v1230 = vld [vmem:[#allocation11 + $0x558] sm:$0xff]
          %v1231 = vld [vmem:[#allocation11 + $0x560] sm:$0xff]
          %v1232 = vld [vmem:[#allocation11 + $0x568] sm:$0xff]
          %v1233 = vld [vmem:[#allocation11 + $0x570] sm:$0xff]
          %v1234 = vld [vmem:[#allocation11 + $0x578] sm:$0xff]
          %v1235 = vld [vmem:[#allocation11 + $0x580] sm:$0xff]
          %v1236 = vld [vmem:[#allocation11 + $0x588] sm:$0xff]
          %v1237 = vld [vmem:[#allocation11 + $0x590] sm:$0xff]
          %v1238 = vld [vmem:[#allocation11 + $0x598] sm:$0xff]
          %v1239 = vld [vmem:[#allocation11 + $0x5a0] sm:$0xff]
          %v1240 = vld [vmem:[#allocation11 + $0x5a8] sm:$0xff]
          %v1241 = vld [vmem:[#allocation11 + $0x5b0] sm:$0xff]
          %v1242 = vld [vmem:[#allocation11 + $0x5b8] sm:$0xff]
          %v1243 = vld [vmem:[#allocation11 + $0x5c0] sm:$0xff]
          %v1244 = vld [vmem:[#allocation11 + $0x5c8] sm:$0xff]
          %v1245 = vld [vmem:[#allocation11 + $0x5d0] sm:$0xff]
          %v1246 = vld [vmem:[#allocation11 + $0x5d8] sm:$0xff]
          %v1247 = vld [vmem:[#allocation11 + $0x5e0] sm:$0xff]
          %v1248 = vld [vmem:[#allocation11 + $0x5e8] sm:$0xff]
          %v1249 = vld [vmem:[#allocation11 + $0x5f0] sm:$0xff]
          %v1250 = vld [vmem:[#allocation11 + $0x5f8] sm:$0xff]
          %v1251 = vld [vmem:[#allocation11 + $0x600] sm:$0xff]
          %v1252 = vld [vmem:[#allocation11 + $0x608] sm:$0xff]
          %v1253 = vld [vmem:[#allocation11 + $0x610] sm:$0xff]
          %v1254 = vld [vmem:[#allocation11 + $0x618] sm:$0xff]
          %v1255 = vld [vmem:[#allocation11 + $0x620] sm:$0xff]
          %v1256 = vld [vmem:[#allocation11 + $0x628] sm:$0xff]
          %v1257 = vld [vmem:[#allocation11 + $0x630] sm:$0xff]
          %v1258 = vld [vmem:[#allocation11 + $0x638] sm:$0xff]
          %v1259 = vld [vmem:[#allocation12] sm:$0xff]
          %v1261 = vlaneseq
          %v1262 = vshrl.u32 %v1261, 7
          %v1263 = vsub.s32 0, %v1262
          %v1264 = vrot.slane %v1259, %v1263
          %v1265 = vlaneseq
          %v1266 = vshrl.u32 %v1265, 7
          %v1267 = vsub.s32 1, %v1266
          %v1268 = vrot.slane %v1259, %v1267
          %v1269 = vlaneseq
          %v1270 = vshrl.u32 %v1269, 7
          %v1271 = vsub.s32 2, %v1270
          %v1272 = vrot.slane %v1259, %v1271
          %v1273 = vlaneseq
          %v1274 = vshrl.u32 %v1273, 7
          %v1275 = vsub.s32 3, %v1274
          %v1276 = vrot.slane %v1259, %v1275
          %v1277 = vlaneseq
          %v1278 = vshrl.u32 %v1277, 7
          %v1279 = vsub.s32 4, %v1278
          %v1280 = vrot.slane %v1259, %v1279
          %v1281 = vlaneseq
          %v1282 = vshrl.u32 %v1281, 7
          %v1283 = vsub.s32 5, %v1282
          %v1284 = vrot.slane %v1259, %v1283
          %v1285 = vlaneseq
          %v1286 = vshrl.u32 %v1285, 7
          %v1287 = vsub.s32 6, %v1286
          %v1288 = vrot.slane %v1259, %v1287
          %v1289 = vlaneseq
          %v1290 = vshrl.u32 %v1289, 7
          %v1291 = vsub.s32 7, %v1290
          %v1292 = vrot.slane %v1259, %v1291
          %v1501 = vunpack.c.l.b16 %v1059
          %v1502 = vunpack.c.h.b16 %v1059
          %v1503 = vunpack.c.l.b16 %v1060
          %v1504 = vunpack.c.h.b16 %v1060
          %v1505 = vunpack.c.l.b16 %v1061
          %v1506 = vunpack.c.h.b16 %v1061
          %v1507 = vunpack.c.l.b16 %v1062
          %v1508 = vunpack.c.h.b16 %v1062
          %v1509 = vunpack.c.l.b16 %v1063
          %v1510 = vunpack.c.h.b16 %v1063
          %v1511 = vunpack.c.l.b16 %v1064
          %v1512 = vunpack.c.h.b16 %v1064
          %v1513 = vunpack.c.l.b16 %v1065
          %v1514 = vunpack.c.h.b16 %v1065
          %v1515 = vunpack.c.l.b16 %v1066
          %v1516 = vunpack.c.h.b16 %v1066
          %v1517 = vunpack.c.l.b16 %v1067
          %v1518 = vunpack.c.h.b16 %v1067
          %v1519 = vunpack.c.l.b16 %v1068
          %v1520 = vunpack.c.h.b16 %v1068
          %v1521 = vunpack.c.l.b16 %v1069
          %v1522 = vunpack.c.h.b16 %v1069
          %v1523 = vunpack.c.l.b16 %v1070
          %v1524 = vunpack.c.h.b16 %v1070
          %v1525 = vunpack.c.l.b16 %v1071
          %v1526 = vunpack.c.h.b16 %v1071
          %v1527 = vunpack.c.l.b16 %v1072
          %v1528 = vunpack.c.h.b16 %v1072
          %v1529 = vunpack.c.l.b16 %v1073
          %v1530 = vunpack.c.h.b16 %v1073
          %v1531 = vunpack.c.l.b16 %v1074
          %v1532 = vunpack.c.h.b16 %v1074
          %v1533 = vunpack.c.l.b16 %v1075
          %v1534 = vunpack.c.h.b16 %v1075
          %v1535 = vunpack.c.l.b16 %v1076
          %v1536 = vunpack.c.h.b16 %v1076
          %v1537 = vunpack.c.l.b16 %v1077
          %v1538 = vunpack.c.h.b16 %v1077
          %v1539 = vunpack.c.l.b16 %v1078
          %v1540 = vunpack.c.h.b16 %v1078
          %v1541 = vunpack.c.l.b16 %v1079
          %v1542 = vunpack.c.h.b16 %v1079
          %v1543 = vunpack.c.l.b16 %v1080
          %v1544 = vunpack.c.h.b16 %v1080
          %v1545 = vunpack.c.l.b16 %v1081
          %v1546 = vunpack.c.h.b16 %v1081
          %v1547 = vunpack.c.l.b16 %v1082
          %v1548 = vunpack.c.h.b16 %v1082
          %v1549 = vunpack.c.l.b16 %v1083
          %v1550 = vunpack.c.h.b16 %v1083
          %v1551 = vunpack.c.l.b16 %v1084
          %v1552 = vunpack.c.h.b16 %v1084
          %v1553 = vunpack.c.l.b16 %v1085
          %v1554 = vunpack.c.h.b16 %v1085
          %v1555 = vunpack.c.l.b16 %v1086
          %v1556 = vunpack.c.h.b16 %v1086
          %v1557 = vunpack.c.l.b16 %v1087
          %v1558 = vunpack.c.h.b16 %v1087
          %v1559 = vunpack.c.l.b16 %v1088
          %v1560 = vunpack.c.h.b16 %v1088
          %v1561 = vunpack.c.l.b16 %v1089
          %v1562 = vunpack.c.h.b16 %v1089
          %v1563 = vunpack.c.l.b16 %v1090
          %v1564 = vunpack.c.h.b16 %v1090
          %v1565 = vunpack.c.l.b16 %v1091
          %v1566 = vunpack.c.h.b16 %v1091
          %v1567 = vunpack.c.l.b16 %v1092
          %v1568 = vunpack.c.h.b16 %v1092
          %v1569 = vunpack.c.l.b16 %v1093
          %v1570 = vunpack.c.h.b16 %v1093
          %v1571 = vunpack.c.l.b16 %v1094
          %v1572 = vunpack.c.h.b16 %v1094
          %v1573 = vunpack.c.l.b16 %v1095
          %v1574 = vunpack.c.h.b16 %v1095
          %v1575 = vunpack.c.l.b16 %v1096
          %v1576 = vunpack.c.h.b16 %v1096
          %v1577 = vunpack.c.l.b16 %v1097
          %v1578 = vunpack.c.h.b16 %v1097
          %v1579 = vunpack.c.l.b16 %v1098
          %v1580 = vunpack.c.h.b16 %v1098
          %v1581 = vunpack.c.l.b16 %v1099
          %v1582 = vunpack.c.h.b16 %v1099
          %v1583 = vunpack.c.l.b16 %v1100
          %v1584 = vunpack.c.h.b16 %v1100
          %v1585 = vunpack.c.l.b16 %v1101
          %v1586 = vunpack.c.h.b16 %v1101
          %v1587 = vunpack.c.l.b16 %v1102
          %v1588 = vunpack.c.h.b16 %v1102
          %v1589 = vunpack.c.l.b16 %v1103
          %v1590 = vunpack.c.h.b16 %v1103
          %v1591 = vunpack.c.l.b16 %v1104
          %v1592 = vunpack.c.h.b16 %v1104
          %v1593 = vunpack.c.l.b16 %v1105
          %v1594 = vunpack.c.h.b16 %v1105
          %v1595 = vunpack.c.l.b16 %v1106
          %v1596 = vunpack.c.h.b16 %v1106
          %v1597 = vunpack.c.l.b16 %v1107
          %v1598 = vunpack.c.h.b16 %v1107
          %v1599 = vunpack.c.l.b16 %v1108
          %v1600 = vunpack.c.h.b16 %v1108
          %v1601 = vunpack.c.l.b16 %v1109
          %v1602 = vunpack.c.h.b16 %v1109
          %v1603 = vunpack.c.l.b16 %v1110
          %v1604 = vunpack.c.h.b16 %v1110
          %v1605 = vunpack.c.l.b16 %v1111
          %v1606 = vunpack.c.h.b16 %v1111
          %v1607 = vunpack.c.l.b16 %v1112
          %v1608 = vunpack.c.h.b16 %v1112
          %v1609 = vunpack.c.l.b16 %v1113
          %v1610 = vunpack.c.h.b16 %v1113
          %v1611 = vunpack.c.l.b16 %v1114
          %v1612 = vunpack.c.h.b16 %v1114
          %v1613 = vunpack.c.l.b16 %v1115
          %v1614 = vunpack.c.h.b16 %v1115
          %v1615 = vunpack.c.l.b16 %v1116
          %v1616 = vunpack.c.h.b16 %v1116
          %v1617 = vunpack.c.l.b16 %v1117
          %v1618 = vunpack.c.h.b16 %v1117
          %v1619 = vunpack.c.l.b16 %v1118
          %v1620 = vunpack.c.h.b16 %v1118
          %v1621 = vunpack.c.l.b16 %v1119
          %v1622 = vunpack.c.h.b16 %v1119
          %v1623 = vunpack.c.l.b16 %v1120
          %v1624 = vunpack.c.h.b16 %v1120
          %v1625 = vunpack.c.l.b16 %v1121
          %v1626 = vunpack.c.h.b16 %v1121
          %v1627 = vunpack.c.l.b16 %v1122
          %v1628 = vunpack.c.h.b16 %v1122
          %v1629 = vunpack.c.l.b16 %v1123
          %v1630 = vunpack.c.h.b16 %v1123
          %v1631 = vunpack.c.l.b16 %v1124
          %v1632 = vunpack.c.h.b16 %v1124
          %v1633 = vunpack.c.l.b16 %v1125
          %v1634 = vunpack.c.h.b16 %v1125
          %v1635 = vunpack.c.l.b16 %v1126
          %v1636 = vunpack.c.h.b16 %v1126
          %v1637 = vunpack.c.l.b16 %v1127
          %v1638 = vunpack.c.h.b16 %v1127
          %v1639 = vunpack.c.l.b16 %v1128
          %v1640 = vunpack.c.h.b16 %v1128
          %v1641 = vunpack.c.l.b16 %v1129
          %v1642 = vunpack.c.h.b16 %v1129
          %v1643 = vunpack.c.l.b16 %v1130
          %v1644 = vunpack.c.h.b16 %v1130
          %v1645 = vunpack.c.l.b16 %v1131
          %v1646 = vunpack.c.h.b16 %v1131
          %v1647 = vunpack.c.l.b16 %v1132
          %v1648 = vunpack.c.h.b16 %v1132
          %v1649 = vunpack.c.l.b16 %v1133
          %v1650 = vunpack.c.h.b16 %v1133
          %v1651 = vunpack.c.l.b16 %v1134
          %v1652 = vunpack.c.h.b16 %v1134
          %v1653 = vunpack.c.l.b16 %v1135
          %v1654 = vunpack.c.h.b16 %v1135
          %v1655 = vunpack.c.l.b16 %v1136
          %v1656 = vunpack.c.h.b16 %v1136
          %v1657 = vunpack.c.l.b16 %v1137
          %v1658 = vunpack.c.h.b16 %v1137
          %v1659 = vunpack.c.l.b16 %v1138
          %v1660 = vunpack.c.h.b16 %v1138
          %v1661 = vunpack.c.l.b16 %v1139
          %v1662 = vunpack.c.h.b16 %v1139
          %v1663 = vunpack.c.l.b16 %v1140
          %v1664 = vunpack.c.h.b16 %v1140
          %v1665 = vunpack.c.l.b16 %v1141
          %v1666 = vunpack.c.h.b16 %v1141
          %v1667 = vunpack.c.l.b16 %v1142
          %v1668 = vunpack.c.h.b16 %v1142
          %v1669 = vunpack.c.l.b16 %v1143
          %v1670 = vunpack.c.h.b16 %v1143
          %v1671 = vunpack.c.l.b16 %v1144
          %v1672 = vunpack.c.h.b16 %v1144
          %v1673 = vunpack.c.l.b16 %v1145
          %v1674 = vunpack.c.h.b16 %v1145
          %v1675 = vunpack.c.l.b16 %v1146
          %v1676 = vunpack.c.h.b16 %v1146
          %v1677 = vunpack.c.l.b16 %v1147
          %v1678 = vunpack.c.h.b16 %v1147
          %v1679 = vunpack.c.l.b16 %v1148
          %v1680 = vunpack.c.h.b16 %v1148
          %v1681 = vunpack.c.l.b16 %v1149
          %v1682 = vunpack.c.h.b16 %v1149
          %v1683 = vunpack.c.l.b16 %v1150
          %v1684 = vunpack.c.h.b16 %v1150
          %v1685 = vunpack.c.l.b16 %v1151
          %v1686 = vunpack.c.h.b16 %v1151
          %v1687 = vunpack.c.l.b16 %v1152
          %v1688 = vunpack.c.h.b16 %v1152
          %v1689 = vunpack.c.l.b16 %v1153
          %v1690 = vunpack.c.h.b16 %v1153
          %v1691 = vunpack.c.l.b16 %v1154
          %v1692 = vunpack.c.h.b16 %v1154
          %v1693 = vunpack.c.l.b16 %v1155
          %v1694 = vunpack.c.h.b16 %v1155
          %v1695 = vunpack.c.l.b16 %v1156
          %v1696 = vunpack.c.h.b16 %v1156
          %v1697 = vunpack.c.l.b16 %v1157
          %v1698 = vunpack.c.h.b16 %v1157
          %v1699 = vunpack.c.l.b16 %v1158
          %v1700 = vunpack.c.h.b16 %v1158
          %v1701 = vunpack.c.l.b16 %v1159
          %v1702 = vunpack.c.h.b16 %v1159
          %v1703 = vunpack.c.l.b16 %v1160
          %v1704 = vunpack.c.h.b16 %v1160
          %v1705 = vunpack.c.l.b16 %v1161
          %v1706 = vunpack.c.h.b16 %v1161
          %v1707 = vunpack.c.l.b16 %v1162
          %v1708 = vunpack.c.h.b16 %v1162
          %v1709 = vunpack.c.l.b16 %v1163
          %v1710 = vunpack.c.h.b16 %v1163
          %v1711 = vunpack.c.l.b16 %v1164
          %v1712 = vunpack.c.h.b16 %v1164
          %v1713 = vunpack.c.l.b16 %v1165
          %v1714 = vunpack.c.h.b16 %v1165
          %v1715 = vunpack.c.l.b16 %v1166
          %v1716 = vunpack.c.h.b16 %v1166
          %v1717 = vunpack.c.l.b16 %v1167
          %v1718 = vunpack.c.h.b16 %v1167
          %v1719 = vunpack.c.l.b16 %v1168
          %v1720 = vunpack.c.h.b16 %v1168
          %v1721 = vunpack.c.l.b16 %v1169
          %v1722 = vunpack.c.h.b16 %v1169
          %v1723 = vunpack.c.l.b16 %v1170
          %v1724 = vunpack.c.h.b16 %v1170
          %v1725 = vunpack.c.l.b16 %v1171
          %v1726 = vunpack.c.h.b16 %v1171
          %v1727 = vunpack.c.l.b16 %v1172
          %v1728 = vunpack.c.h.b16 %v1172
          %v1729 = vunpack.c.l.b16 %v1173
          %v1730 = vunpack.c.h.b16 %v1173
          %v1731 = vunpack.c.l.b16 %v1174
          %v1732 = vunpack.c.h.b16 %v1174
          %v1733 = vunpack.c.l.b16 %v1175
          %v1734 = vunpack.c.h.b16 %v1175
          %v1735 = vunpack.c.l.b16 %v1176
          %v1736 = vunpack.c.h.b16 %v1176
          %v1737 = vunpack.c.l.b16 %v1177
          %v1738 = vunpack.c.h.b16 %v1177
          %v1739 = vunpack.c.l.b16 %v1178
          %v1740 = vunpack.c.h.b16 %v1178
          %v1741 = vunpack.c.l.b16 %v1179
          %v1742 = vunpack.c.h.b16 %v1179
          %v1743 = vunpack.c.l.b16 %v1180
          %v1744 = vunpack.c.h.b16 %v1180
          %v1745 = vunpack.c.l.b16 %v1181
          %v1746 = vunpack.c.h.b16 %v1181
          %v1747 = vunpack.c.l.b16 %v1182
          %v1748 = vunpack.c.h.b16 %v1182
          %v1749 = vunpack.c.l.b16 %v1183
          %v1750 = vunpack.c.h.b16 %v1183
          %v1751 = vunpack.c.l.b16 %v1184
          %v1752 = vunpack.c.h.b16 %v1184
          %v1753 = vunpack.c.l.b16 %v1185
          %v1754 = vunpack.c.h.b16 %v1185
          %v1755 = vunpack.c.l.b16 %v1186
          %v1756 = vunpack.c.h.b16 %v1186
          %v1757 = vunpack.c.l.b16 %v1187
          %v1758 = vunpack.c.h.b16 %v1187
          %v1759 = vunpack.c.l.b16 %v1188
          %v1760 = vunpack.c.h.b16 %v1188
          %v1761 = vunpack.c.l.b16 %v1189
          %v1762 = vunpack.c.h.b16 %v1189
          %v1763 = vunpack.c.l.b16 %v1190
          %v1764 = vunpack.c.h.b16 %v1190
          %v1765 = vunpack.c.l.b16 %v1191
          %v1766 = vunpack.c.h.b16 %v1191
          %v1767 = vunpack.c.l.b16 %v1192
          %v1768 = vunpack.c.h.b16 %v1192
          %v1769 = vunpack.c.l.b16 %v1193
          %v1770 = vunpack.c.h.b16 %v1193
          %v1771 = vunpack.c.l.b16 %v1194
          %v1772 = vunpack.c.h.b16 %v1194
          %v1773 = vunpack.c.l.b16 %v1195
          %v1774 = vunpack.c.h.b16 %v1195
          %v1775 = vunpack.c.l.b16 %v1196
          %v1776 = vunpack.c.h.b16 %v1196
          %v1777 = vunpack.c.l.b16 %v1197
          %v1778 = vunpack.c.h.b16 %v1197
          %v1779 = vunpack.c.l.b16 %v1198
          %v1780 = vunpack.c.h.b16 %v1198
          %v1781 = vunpack.c.l.b16 %v1199
          %v1782 = vunpack.c.h.b16 %v1199
          %v1783 = vunpack.c.l.b16 %v1200
          %v1784 = vunpack.c.h.b16 %v1200
          %v1785 = vunpack.c.l.b16 %v1201
          %v1786 = vunpack.c.h.b16 %v1201
          %v1787 = vunpack.c.l.b16 %v1202
          %v1788 = vunpack.c.h.b16 %v1202
          %v1789 = vunpack.c.l.b16 %v1203
          %v1790 = vunpack.c.h.b16 %v1203
          %v1791 = vunpack.c.l.b16 %v1204
          %v1792 = vunpack.c.h.b16 %v1204
          %v1793 = vunpack.c.l.b16 %v1205
          %v1794 = vunpack.c.h.b16 %v1205
          %v1795 = vunpack.c.l.b16 %v1206
          %v1796 = vunpack.c.h.b16 %v1206
          %v1797 = vunpack.c.l.b16 %v1207
          %v1798 = vunpack.c.h.b16 %v1207
          %v1799 = vunpack.c.l.b16 %v1208
          %v1800 = vunpack.c.h.b16 %v1208
          %v1801 = vunpack.c.l.b16 %v1209
          %v1802 = vunpack.c.h.b16 %v1209
          %v1803 = vunpack.c.l.b16 %v1210
          %v1804 = vunpack.c.h.b16 %v1210
          %v1805 = vunpack.c.l.b16 %v1211
          %v1806 = vunpack.c.h.b16 %v1211
          %v1807 = vunpack.c.l.b16 %v1212
          %v1808 = vunpack.c.h.b16 %v1212
          %v1809 = vunpack.c.l.b16 %v1213
          %v1810 = vunpack.c.h.b16 %v1213
          %v1811 = vunpack.c.l.b16 %v1214
          %v1812 = vunpack.c.h.b16 %v1214
          %v1813 = vunpack.c.l.b16 %v1215
          %v1814 = vunpack.c.h.b16 %v1215
          %v1815 = vunpack.c.l.b16 %v1216
          %v1816 = vunpack.c.h.b16 %v1216
          %v1817 = vunpack.c.l.b16 %v1217
          %v1818 = vunpack.c.h.b16 %v1217
          %v1819 = vunpack.c.l.b16 %v1218
          %v1820 = vunpack.c.h.b16 %v1218
          %v1821 = vunpack.c.l.b16 %v1219
          %v1822 = vunpack.c.h.b16 %v1219
          %v1823 = vunpack.c.l.b16 %v1220
          %v1824 = vunpack.c.h.b16 %v1220
          %v1825 = vunpack.c.l.b16 %v1221
          %v1826 = vunpack.c.h.b16 %v1221
          %v1827 = vunpack.c.l.b16 %v1222
          %v1828 = vunpack.c.h.b16 %v1222
          %v1829 = vunpack.c.l.b16 %v1223
          %v1830 = vunpack.c.h.b16 %v1223
          %v1831 = vunpack.c.l.b16 %v1224
          %v1832 = vunpack.c.h.b16 %v1224
          %v1833 = vunpack.c.l.b16 %v1225
          %v1834 = vunpack.c.h.b16 %v1225
          %v1835 = vunpack.c.l.b16 %v1226
          %v1836 = vunpack.c.h.b16 %v1226
          %v1837 = vunpack.c.l.b16 %v1227
          %v1838 = vunpack.c.h.b16 %v1227
          %v1839 = vunpack.c.l.b16 %v1228
          %v1840 = vunpack.c.h.b16 %v1228
          %v1841 = vunpack.c.l.b16 %v1229
          %v1842 = vunpack.c.h.b16 %v1229
          %v1843 = vunpack.c.l.b16 %v1230
          %v1844 = vunpack.c.h.b16 %v1230
          %v1845 = vunpack.c.l.b16 %v1231
          %v1846 = vunpack.c.h.b16 %v1231
          %v1847 = vunpack.c.l.b16 %v1232
          %v1848 = vunpack.c.h.b16 %v1232
          %v1849 = vunpack.c.l.b16 %v1233
          %v1850 = vunpack.c.h.b16 %v1233
          %v1851 = vunpack.c.l.b16 %v1234
          %v1852 = vunpack.c.h.b16 %v1234
          %v1853 = vunpack.c.l.b16 %v1235
          %v1854 = vunpack.c.h.b16 %v1235
          %v1855 = vunpack.c.l.b16 %v1236
          %v1856 = vunpack.c.h.b16 %v1236
          %v1857 = vunpack.c.l.b16 %v1237
          %v1858 = vunpack.c.h.b16 %v1237
          %v1859 = vunpack.c.l.b16 %v1238
          %v1860 = vunpack.c.h.b16 %v1238
          %v1861 = vunpack.c.l.b16 %v1239
          %v1862 = vunpack.c.h.b16 %v1239
          %v1863 = vunpack.c.l.b16 %v1240
          %v1864 = vunpack.c.h.b16 %v1240
          %v1865 = vunpack.c.l.b16 %v1241
          %v1866 = vunpack.c.h.b16 %v1241
          %v1867 = vunpack.c.l.b16 %v1242
          %v1868 = vunpack.c.h.b16 %v1242
          %v1869 = vunpack.c.l.b16 %v1243
          %v1870 = vunpack.c.h.b16 %v1243
          %v1871 = vunpack.c.l.b16 %v1244
          %v1872 = vunpack.c.h.b16 %v1244
          %v1873 = vunpack.c.l.b16 %v1245
          %v1874 = vunpack.c.h.b16 %v1245
          %v1875 = vunpack.c.l.b16 %v1246
          %v1876 = vunpack.c.h.b16 %v1246
          %v1877 = vunpack.c.l.b16 %v1247
          %v1878 = vunpack.c.h.b16 %v1247
          %v1879 = vunpack.c.l.b16 %v1248
          %v1880 = vunpack.c.h.b16 %v1248
          %v1881 = vunpack.c.l.b16 %v1249
          %v1882 = vunpack.c.h.b16 %v1249
          %v1883 = vunpack.c.l.b16 %v1250
          %v1884 = vunpack.c.h.b16 %v1250
          %v1885 = vunpack.c.l.b16 %v1251
          %v1886 = vunpack.c.h.b16 %v1251
          %v1887 = vunpack.c.l.b16 %v1252
          %v1888 = vunpack.c.h.b16 %v1252
          %v1889 = vunpack.c.l.b16 %v1253
          %v1890 = vunpack.c.h.b16 %v1253
          %v1891 = vunpack.c.l.b16 %v1254
          %v1892 = vunpack.c.h.b16 %v1254
          %v1893 = vunpack.c.l.b16 %v1255
          %v1894 = vunpack.c.h.b16 %v1255
          %v1895 = vunpack.c.l.b16 %v1256
          %v1896 = vunpack.c.h.b16 %v1256
          %v1897 = vunpack.c.l.b16 %v1257
          %v1898 = vunpack.c.h.b16 %v1257
          %v1899 = vunpack.c.l.b16 %v1258
          %v1900 = vunpack.c.h.b16 %v1258
          %v1901 = vpack.c.b16 %v1509, %v1501
          %v1902 = vpack.c.b16 %v1510, %v1502
          %v1903 = vpack.c.b16 %v1511, %v1503
          %v1904 = vpack.c.b16 %v1512, %v1504
          %v1905 = vpack.c.b16 %v1513, %v1505
          %v1906 = vpack.c.b16 %v1514, %v1506
          %v1907 = vpack.c.b16 %v1515, %v1507
          %v1908 = vpack.c.b16 %v1516, %v1508
          %v1909 = vpack.c.b16 %v1525, %v1517
          %v1910 = vpack.c.b16 %v1526, %v1518
          %v1911 = vpack.c.b16 %v1527, %v1519
          %v1912 = vpack.c.b16 %v1528, %v1520
          %v1913 = vpack.c.b16 %v1529, %v1521
          %v1914 = vpack.c.b16 %v1530, %v1522
          %v1915 = vpack.c.b16 %v1531, %v1523
          %v1916 = vpack.c.b16 %v1532, %v1524
          %v1917 = vpack.c.b16 %v1541, %v1533
          %v1918 = vpack.c.b16 %v1542, %v1534
          %v1919 = vpack.c.b16 %v1543, %v1535
          %v1920 = vpack.c.b16 %v1544, %v1536
          %v1921 = vpack.c.b16 %v1545, %v1537
          %v1922 = vpack.c.b16 %v1546, %v1538
          %v1923 = vpack.c.b16 %v1547, %v1539
          %v1924 = vpack.c.b16 %v1548, %v1540
          %v1925 = vpack.c.b16 %v1557, %v1549
          %v1926 = vpack.c.b16 %v1558, %v1550
          %v1927 = vpack.c.b16 %v1559, %v1551
          %v1928 = vpack.c.b16 %v1560, %v1552
          %v1929 = vpack.c.b16 %v1561, %v1553
          %v1930 = vpack.c.b16 %v1562, %v1554
          %v1931 = vpack.c.b16 %v1563, %v1555
          %v1932 = vpack.c.b16 %v1564, %v1556
          %v1933 = vpack.c.b16 %v1573, %v1565
          %v1934 = vpack.c.b16 %v1574, %v1566
          %v1935 = vpack.c.b16 %v1575, %v1567
          %v1936 = vpack.c.b16 %v1576, %v1568
          %v1937 = vpack.c.b16 %v1577, %v1569
          %v1938 = vpack.c.b16 %v1578, %v1570
          %v1939 = vpack.c.b16 %v1579, %v1571
          %v1940 = vpack.c.b16 %v1580, %v1572
          %v1941 = vpack.c.b16 %v1589, %v1581
          %v1942 = vpack.c.b16 %v1590, %v1582
          %v1943 = vpack.c.b16 %v1591, %v1583
          %v1944 = vpack.c.b16 %v1592, %v1584
          %v1945 = vpack.c.b16 %v1593, %v1585
          %v1946 = vpack.c.b16 %v1594, %v1586
          %v1947 = vpack.c.b16 %v1595, %v1587
          %v1948 = vpack.c.b16 %v1596, %v1588
          %v1949 = vpack.c.b16 %v1605, %v1597
          %v1950 = vpack.c.b16 %v1606, %v1598
          %v1951 = vpack.c.b16 %v1607, %v1599
          %v1952 = vpack.c.b16 %v1608, %v1600
          %v1953 = vpack.c.b16 %v1609, %v1601
          %v1954 = vpack.c.b16 %v1610, %v1602
          %v1955 = vpack.c.b16 %v1611, %v1603
          %v1956 = vpack.c.b16 %v1612, %v1604
          %v1957 = vpack.c.b16 %v1621, %v1613
          %v1958 = vpack.c.b16 %v1622, %v1614
          %v1959 = vpack.c.b16 %v1623, %v1615
          %v1960 = vpack.c.b16 %v1624, %v1616
          %v1961 = vpack.c.b16 %v1625, %v1617
          %v1962 = vpack.c.b16 %v1626, %v1618
          %v1963 = vpack.c.b16 %v1627, %v1619
          %v1964 = vpack.c.b16 %v1628, %v1620
          %v1965 = vpack.c.b16 %v1637, %v1629
          %v1966 = vpack.c.b16 %v1638, %v1630
          %v1967 = vpack.c.b16 %v1639, %v1631
          %v1968 = vpack.c.b16 %v1640, %v1632
          %v1969 = vpack.c.b16 %v1641, %v1633
          %v1970 = vpack.c.b16 %v1642, %v1634
          %v1971 = vpack.c.b16 %v1643, %v1635
          %v1972 = vpack.c.b16 %v1644, %v1636
          %v1973 = vpack.c.b16 %v1653, %v1645
          %v1974 = vpack.c.b16 %v1654, %v1646
          %v1975 = vpack.c.b16 %v1655, %v1647
          %v1976 = vpack.c.b16 %v1656, %v1648
          %v1977 = vpack.c.b16 %v1657, %v1649
          %v1978 = vpack.c.b16 %v1658, %v1650
          %v1979 = vpack.c.b16 %v1659, %v1651
          %v1980 = vpack.c.b16 %v1660, %v1652
          %v1981 = vpack.c.b16 %v1669, %v1661
          %v1982 = vpack.c.b16 %v1670, %v1662
          %v1983 = vpack.c.b16 %v1671, %v1663
          %v1984 = vpack.c.b16 %v1672, %v1664
          %v1985 = vpack.c.b16 %v1673, %v1665
          %v1986 = vpack.c.b16 %v1674, %v1666
          %v1987 = vpack.c.b16 %v1675, %v1667
          %v1988 = vpack.c.b16 %v1676, %v1668
          %v1989 = vpack.c.b16 %v1685, %v1677
          %v1990 = vpack.c.b16 %v1686, %v1678
          %v1991 = vpack.c.b16 %v1687, %v1679
          %v1992 = vpack.c.b16 %v1688, %v1680
          %v1993 = vpack.c.b16 %v1689, %v1681
          %v1994 = vpack.c.b16 %v1690, %v1682
          %v1995 = vpack.c.b16 %v1691, %v1683
          %v1996 = vpack.c.b16 %v1692, %v1684
          %v1997 = vpack.c.b16 %v1701, %v1693
          %v1998 = vpack.c.b16 %v1702, %v1694
          %v1999 = vpack.c.b16 %v1703, %v1695
          %v2000 = vpack.c.b16 %v1704, %v1696
          %v2001 = vpack.c.b16 %v1705, %v1697
          %v2002 = vpack.c.b16 %v1706, %v1698
          %v2003 = vpack.c.b16 %v1707, %v1699
          %v2004 = vpack.c.b16 %v1708, %v1700
          %v2005 = vpack.c.b16 %v1717, %v1709
          %v2006 = vpack.c.b16 %v1718, %v1710
          %v2007 = vpack.c.b16 %v1719, %v1711
          %v2008 = vpack.c.b16 %v1720, %v1712
          %v2009 = vpack.c.b16 %v1721, %v1713
          %v2010 = vpack.c.b16 %v1722, %v1714
          %v2011 = vpack.c.b16 %v1723, %v1715
          %v2012 = vpack.c.b16 %v1724, %v1716
          %v2013 = vpack.c.b16 %v1733, %v1725
          %v2014 = vpack.c.b16 %v1734, %v1726
          %v2015 = vpack.c.b16 %v1735, %v1727
          %v2016 = vpack.c.b16 %v1736, %v1728
          %v2017 = vpack.c.b16 %v1737, %v1729
          %v2018 = vpack.c.b16 %v1738, %v1730
          %v2019 = vpack.c.b16 %v1739, %v1731
          %v2020 = vpack.c.b16 %v1740, %v1732
          %v2021 = vpack.c.b16 %v1749, %v1741
          %v2022 = vpack.c.b16 %v1750, %v1742
          %v2023 = vpack.c.b16 %v1751, %v1743
          %v2024 = vpack.c.b16 %v1752, %v1744
          %v2025 = vpack.c.b16 %v1753, %v1745
          %v2026 = vpack.c.b16 %v1754, %v1746
          %v2027 = vpack.c.b16 %v1755, %v1747
          %v2028 = vpack.c.b16 %v1756, %v1748
          %v2029 = vpack.c.b16 %v1765, %v1757
          %v2030 = vpack.c.b16 %v1766, %v1758
          %v2031 = vpack.c.b16 %v1767, %v1759
          %v2032 = vpack.c.b16 %v1768, %v1760
          %v2033 = vpack.c.b16 %v1769, %v1761
          %v2034 = vpack.c.b16 %v1770, %v1762
          %v2035 = vpack.c.b16 %v1771, %v1763
          %v2036 = vpack.c.b16 %v1772, %v1764
          %v2037 = vpack.c.b16 %v1781, %v1773
          %v2038 = vpack.c.b16 %v1782, %v1774
          %v2039 = vpack.c.b16 %v1783, %v1775
          %v2040 = vpack.c.b16 %v1784, %v1776
          %v2041 = vpack.c.b16 %v1785, %v1777
          %v2042 = vpack.c.b16 %v1786, %v1778
          %v2043 = vpack.c.b16 %v1787, %v1779
          %v2044 = vpack.c.b16 %v1788, %v1780
          %v2045 = vpack.c.b16 %v1797, %v1789
          %v2046 = vpack.c.b16 %v1798, %v1790
          %v2047 = vpack.c.b16 %v1799, %v1791
          %v2048 = vpack.c.b16 %v1800, %v1792
          %v2049 = vpack.c.b16 %v1801, %v1793
          %v2050 = vpack.c.b16 %v1802, %v1794
          %v2051 = vpack.c.b16 %v1803, %v1795
          %v2052 = vpack.c.b16 %v1804, %v1796
          %v2053 = vpack.c.b16 %v1813, %v1805
          %v2054 = vpack.c.b16 %v1814, %v1806
          %v2055 = vpack.c.b16 %v1815, %v1807
          %v2056 = vpack.c.b16 %v1816, %v1808
          %v2057 = vpack.c.b16 %v1817, %v1809
          %v2058 = vpack.c.b16 %v1818, %v1810
          %v2059 = vpack.c.b16 %v1819, %v1811
          %v2060 = vpack.c.b16 %v1820, %v1812
          %v2061 = vpack.c.b16 %v1829, %v1821
          %v2062 = vpack.c.b16 %v1830, %v1822
          %v2063 = vpack.c.b16 %v1831, %v1823
          %v2064 = vpack.c.b16 %v1832, %v1824
          %v2065 = vpack.c.b16 %v1833, %v1825
          %v2066 = vpack.c.b16 %v1834, %v1826
          %v2067 = vpack.c.b16 %v1835, %v1827
          %v2068 = vpack.c.b16 %v1836, %v1828
          %v2069 = vpack.c.b16 %v1845, %v1837
          %v2070 = vpack.c.b16 %v1846, %v1838
          %v2071 = vpack.c.b16 %v1847, %v1839
          %v2072 = vpack.c.b16 %v1848, %v1840
          %v2073 = vpack.c.b16 %v1849, %v1841
          %v2074 = vpack.c.b16 %v1850, %v1842
          %v2075 = vpack.c.b16 %v1851, %v1843
          %v2076 = vpack.c.b16 %v1852, %v1844
          %v2077 = vpack.c.b16 %v1861, %v1853
          %v2078 = vpack.c.b16 %v1862, %v1854
          %v2079 = vpack.c.b16 %v1863, %v1855
          %v2080 = vpack.c.b16 %v1864, %v1856
          %v2081 = vpack.c.b16 %v1865, %v1857
          %v2082 = vpack.c.b16 %v1866, %v1858
          %v2083 = vpack.c.b16 %v1867, %v1859
          %v2084 = vpack.c.b16 %v1868, %v1860
          %v2085 = vpack.c.b16 %v1877, %v1869
          %v2086 = vpack.c.b16 %v1878, %v1870
          %v2087 = vpack.c.b16 %v1879, %v1871
          %v2088 = vpack.c.b16 %v1880, %v1872
          %v2089 = vpack.c.b16 %v1881, %v1873
          %v2090 = vpack.c.b16 %v1882, %v1874
          %v2091 = vpack.c.b16 %v1883, %v1875
          %v2092 = vpack.c.b16 %v1884, %v1876
          %v2093 = vpack.c.b16 %v1893, %v1885
          %v2094 = vpack.c.b16 %v1894, %v1886
          %v2095 = vpack.c.b16 %v1895, %v1887
          %v2096 = vpack.c.b16 %v1896, %v1888
          %v2097 = vpack.c.b16 %v1897, %v1889
          %v2098 = vpack.c.b16 %v1898, %v1890
          %v2099 = vpack.c.b16 %v1899, %v1891
          %v2100 = vpack.c.b16 %v1900, %v1892
          %vm2301 = vcmask 130048
          %v2303 = vsel %vm2301, %v1058, 0
          %2305 = vmatprep.subr.bf16.mxu0 %v1902
          %2306 = vmatpush1.bf16.msra.mxu0 %v1901
          %2307 = vmatprep.subr.bf16.mxu0 %v1910
          %2308 = vmatpush1.bf16.msra.mxu0 %v1909
          %2309 = vmatprep.subr.bf16.mxu0 %v1918
          %2310 = vmatpush1.bf16.msra.mxu0 %v1917
          %2311 = vmatprep.subr.bf16.mxu0 %v1926
          %2312 = vmatpush1.bf16.msra.mxu0 %v1925
          %2313 = vmatprep.subr.bf16.mxu0 %v1934
          %2314 = vmatpush1.bf16.msra.mxu0 %v1933
          %2315 = vmatprep.subr.bf16.mxu0 %v1942
          %2316 = vmatpush1.bf16.msra.mxu0 %v1941
          %2317 = vmatprep.subr.bf16.mxu0 %v1950
          %2318 = vmatpush1.bf16.msra.mxu0 %v1949
          %2319 = vmatprep.subr.bf16.mxu0 %v1958
          %2320 = vmatpush1.bf16.msra.mxu0 %v1957
          %2321 = vmatprep.subr.bf16.mxu0 %v1966
          %2322 = vmatpush1.bf16.msra.mxu0 %v1965
          %2323 = vmatprep.subr.bf16.mxu0 %v1974
          %2324 = vmatpush1.bf16.msra.mxu0 %v1973
          %2325 = vmatprep.subr.bf16.mxu0 %v1982
          %2326 = vmatpush1.bf16.msra.mxu0 %v1981
          %2327 = vmatprep.subr.bf16.mxu0 %v1990
          %2328 = vmatpush1.bf16.msra.mxu0 %v1989
          %2329 = vmatprep.subr.bf16.mxu0 %v1998
          %2330 = vmatpush1.bf16.msra.mxu0 %v1997
          %2331 = vmatprep.subr.bf16.mxu0 %v2006
          %2332 = vmatpush1.bf16.msra.mxu0 %v2005
          %2333 = vmatprep.subr.bf16.mxu0 %v2014
          %2334 = vmatpush1.bf16.msra.mxu0 %v2013
          %2335 = vmatprep.subr.bf16.mxu0 %v2022
          %2336 = vmatpush1.bf16.msra.mxu0 %v2021
          %2337 = vmatprep.mubr.bf16.mxu0 %v1056
          %2338 = vmatmul.mubr.bf16.gmra.mrb[0].mxu0 %v1055
          %v2339 = vpop.f32.mrb[0].mxu0
          %v2340 = vadd.f32 %v1264, %v2339
          %v2341 = vpop.f32.mrb[0].mxu0
          %v2342 = vadd.f32 %v1268, %v2341
          %v2343 = vpop.f32.mrb[0].mxu0
          %v2344 = vpop.f32.mrb[0].mxu0
          %2345 = vdwg.mxu0
          %2346 = vmatprep.subr.bf16.mxu0 %v2030
          %2347 = vmatpush1.bf16.msra.mxu0 %v2029
          %2348 = vmatprep.subr.bf16.mxu0 %v2038
          %2349 = vmatpush1.bf16.msra.mxu0 %v2037
          %2350 = vmatprep.subr.bf16.mxu0 %v2046
          %2351 = vmatpush1.bf16.msra.mxu0 %v2045
          %2352 = vmatprep.subr.bf16.mxu0 %v2054
          %2353 = vmatpush1.bf16.msra.mxu0 %v2053
          %2354 = vmatprep.subr.bf16.mxu0 %v2062
          %2355 = vmatpush1.bf16.msra.mxu0 %v2061
          %2356 = vmatprep.subr.bf16.mxu0 %v2070
          %2357 = vmatpush1.bf16.msra.mxu0 %v2069
          %2358 = vmatprep.subr.bf16.mxu0 %v2078
          %2359 = vmatpush1.bf16.msra.mxu0 %v2077
          %2360 = vmatprep.subr.bf16.mxu0 %v2086
          %2361 = vmatpush1.bf16.msra.mxu0 %v2085
          %2362 = vmatprep.subr.bf16.mxu0 %v2094
          %2363 = vmatpush1.bf16.msra.mxu0 %v2093
          %2364 = vmatprep.subr.bf16.mxu0 0
          %2365 = vmatpush1.bf16.msra.mxu0 0
          %2366 = vmatprep.subr.bf16.mxu0 0
          %2367 = vmatpush1.bf16.msra.mxu0 0
          %2368 = vmatprep.subr.bf16.mxu0 0
          %2369 = vmatpush1.bf16.msra.mxu0 0
          %2370 = vmatprep.subr.bf16.mxu0 0
          %2371 = vmatpush1.bf16.msra.mxu0 0
          %2372 = vmatprep.subr.bf16.mxu0 0
          %2373 = vmatpush1.bf16.msra.mxu0 0
          %2374 = vmatprep.subr.bf16.mxu0 0
          %2375 = vmatpush1.bf16.msra.mxu0 0
          %2376 = vmatprep.subr.bf16.mxu0 0
          %2377 = vmatpush1.bf16.msra.mxu0 0
          %2378 = vmatprep.mubr.bf16.mxu0 %v2303
          %2379 = vmatmul.mubr.bf16.gmra.mrb[0].mxu0 %v1057
          %v2380 = vpop.f32.mrb[0].mxu0
          %v2381 = vadd.f32 %v2340, %v2380
          %v2382 = vpop.f32.mrb[0].mxu0
          %v2383 = vadd.f32 %v2342, %v2382
          %v2384 = vpop.f32.mrb[0].mxu0
          %v2385 = vpop.f32.mrb[0].mxu0
          %2386 = vdwg.mxu0
          %2387 = vmatprep.subr.bf16.mxu0 %v1904
          %2388 = vmatpush1.bf16.msra.mxu0 %v1903
          %2389 = vmatprep.subr.bf16.mxu0 %v1912
          %2390 = vmatpush1.bf16.msra.mxu0 %v1911
          %2391 = vmatprep.subr.bf16.mxu0 %v1920
          %2392 = vmatpush1.bf16.msra.mxu0 %v1919
          %2393 = vmatprep.subr.bf16.mxu0 %v1928
          %2394 = vmatpush1.bf16.msra.mxu0 %v1927
          %2395 = vmatprep.subr.bf16.mxu0 %v1936
          %2396 = vmatpush1.bf16.msra.mxu0 %v1935
          %2397 = vmatprep.subr.bf16.mxu0 %v1944
          %2398 = vmatpush1.bf16.msra.mxu0 %v1943
          %2399 = vmatprep.subr.bf16.mxu0 %v1952
          %2400 = vmatpush1.bf16.msra.mxu0 %v1951
          %2401 = vmatprep.subr.bf16.mxu0 %v1960
          %2402 = vmatpush1.bf16.msra.mxu0 %v1959
          %2403 = vmatprep.subr.bf16.mxu0 %v1968
          %2404 = vmatpush1.bf16.msra.mxu0 %v1967
          %2405 = vmatprep.subr.bf16.mxu0 %v1976
          %2406 = vmatpush1.bf16.msra.mxu0 %v1975
          %2407 = vmatprep.subr.bf16.mxu0 %v1984
          %2408 = vmatpush1.bf16.msra.mxu0 %v1983
          %2409 = vmatprep.subr.bf16.mxu0 %v1992
          %2410 = vmatpush1.bf16.msra.mxu0 %v1991
          %2411 = vmatprep.subr.bf16.mxu0 %v2000
          %2412 = vmatpush1.bf16.msra.mxu0 %v1999
          %2413 = vmatprep.subr.bf16.mxu0 %v2008
          %2414 = vmatpush1.bf16.msra.mxu0 %v2007
          %2415 = vmatprep.subr.bf16.mxu0 %v2016
          %2416 = vmatpush1.bf16.msra.mxu0 %v2015
          %2417 = vmatprep.subr.bf16.mxu0 %v2024
          %2418 = vmatpush1.bf16.msra.mxu0 %v2023
          %2419 = vmatprep.mubr.bf16.mxu0 %v1056
          %2420 = vmatmul.mubr.bf16.gmra.mrb[0].mxu0 %v1055
          %v2421 = vpop.f32.mrb[0].mxu0
          %v2422 = vadd.f32 %v1272, %v2421
          %v2423 = vpop.f32.mrb[0].mxu0
          %v2424 = vadd.f32 %v1276, %v2423
          %v2425 = vpop.f32.mrb[0].mxu0
          %v2426 = vpop.f32.mrb[0].mxu0
          %2427 = vdwg.mxu0
          %2428 = vmatprep.subr.bf16.mxu0 %v2032
          %2429 = vmatpush1.bf16.msra.mxu0 %v2031
          %2430 = vmatprep.subr.bf16.mxu0 %v2040
          %2431 = vmatpush1.bf16.msra.mxu0 %v2039
          %2432 = vmatprep.subr.bf16.mxu0 %v2048
          %2433 = vmatpush1.bf16.msra.mxu0 %v2047
          %2434 = vmatprep.subr.bf16.mxu0 %v2056
          %2435 = vmatpush1.bf16.msra.mxu0 %v2055
          %2436 = vmatprep.subr.bf16.mxu0 %v2064
          %2437 = vmatpush1.bf16.msra.mxu0 %v2063
          %2438 = vmatprep.subr.bf16.mxu0 %v2072
          %2439 = vmatpush1.bf16.msra.mxu0 %v2071
          %2440 = vmatprep.subr.bf16.mxu0 %v2080
          %2441 = vmatpush1.bf16.msra.mxu0 %v2079
          %2442 = vmatprep.subr.bf16.mxu0 %v2088
          %2443 = vmatpush1.bf16.msra.mxu0 %v2087
          %2444 = vmatprep.subr.bf16.mxu0 %v2096
          %2445 = vmatpush1.bf16.msra.mxu0 %v2095
          %2446 = vmatprep.subr.bf16.mxu0 0
          %2447 = vmatpush1.bf16.msra.mxu0 0
          %2448 = vmatprep.subr.bf16.mxu0 0
          %2449 = vmatpush1.bf16.msra.mxu0 0
          %2450 = vmatprep.subr.bf16.mxu0 0
          %2451 = vmatpush1.bf16.msra.mxu0 0
          %2452 = vmatprep.subr.bf16.mxu0 0
          %2453 = vmatpush1.bf16.msra.mxu0 0
          %2454 = vmatprep.subr.bf16.mxu0 0
          %2455 = vmatpush1.bf16.msra.mxu0 0
          %2456 = vmatprep.subr.bf16.mxu0 0
          %2457 = vmatpush1.bf16.msra.mxu0 0
          %2458 = vmatprep.subr.bf16.mxu0 0
          %2459 = vmatpush1.bf16.msra.mxu0 0
          %2460 = vmatprep.mubr.bf16.mxu0 %v2303
          %2461 = vmatmul.mubr.bf16.gmra.mrb[0].mxu0 %v1057
          %v2462 = vpop.f32.mrb[0].mxu0
          %v2463 = vadd.f32 %v2422, %v2462
          %v2464 = vpop.f32.mrb[0].mxu0
          %v2465 = vadd.f32 %v2424, %v2464
          %v2466 = vpop.f32.mrb[0].mxu0
          %v2467 = vpop.f32.mrb[0].mxu0
          %2468 = vdwg.mxu0
          %2469 = vmatprep.subr.bf16.mxu0 %v1906
          %2470 = vmatpush1.bf16.msra.mxu0 %v1905
          %2471 = vmatprep.subr.bf16.mxu0 %v1914
          %2472 = vmatpush1.bf16.msra.mxu0 %v1913
          %2473 = vmatprep.subr.bf16.mxu0 %v1922
          %2474 = vmatpush1.bf16.msra.mxu0 %v1921
          %2475 = vmatprep.subr.bf16.mxu0 %v1930
          %2476 = vmatpush1.bf16.msra.mxu0 %v1929
          %2477 = vmatprep.subr.bf16.mxu0 %v1938
          %2478 = vmatpush1.bf16.msra.mxu0 %v1937
          %2479 = vmatprep.subr.bf16.mxu0 %v1946
          %2480 = vmatpush1.bf16.msra.mxu0 %v1945
          %2481 = vmatprep.subr.bf16.mxu0 %v1954
          %2482 = vmatpush1.bf16.msra.mxu0 %v1953
          %2483 = vmatprep.subr.bf16.mxu0 %v1962
          %2484 = vmatpush1.bf16.msra.mxu0 %v1961
          %2485 = vmatprep.subr.bf16.mxu0 %v1970
          %2486 = vmatpush1.bf16.msra.mxu0 %v1969
          %2487 = vmatprep.subr.bf16.mxu0 %v1978
          %2488 = vmatpush1.bf16.msra.mxu0 %v1977
          %2489 = vmatprep.subr.bf16.mxu0 %v1986
          %2490 = vmatpush1.bf16.msra.mxu0 %v1985
          %2491 = vmatprep.subr.bf16.mxu0 %v1994
          %2492 = vmatpush1.bf16.msra.mxu0 %v1993
          %2493 = vmatprep.subr.bf16.mxu0 %v2002
          %2494 = vmatpush1.bf16.msra.mxu0 %v2001
          %2495 = vmatprep.subr.bf16.mxu0 %v2010
          %2496 = vmatpush1.bf16.msra.mxu0 %v2009
          %2497 = vmatprep.subr.bf16.mxu0 %v2018
          %2498 = vmatpush1.bf16.msra.mxu0 %v2017
          %2499 = vmatprep.subr.bf16.mxu0 %v2026
          %2500 = vmatpush1.bf16.msra.mxu0 %v2025
          %2501 = vmatprep.mubr.bf16.mxu0 %v1056
          %2502 = vmatmul.mubr.bf16.gmra.mrb[0].mxu0 %v1055
          %v2503 = vpop.f32.mrb[0].mxu0
          %v2504 = vadd.f32 %v1280, %v2503
          %v2505 = vpop.f32.mrb[0].mxu0
          %v2506 = vadd.f32 %v1284, %v2505
          %v2507 = vpop.f32.mrb[0].mxu0
          %v2508 = vpop.f32.mrb[0].mxu0
          %2509 = vdwg.mxu0
          %2510 = vmatprep.subr.bf16.mxu0 %v2034
          %2511 = vmatpush1.bf16.msra.mxu0 %v2033
          %2512 = vmatprep.subr.bf16.mxu0 %v2042
          %2513 = vmatpush1.bf16.msra.mxu0 %v2041
          %2514 = vmatprep.subr.bf16.mxu0 %v2050
          %2515 = vmatpush1.bf16.msra.mxu0 %v2049
          %2516 = vmatprep.subr.bf16.mxu0 %v2058
          %2517 = vmatpush1.bf16.msra.mxu0 %v2057
          %2518 = vmatprep.subr.bf16.mxu0 %v2066
          %2519 = vmatpush1.bf16.msra.mxu0 %v2065
          %2520 = vmatprep.subr.bf16.mxu0 %v2074
          %2521 = vmatpush1.bf16.msra.mxu0 %v2073
          %2522 = vmatprep.subr.bf16.mxu0 %v2082
          %2523 = vmatpush1.bf16.msra.mxu0 %v2081
          %2524 = vmatprep.subr.bf16.mxu0 %v2090
          %2525 = vmatpush1.bf16.msra.mxu0 %v2089
          %2526 = vmatprep.subr.bf16.mxu0 %v2098
          %2527 = vmatpush1.bf16.msra.mxu0 %v2097
          %2528 = vmatprep.subr.bf16.mxu0 0
          %2529 = vmatpush1.bf16.msra.mxu0 0
          %2530 = vmatprep.subr.bf16.mxu0 0
          %2531 = vmatpush1.bf16.msra.mxu0 0
          %2532 = vmatprep.subr.bf16.mxu0 0
          %2533 = vmatpush1.bf16.msra.mxu0 0
          %2534 = vmatprep.subr.bf16.mxu0 0
          %2535 = vmatpush1.bf16.msra.mxu0 0
          %2536 = vmatprep.subr.bf16.mxu0 0
          %2537 = vmatpush1.bf16.msra.mxu0 0
          %2538 = vmatprep.subr.bf16.mxu0 0
          %2539 = vmatpush1.bf16.msra.mxu0 0
          %2540 = vmatprep.subr.bf16.mxu0 0
          %2541 = vmatpush1.bf16.msra.mxu0 0
          %2542 = vmatprep.mubr.bf16.mxu0 %v2303
          %2543 = vmatmul.mubr.bf16.gmra.mrb[0].mxu0 %v1057
          %v2544 = vpop.f32.mrb[0].mxu0
          %v2545 = vadd.f32 %v2504, %v2544
          %v2546 = vpop.f32.mrb[0].mxu0
          %v2547 = vadd.f32 %v2506, %v2546
          %v2548 = vpop.f32.mrb[0].mxu0
          %v2549 = vpop.f32.mrb[0].mxu0
          %2550 = vdwg.mxu0
          %2551 = vmatprep.subr.bf16.mxu0 %v1908
          %2552 = vmatpush1.bf16.msra.mxu0 %v1907
          %2553 = vmatprep.subr.bf16.mxu0 %v1916
          %2554 = vmatpush1.bf16.msra.mxu0 %v1915
          %2555 = vmatprep.subr.bf16.mxu0 %v1924
          %2556 = vmatpush1.bf16.msra.mxu0 %v1923
          %2557 = vmatprep.subr.bf16.mxu0 %v1932
          %2558 = vmatpush1.bf16.msra.mxu0 %v1931
          %2559 = vmatprep.subr.bf16.mxu0 %v1940
          %2560 = vmatpush1.bf16.msra.mxu0 %v1939
          %2561 = vmatprep.subr.bf16.mxu0 %v1948
          %2562 = vmatpush1.bf16.msra.mxu0 %v1947
          %2563 = vmatprep.subr.bf16.mxu0 %v1956
          %2564 = vmatpush1.bf16.msra.mxu0 %v1955
          %2565 = vmatprep.subr.bf16.mxu0 %v1964
          %2566 = vmatpush1.bf16.msra.mxu0 %v1963
          %2567 = vmatprep.subr.bf16.mxu0 %v1972
          %2568 = vmatpush1.bf16.msra.mxu0 %v1971
          %2569 = vmatprep.subr.bf16.mxu0 %v1980
          %2570 = vmatpush1.bf16.msra.mxu0 %v1979
          %2571 = vmatprep.subr.bf16.mxu0 %v1988
          %2572 = vmatpush1.bf16.msra.mxu0 %v1987
          %2573 = vmatprep.subr.bf16.mxu0 %v1996
          %2574 = vmatpush1.bf16.msra.mxu0 %v1995
          %2575 = vmatprep.subr.bf16.mxu0 %v2004
          %2576 = vmatpush1.bf16.msra.mxu0 %v2003
          %2577 = vmatprep.subr.bf16.mxu0 %v2012
          %2578 = vmatpush1.bf16.msra.mxu0 %v2011
          %2579 = vmatprep.subr.bf16.mxu0 %v2020
          %2580 = vmatpush1.bf16.msra.mxu0 %v2019
          %2581 = vmatprep.subr.bf16.mxu0 %v2028
          %2582 = vmatpush1.bf16.msra.mxu0 %v2027
          %2583 = vmatprep.mubr.bf16.mxu0 %v1056
          %2584 = vmatmul.mubr.bf16.gmra.mrb[0].mxu0 %v1055
          %v2585 = vpop.f32.mrb[0].mxu0
          %v2586 = vadd.f32 %v1288, %v2585
          %v2587 = vpop.f32.mrb[0].mxu0
          %v2588 = vadd.f32 %v1292, %v2587
          %v2589 = vpop.f32.mrb[0].mxu0
          %v2590 = vpop.f32.mrb[0].mxu0
          %2591 = vdwg.mxu0
          %2592 = vmatprep.subr.bf16.mxu0 %v2036
          %2593 = vmatpush1.bf16.msra.mxu0 %v2035
          %2594 = vmatprep.subr.bf16.mxu0 %v2044
          %2595 = vmatpush1.bf16.msra.mxu0 %v2043
          %2596 = vmatprep.subr.bf16.mxu0 %v2052
          %2597 = vmatpush1.bf16.msra.mxu0 %v2051
          %2598 = vmatprep.subr.bf16.mxu0 %v2060
          %2599 = vmatpush1.bf16.msra.mxu0 %v2059
          %2600 = vmatprep.subr.bf16.mxu0 %v2068
          %2601 = vmatpush1.bf16.msra.mxu0 %v2067
          %2602 = vmatprep.subr.bf16.mxu0 %v2076
          %2603 = vmatpush1.bf16.msra.mxu0 %v2075
          %2604 = vmatprep.subr.bf16.mxu0 %v2084
          %2605 = vmatpush1.bf16.msra.mxu0 %v2083
          %2606 = vmatprep.subr.bf16.mxu0 %v2092
          %2607 = vmatpush1.bf16.msra.mxu0 %v2091
          %2608 = vmatprep.subr.bf16.mxu0 %v2100
          %2609 = vmatpush1.bf16.msra.mxu0 %v2099
          %2610 = vmatprep.subr.bf16.mxu0 0
          %2611 = vmatpush1.bf16.msra.mxu0 0
          %2612 = vmatprep.subr.bf16.mxu0 0
          %2613 = vmatpush1.bf16.msra.mxu0 0
          %2614 = vmatprep.subr.bf16.mxu0 0
          %2615 = vmatpush1.bf16.msra.mxu0 0
          %2616 = vmatprep.subr.bf16.mxu0 0
          %2617 = vmatpush1.bf16.msra.mxu0 0
          %2618 = vmatprep.subr.bf16.mxu0 0
          %2619 = vmatpush1.bf16.msra.mxu0 0
          %2620 = vmatprep.subr.bf16.mxu0 0
          %2621 = vmatpush1.bf16.msra.mxu0 0
          %2622 = vmatprep.subr.bf16.mxu0 0
          %2623 = vmatpush1.bf16.msra.mxu0 0
          %2624 = vmatprep.mubr.bf16.mxu0 %v2303
          %2625 = vmatmul.mubr.bf16.gmra.mrb[0].mxu0 %v1057
          %v2626 = vpop.f32.mrb[0].mxu0
          %v2627 = vadd.f32 %v2586, %v2626
          %v2628 = vpop.f32.mrb[0].mxu0
          %v2629 = vadd.f32 %v2588, %v2628
          %v2630 = vpop.f32.mrb[0].mxu0
          %v2631 = vpop.f32.mrb[0].mxu0
          %2632 = vdwg.mxu0
          %v2633 = vmax.f32 %v2381, 0.0
          %v2634 = vmax.f32 %v2383, 0.0
          %v2635 = vmax.f32 %v2463, 0.0
          %v2636 = vmax.f32 %v2465, 0.0
          %v2637 = vmax.f32 %v2545, 0.0
          %v2638 = vmax.f32 %v2547, 0.0
          %v2639 = vmax.f32 %v2627, 0.0
          %v2640 = vmax.f32 %v2629, 0.0
          %v2641 = vpack.c.bf16 %v2633, %v2633
          %v2642 = vpack.c.bf16 %v2634, %v2634
          %v2643 = vpack.c.bf16 %v2635, %v2635
          %v2644 = vpack.c.bf16 %v2636, %v2636
          %v2645 = vpack.c.bf16 %v2637, %v2637
          %v2646 = vpack.c.bf16 %v2638, %v2638
          %v2647 = vpack.c.bf16 %v2639, %v2639
          %v2648 = vpack.c.bf16 %v2640, %v2640
          %v2657 = vcombine.low %v2641, %v2642
          %v2658 = vcombine.low %v2643, %v2644
          %v2659 = vcombine.low %v2645, %v2646
          %v2660 = vcombine.low %v2647, %v2648
          %v2662 = vunpack.c.l.s4 1966171168
          %v2663 = vunpack.c.0.s8 %v2662
          %v2664 = vlaneseq
          %v2665 = vshrl.u32 %v2664, 7
          %v2666 = vsub.s32 %v2663, %v2665
          %v2667 = vrot.slane %v2657, %v2666
          %v2669 = vunpack.c.l.s4 1966171168
          %v2670 = vunpack.c.0.s8 %v2669
          %v2671 = vlaneseq
          %v2672 = vshrl.u32 %v2671, 7
          %v2673 = vsub.s32 %v2670, %v2672
          %v2674 = vrot.slane %v2658, %v2673
          %v2676 = vunpack.c.l.s4 1966171168
          %v2677 = vunpack.c.0.s8 %v2676
          %v2678 = vlaneseq
          %v2679 = vshrl.u32 %v2678, 7
          %v2680 = vsub.s32 %v2677, %v2679
          %v2681 = vrot.slane %v2659, %v2680
          %v2683 = vunpack.c.l.s4 1966171168
          %v2684 = vunpack.c.0.s8 %v2683
          %v2685 = vlaneseq
          %v2686 = vshrl.u32 %v2685, 7
          %v2687 = vsub.s32 %v2684, %v2686
          %v2688 = vrot.slane %v2660, %v2687
          %v2689 = vcombine.low %v2667, %v2674
          %v2690 = vcombine.low %v2681, %v2688
          %v2692 = vunpack.c.l.s4 1966171168
          %v2693 = vunpack.c.0.s8 %v2692
          %v2694 = vlaneseq
          %v2695 = vshrl.u32 %v2694, 7
          %v2696 = vsub.s32 %v2693, %v2695
          %v2697 = vrot.slane %v2689, %v2696
          %v2699 = vunpack.c.l.s4 1966171168
          %v2700 = vunpack.c.0.s8 %v2699
          %v2701 = vlaneseq
          %v2702 = vshrl.u32 %v2701, 7
          %v2703 = vsub.s32 %v2700, %v2702
          %v2704 = vrot.slane %v2690, %v2703
          %v2705 = vcombine.low %v2697, %v2704
          %2707 = vst [vmem:[#allocation2] sm:$0xff] %v2705
        $region92: #{tpu_custom_call.1} parent=55 // pred_fallthru
          _
        %v2708 = vld [vmem:[#allocation2] sm:$0xff]
        %v2709 = vld [vmem:[%s412] sm:$0xff]
        %v2710 = vld [vmem:[%s412 + $0x8] sm:$0xff]
        %v2711 = vld [vmem:[%s412 + $0x10] sm:$0xff]
        %v2712 = vld [vmem:[%s412 + $0x18] sm:$0xff]
        %v2713 = vld [vmem:[%s412 + $0x20] sm:$0xff]
        %v2714 = vld [vmem:[%s412 + $0x28] sm:$0xff]
        %v2715 = vld [vmem:[%s412 + $0x30] sm:$0xff]
        %v2716 = vld [vmem:[%s412 + $0x38] sm:$0xff]
        %v2717 = vld [vmem:[%s412 + $0x40] sm:$0xff]
        %v2718 = vld [vmem:[%s412 + $0x48] sm:$0xff]
        %v2719 = vld [vmem:[%s412 + $0x50] sm:$0xff]
        %v2720 = vld [vmem:[%s412 + $0x58] sm:$0xff]
        %v2721 = vld [vmem:[%s412 + $0x60] sm:$0xff]
        %v2722 = vld [vmem:[%s412 + $0x68] sm:$0xff]
        %v2723 = vld [vmem:[%s412 + $0x70] sm:$0xff]
        %v2724 = vld [vmem:[%s412 + $0x78] sm:$0xff]
        %v2725 = vld [vmem:[%s412 + $0x80] sm:$0xff]
        %v2726 = vld [vmem:[%s412 + $0x88] sm:$0xff]
        %v2727 = vld [vmem:[%s412 + $0x90] sm:$0xff]
        %v2728 = vld [vmem:[%s412 + $0x98] sm:$0xff]
        %v2729 = vld [vmem:[%s412 + $0xa0] sm:$0xff]
        %v2730 = vld [vmem:[%s412 + $0xa8] sm:$0xff]
        %v2731 = vld [vmem:[%s412 + $0xb0] sm:$0xff]
        %v2732 = vld [vmem:[%s412 + $0xb8] sm:$0xff]
        %v2733 = vld [vmem:[%s412 + $0xc0] sm:$0xff]
        %v2734 = vld [vmem:[%s412 + $0xc8] sm:$0xff]
        %v2735 = vld [vmem:[%s412 + $0xd0] sm:$0xff]
        %v2736 = vld [vmem:[%s412 + $0xd8] sm:$0xff]
        %v2737 = vld [vmem:[%s412 + $0xe0] sm:$0xff]
        %v2738 = vld [vmem:[%s412 + $0xe8] sm:$0xff]
        %v2739 = vld [vmem:[%s412 + $0xf0] sm:$0xff]
        %v2740 = vld [vmem:[%s412 + $0xf8] sm:$0xff]
        %v2741 = vld [vmem:[%s412 + $0x100] sm:$0xff]
        %v2742 = vld [vmem:[%s412 + $0x108] sm:$0xff]
        %v2743 = vld [vmem:[%s412 + $0x110] sm:$0xff]
        %v2744 = vld [vmem:[%s412 + $0x118] sm:$0xff]
        %v2745 = vld [vmem:[%s412 + $0x120] sm:$0xff]
        %v2746 = vld [vmem:[%s412 + $0x128] sm:$0xff]
        %v2747 = vld [vmem:[%s412 + $0x130] sm:$0xff]
        %v2748 = vld [vmem:[%s412 + $0x138] sm:$0xff]
        %v2749 = vld [vmem:[%s412 + $0x140] sm:$0xff]
        %v2750 = vld [vmem:[%s412 + $0x148] sm:$0xff]
        %v2751 = vld [vmem:[%s412 + $0x150] sm:$0xff]
        %v2752 = vld [vmem:[%s412 + $0x158] sm:$0xff]
        %v2753 = vld [vmem:[%s412 + $0x160] sm:$0xff]
        %v2754 = vld [vmem:[%s412 + $0x168] sm:$0xff]
        %v2755 = vld [vmem:[%s412 + $0x170] sm:$0xff]
        %v2756 = vld [vmem:[%s412 + $0x178] sm:$0xff]
        %v2757 = vld [vmem:[%s412 + $0x180] sm:$0xff]
        %v2758 = vld [vmem:[%s412 + $0x188] sm:$0xff]
        %v2759 = vld [vmem:[%s412 + $0x190] sm:$0xff]
        %v2760 = vld [vmem:[%s412 + $0x198] sm:$0xff]
        %v2761 = vld [vmem:[%s412 + $0x1a0] sm:$0xff]
        %v2762 = vld [vmem:[%s412 + $0x1a8] sm:$0xff]
        %v2763 = vld [vmem:[%s412 + $0x1b0] sm:$0xff]
        %v2764 = vld [vmem:[%s412 + $0x1b8] sm:$0xff]
        %v2765 = vld [vmem:[%s412 + $0x1c0] sm:$0xff]
        %v2766 = vld [vmem:[%s412 + $0x1c8] sm:$0xff]
        %v2767 = vld [vmem:[%s412 + $0x1d0] sm:$0xff]
        %v2768 = vld [vmem:[%s412 + $0x1d8] sm:$0xff]
        %v2769 = vld [vmem:[%s412 + $0x1e0] sm:$0xff]
        %v2770 = vld [vmem:[%s412 + $0x1e8] sm:$0xff]
        %v2771 = vld [vmem:[%s412 + $0x1f0] sm:$0xff]
        %v2772 = vld [vmem:[%s412 + $0x1f8] sm:$0xff]
        %v2773 = vld [vmem:[%s412 + $0x200] sm:$0xff]
        %v2774 = vld [vmem:[%s412 + $0x208] sm:$0xff]
        %v2775 = vld [vmem:[%s412 + $0x210] sm:$0xff]
        %v2776 = vld [vmem:[%s412 + $0x218] sm:$0xff]
        %v2777 = vld [vmem:[%s412 + $0x220] sm:$0xff]
        %v2778 = vld [vmem:[%s412 + $0x228] sm:$0xff]
        %v2779 = vld [vmem:[%s412 + $0x230] sm:$0xff]
        %v2780 = vld [vmem:[%s412 + $0x238] sm:$0xff]
        %v2781 = vld [vmem:[%s412 + $0x240] sm:$0xff]
        %v2782 = vld [vmem:[%s412 + $0x248] sm:$0xff]
        %v2783 = vld [vmem:[%s412 + $0x250] sm:$0xff]
        %v2784 = vld [vmem:[%s412 + $0x258] sm:$0xff]
        %v2785 = vld [vmem:[%s412 + $0x260] sm:$0xff]
        %v2786 = vld [vmem:[%s412 + $0x268] sm:$0xff]
        %v2787 = vld [vmem:[%s412 + $0x270] sm:$0xff]
        %v2788 = vld [vmem:[%s412 + $0x278] sm:$0xff]
        %v2789 = vld [vmem:[%s412 + $0x280] sm:$0xff]
        %v2790 = vld [vmem:[%s412 + $0x288] sm:$0xff]
        %v2791 = vld [vmem:[%s412 + $0x290] sm:$0xff]
        %v2792 = vld [vmem:[%s412 + $0x298] sm:$0xff]
        %v2793 = vld [vmem:[%s412 + $0x2a0] sm:$0xff]
        %v2794 = vld [vmem:[%s412 + $0x2a8] sm:$0xff]
        %v2795 = vld [vmem:[%s412 + $0x2b0] sm:$0xff]
        %v2796 = vld [vmem:[%s412 + $0x2b8] sm:$0xff]
        %v2797 = vld [vmem:[%s412 + $0x2c0] sm:$0xff]
        %v2798 = vld [vmem:[%s412 + $0x2c8] sm:$0xff]
        %v2799 = vld [vmem:[%s412 + $0x2d0] sm:$0xff]
        %v2800 = vld [vmem:[%s412 + $0x2d8] sm:$0xff]
        %v2801 = vld [vmem:[%s412 + $0x2e0] sm:$0xff]
        %v2802 = vld [vmem:[%s412 + $0x2e8] sm:$0xff]
        %v2803 = vld [vmem:[%s412 + $0x2f0] sm:$0xff]
        %v2804 = vld [vmem:[%s412 + $0x2f8] sm:$0xff]
        %v2805 = vld [vmem:[%s412 + $0x300] sm:$0xff]
        %v2806 = vld [vmem:[%s412 + $0x308] sm:$0xff]
        %v2807 = vld [vmem:[%s412 + $0x310] sm:$0xff]
        %v2808 = vld [vmem:[%s412 + $0x318] sm:$0xff]
        %v2809 = vld [vmem:[%s412 + $0x320] sm:$0xff]
        %v2810 = vld [vmem:[%s412 + $0x328] sm:$0xff]
        %v2811 = vld [vmem:[%s412 + $0x330] sm:$0xff]
        %v2812 = vld [vmem:[%s412 + $0x338] sm:$0xff]
        %v2813 = vld [vmem:[%s412 + $0x340] sm:$0xff]
        %v2814 = vld [vmem:[%s412 + $0x348] sm:$0xff]
        %v2815 = vld [vmem:[%s412 + $0x350] sm:$0xff]
        %v2816 = vld [vmem:[%s412 + $0x358] sm:$0xff]
        %v2817 = vld [vmem:[%s412 + $0x360] sm:$0xff]
        %v2818 = vld [vmem:[%s412 + $0x368] sm:$0xff]
        %v2819 = vld [vmem:[%s412 + $0x370] sm:$0xff]
        %v2820 = vld [vmem:[%s412 + $0x378] sm:$0xff]
        %v2821 = vld [vmem:[%s412 + $0x380] sm:$0xff]
        %v2822 = vld [vmem:[%s412 + $0x388] sm:$0xff]
        %v2823 = vld [vmem:[%s412 + $0x390] sm:$0xff]
        %v2824 = vld [vmem:[%s412 + $0x398] sm:$0xff]
        %v2825 = vld [vmem:[%s412 + $0x3a0] sm:$0xff]
        %v2826 = vld [vmem:[%s412 + $0x3a8] sm:$0xff]
        %v2827 = vld [vmem:[%s412 + $0x3b0] sm:$0xff]
        %v2828 = vld [vmem:[%s412 + $0x3b8] sm:$0xff]
        %v2829 = vld [vmem:[%s412 + $0x3c0] sm:$0xff]
        %v2830 = vld [vmem:[%s412 + $0x3c8] sm:$0xff]
        %v2831 = vld [vmem:[%s412 + $0x3d0] sm:$0xff]
        %v2832 = vld [vmem:[%s412 + $0x3d8] sm:$0xff]
        %v2833 = vld [vmem:[%s412 + $0x3e0] sm:$0xff]
        %v2834 = vld [vmem:[%s412 + $0x3e8] sm:$0xff]
        %v2835 = vld [vmem:[%s412 + $0x3f0] sm:$0xff]
        %v2836 = vld [vmem:[%s412 + $0x3f8] sm:$0xff]
        %v2837 = vld [vmem:[%s421] sm:$0x3]
        %v2839 = vlaneseq
        %v2840 = vshrl.u32 %v2839, 7
        %v2841 = vsub.s32 0, %v2840
        %v2842 = vrot.slane %v2837, %v2841
        %v2843 = vlaneseq
        %v2844 = vshrl.u32 %v2843, 7
        %v2845 = vsub.s32 1, %v2844
        %v2846 = vrot.slane %v2837, %v2845
        %v2850 = vcombine.high %v2708, %v2708
        %v2852 = vunpack.c.l.s4 1966171168
        %v2853 = vunpack.c.0.s8 %v2852
        %v2854 = vlaneseq
        %v2855 = vshrl.u32 %v2854, 7
        %v2856 = vsub.s32 %v2853, %v2855
        %v2857 = vrot.slane %v2708, %v2856
        %v2859 = vunpack.c.l.s4 1966171168
        %v2860 = vunpack.c.0.s8 %v2859
        %v2861 = vlaneseq
        %v2862 = vshrl.u32 %v2861, 7
        %v2863 = vsub.s32 %v2860, %v2862
        %v2864 = vrot.slane %v2850, %v2863
        %v2865 = vcombine.high %v2857, %v2857
        %v2866 = vcombine.high %v2864, %v2864
        %v2868 = vunpack.c.l.s4 1966171168
        %v2869 = vunpack.c.0.s8 %v2868
        %v2870 = vlaneseq
        %v2871 = vshrl.u32 %v2870, 7
        %v2872 = vsub.s32 %v2869, %v2871
        %v2873 = vrot.slane %v2857, %v2872
        %v2875 = vunpack.c.l.s4 1966171168
        %v2876 = vunpack.c.0.s8 %v2875
        %v2877 = vlaneseq
        %v2878 = vshrl.u32 %v2877, 7
        %v2879 = vsub.s32 %v2876, %v2878
        %v2880 = vrot.slane %v2864, %v2879
        %v2882 = vunpack.c.l.s4 1966171168
        %v2883 = vunpack.c.0.s8 %v2882
        %v2884 = vlaneseq
        %v2885 = vshrl.u32 %v2884, 7
        %v2886 = vsub.s32 %v2883, %v2885
        %v2887 = vrot.slane %v2865, %v2886
        %v2889 = vunpack.c.l.s4 1966171168
        %v2890 = vunpack.c.0.s8 %v2889
        %v2891 = vlaneseq
        %v2892 = vshrl.u32 %v2891, 7
        %v2893 = vsub.s32 %v2890, %v2892
        %v2894 = vrot.slane %v2866, %v2893
        %v2895 = vcombine.high %v2873, %v2873
        %v2896 = vcombine.high %v2880, %v2880
        %v2897 = vcombine.high %v2887, %v2887
        %v2898 = vcombine.high %v2894, %v2894
        %v3035 = vunpack.c.l.b16 %v2709
        %v3036 = vunpack.c.h.b16 %v2709
        %v3037 = vunpack.c.l.b16 %v2710
        %v3038 = vunpack.c.h.b16 %v2710
        %v3039 = vunpack.c.l.b16 %v2711
        %v3040 = vunpack.c.h.b16 %v2711
        %v3041 = vunpack.c.l.b16 %v2712
        %v3042 = vunpack.c.h.b16 %v2712
        %v3043 = vunpack.c.l.b16 %v2713
        %v3044 = vunpack.c.h.b16 %v2713
        %v3045 = vunpack.c.l.b16 %v2714
        %v3046 = vunpack.c.h.b16 %v2714
        %v3047 = vunpack.c.l.b16 %v2715
        %v3048 = vunpack.c.h.b16 %v2715
        %v3049 = vunpack.c.l.b16 %v2716
        %v3050 = vunpack.c.h.b16 %v2716
        %v3051 = vunpack.c.l.b16 %v2717
        %v3052 = vunpack.c.h.b16 %v2717
        %v3053 = vunpack.c.l.b16 %v2718
        %v3054 = vunpack.c.h.b16 %v2718
        %v3055 = vunpack.c.l.b16 %v2719
        %v3056 = vunpack.c.h.b16 %v2719
        %v3057 = vunpack.c.l.b16 %v2720
        %v3058 = vunpack.c.h.b16 %v2720
        %v3059 = vunpack.c.l.b16 %v2721
        %v3060 = vunpack.c.h.b16 %v2721
        %v3061 = vunpack.c.l.b16 %v2722
        %v3062 = vunpack.c.h.b16 %v2722
        %v3063 = vunpack.c.l.b16 %v2723
        %v3064 = vunpack.c.h.b16 %v2723
        %v3065 = vunpack.c.l.b16 %v2724
        %v3066 = vunpack.c.h.b16 %v2724
        %v3067 = vunpack.c.l.b16 %v2725
        %v3068 = vunpack.c.h.b16 %v2725
        %v3069 = vunpack.c.l.b16 %v2726
        %v3070 = vunpack.c.h.b16 %v2726
        %v3071 = vunpack.c.l.b16 %v2727
        %v3072 = vunpack.c.h.b16 %v2727
        %v3073 = vunpack.c.l.b16 %v2728
        %v3074 = vunpack.c.h.b16 %v2728
        %v3075 = vunpack.c.l.b16 %v2729
        %v3076 = vunpack.c.h.b16 %v2729
        %v3077 = vunpack.c.l.b16 %v2730
        %v3078 = vunpack.c.h.b16 %v2730
        %v3079 = vunpack.c.l.b16 %v2731
        %v3080 = vunpack.c.h.b16 %v2731
        %v3081 = vunpack.c.l.b16 %v2732
        %v3082 = vunpack.c.h.b16 %v2732
        %v3083 = vunpack.c.l.b16 %v2733
        %v3084 = vunpack.c.h.b16 %v2733
        %v3085 = vunpack.c.l.b16 %v2734
        %v3086 = vunpack.c.h.b16 %v2734
        %v3087 = vunpack.c.l.b16 %v2735
        %v3088 = vunpack.c.h.b16 %v2735
        %v3089 = vunpack.c.l.b16 %v2736
        %v3090 = vunpack.c.h.b16 %v2736
        %v3091 = vunpack.c.l.b16 %v2737
        %v3092 = vunpack.c.h.b16 %v2737
        %v3093 = vunpack.c.l.b16 %v2738
        %v3094 = vunpack.c.h.b16 %v2738
        %v3095 = vunpack.c.l.b16 %v2739
        %v3096 = vunpack.c.h.b16 %v2739
        %v3097 = vunpack.c.l.b16 %v2740
        %v3098 = vunpack.c.h.b16 %v2740
        %v3099 = vunpack.c.l.b16 %v2741
        %v3100 = vunpack.c.h.b16 %v2741
        %v3101 = vunpack.c.l.b16 %v2742
        %v3102 = vunpack.c.h.b16 %v2742
        %v3103 = vunpack.c.l.b16 %v2743
        %v3104 = vunpack.c.h.b16 %v2743
        %v3105 = vunpack.c.l.b16 %v2744
        %v3106 = vunpack.c.h.b16 %v2744
        %v3107 = vunpack.c.l.b16 %v2745
        %v3108 = vunpack.c.h.b16 %v2745
        %v3109 = vunpack.c.l.b16 %v2746
        %v3110 = vunpack.c.h.b16 %v2746
        %v3111 = vunpack.c.l.b16 %v2747
        %v3112 = vunpack.c.h.b16 %v2747
        %v3113 = vunpack.c.l.b16 %v2748
        %v3114 = vunpack.c.h.b16 %v2748
        %v3115 = vunpack.c.l.b16 %v2749
        %v3116 = vunpack.c.h.b16 %v2749
        %v3117 = vunpack.c.l.b16 %v2750
        %v3118 = vunpack.c.h.b16 %v2750
        %v3119 = vunpack.c.l.b16 %v2751
        %v3120 = vunpack.c.h.b16 %v2751
        %v3121 = vunpack.c.l.b16 %v2752
        %v3122 = vunpack.c.h.b16 %v2752
        %v3123 = vunpack.c.l.b16 %v2753
        %v3124 = vunpack.c.h.b16 %v2753
        %v3125 = vunpack.c.l.b16 %v2754
        %v3126 = vunpack.c.h.b16 %v2754
        %v3127 = vunpack.c.l.b16 %v2755
        %v3128 = vunpack.c.h.b16 %v2755
        %v3129 = vunpack.c.l.b16 %v2756
        %v3130 = vunpack.c.h.b16 %v2756
        %v3131 = vunpack.c.l.b16 %v2757
        %v3132 = vunpack.c.h.b16 %v2757
        %v3133 = vunpack.c.l.b16 %v2758
        %v3134 = vunpack.c.h.b16 %v2758
        %v3135 = vunpack.c.l.b16 %v2759
        %v3136 = vunpack.c.h.b16 %v2759
        %v3137 = vunpack.c.l.b16 %v2760
        %v3138 = vunpack.c.h.b16 %v2760
        %v3139 = vunpack.c.l.b16 %v2761
        %v3140 = vunpack.c.h.b16 %v2761
        %v3141 = vunpack.c.l.b16 %v2762
        %v3142 = vunpack.c.h.b16 %v2762
        %v3143 = vunpack.c.l.b16 %v2763
        %v3144 = vunpack.c.h.b16 %v2763
        %v3145 = vunpack.c.l.b16 %v2764
        %v3146 = vunpack.c.h.b16 %v2764
        %v3147 = vunpack.c.l.b16 %v2765
        %v3148 = vunpack.c.h.b16 %v2765
        %v3149 = vunpack.c.l.b16 %v2766
        %v3150 = vunpack.c.h.b16 %v2766
        %v3151 = vunpack.c.l.b16 %v2767
        %v3152 = vunpack.c.h.b16 %v2767
        %v3153 = vunpack.c.l.b16 %v2768
        %v3154 = vunpack.c.h.b16 %v2768
        %v3155 = vunpack.c.l.b16 %v2769
        %v3156 = vunpack.c.h.b16 %v2769
        %v3157 = vunpack.c.l.b16 %v2770
        %v3158 = vunpack.c.h.b16 %v2770
        %v3159 = vunpack.c.l.b16 %v2771
        %v3160 = vunpack.c.h.b16 %v2771
        %v3161 = vunpack.c.l.b16 %v2772
        %v3162 = vunpack.c.h.b16 %v2772
        %v3163 = vunpack.c.l.b16 %v2773
        %v3164 = vunpack.c.h.b16 %v2773
        %v3165 = vunpack.c.l.b16 %v2774
        %v3166 = vunpack.c.h.b16 %v2774
        %v3167 = vunpack.c.l.b16 %v2775
        %v3168 = vunpack.c.h.b16 %v2775
        %v3169 = vunpack.c.l.b16 %v2776
        %v3170 = vunpack.c.h.b16 %v2776
        %v3171 = vunpack.c.l.b16 %v2777
        %v3172 = vunpack.c.h.b16 %v2777
        %v3173 = vunpack.c.l.b16 %v2778
        %v3174 = vunpack.c.h.b16 %v2778
        %v3175 = vunpack.c.l.b16 %v2779
        %v3176 = vunpack.c.h.b16 %v2779
        %v3177 = vunpack.c.l.b16 %v2780
        %v3178 = vunpack.c.h.b16 %v2780
        %v3179 = vunpack.c.l.b16 %v2781
        %v3180 = vunpack.c.h.b16 %v2781
        %v3181 = vunpack.c.l.b16 %v2782
        %v3182 = vunpack.c.h.b16 %v2782
        %v3183 = vunpack.c.l.b16 %v2783
        %v3184 = vunpack.c.h.b16 %v2783
        %v3185 = vunpack.c.l.b16 %v2784
        %v3186 = vunpack.c.h.b16 %v2784
        %v3187 = vunpack.c.l.b16 %v2785
        %v3188 = vunpack.c.h.b16 %v2785
        %v3189 = vunpack.c.l.b16 %v2786
        %v3190 = vunpack.c.h.b16 %v2786
        %v3191 = vunpack.c.l.b16 %v2787
        %v3192 = vunpack.c.h.b16 %v2787
        %v3193 = vunpack.c.l.b16 %v2788
        %v3194 = vunpack.c.h.b16 %v2788
        %v3195 = vunpack.c.l.b16 %v2789
        %v3196 = vunpack.c.h.b16 %v2789
        %v3197 = vunpack.c.l.b16 %v2790
        %v3198 = vunpack.c.h.b16 %v2790
        %v3199 = vunpack.c.l.b16 %v2791
        %v3200 = vunpack.c.h.b16 %v2791
        %v3201 = vunpack.c.l.b16 %v2792
        %v3202 = vunpack.c.h.b16 %v2792
        %v3203 = vunpack.c.l.b16 %v2793
        %v3204 = vunpack.c.h.b16 %v2793
        %v3205 = vunpack.c.l.b16 %v2794
        %v3206 = vunpack.c.h.b16 %v2794
        %v3207 = vunpack.c.l.b16 %v2795
        %v3208 = vunpack.c.h.b16 %v2795
        %v3209 = vunpack.c.l.b16 %v2796
        %v3210 = vunpack.c.h.b16 %v2796
        %v3211 = vunpack.c.l.b16 %v2797
        %v3212 = vunpack.c.h.b16 %v2797
        %v3213 = vunpack.c.l.b16 %v2798
        %v3214 = vunpack.c.h.b16 %v2798
        %v3215 = vunpack.c.l.b16 %v2799
        %v3216 = vunpack.c.h.b16 %v2799
        %v3217 = vunpack.c.l.b16 %v2800
        %v3218 = vunpack.c.h.b16 %v2800
        %v3219 = vunpack.c.l.b16 %v2801
        %v3220 = vunpack.c.h.b16 %v2801
        %v3221 = vunpack.c.l.b16 %v2802
        %v3222 = vunpack.c.h.b16 %v2802
        %v3223 = vunpack.c.l.b16 %v2803
        %v3224 = vunpack.c.h.b16 %v2803
        %v3225 = vunpack.c.l.b16 %v2804
        %v3226 = vunpack.c.h.b16 %v2804
        %v3227 = vunpack.c.l.b16 %v2805
        %v3228 = vunpack.c.h.b16 %v2805
        %v3229 = vunpack.c.l.b16 %v2806
        %v3230 = vunpack.c.h.b16 %v2806
        %v3231 = vunpack.c.l.b16 %v2807
        %v3232 = vunpack.c.h.b16 %v2807
        %v3233 = vunpack.c.l.b16 %v2808
        %v3234 = vunpack.c.h.b16 %v2808
        %v3235 = vunpack.c.l.b16 %v2809
        %v3236 = vunpack.c.h.b16 %v2809
        %v3237 = vunpack.c.l.b16 %v2810
        %v3238 = vunpack.c.h.b16 %v2810
        %v3239 = vunpack.c.l.b16 %v2811
        %v3240 = vunpack.c.h.b16 %v2811
        %v3241 = vunpack.c.l.b16 %v2812
        %v3242 = vunpack.c.h.b16 %v2812
        %v3243 = vunpack.c.l.b16 %v2813
        %v3244 = vunpack.c.h.b16 %v2813
        %v3245 = vunpack.c.l.b16 %v2814
        %v3246 = vunpack.c.h.b16 %v2814
        %v3247 = vunpack.c.l.b16 %v2815
        %v3248 = vunpack.c.h.b16 %v2815
        %v3249 = vunpack.c.l.b16 %v2816
        %v3250 = vunpack.c.h.b16 %v2816
        %v3251 = vunpack.c.l.b16 %v2817
        %v3252 = vunpack.c.h.b16 %v2817
        %v3253 = vunpack.c.l.b16 %v2818
        %v3254 = vunpack.c.h.b16 %v2818
        %v3255 = vunpack.c.l.b16 %v2819
        %v3256 = vunpack.c.h.b16 %v2819
        %v3257 = vunpack.c.l.b16 %v2820
        %v3258 = vunpack.c.h.b16 %v2820
        %v3259 = vunpack.c.l.b16 %v2821
        %v3260 = vunpack.c.h.b16 %v2821
        %v3261 = vunpack.c.l.b16 %v2822
        %v3262 = vunpack.c.h.b16 %v2822
        %v3263 = vunpack.c.l.b16 %v2823
        %v3264 = vunpack.c.h.b16 %v2823
        %v3265 = vunpack.c.l.b16 %v2824
        %v3266 = vunpack.c.h.b16 %v2824
        %v3267 = vunpack.c.l.b16 %v2825
        %v3268 = vunpack.c.h.b16 %v2825
        %v3269 = vunpack.c.l.b16 %v2826
        %v3270 = vunpack.c.h.b16 %v2826
        %v3271 = vunpack.c.l.b16 %v2827
        %v3272 = vunpack.c.h.b16 %v2827
        %v3273 = vunpack.c.l.b16 %v2828
        %v3274 = vunpack.c.h.b16 %v2828
        %v3275 = vunpack.c.l.b16 %v2829
        %v3276 = vunpack.c.h.b16 %v2829
        %v3277 = vunpack.c.l.b16 %v2830
        %v3278 = vunpack.c.h.b16 %v2830
        %v3279 = vunpack.c.l.b16 %v2831
        %v3280 = vunpack.c.h.b16 %v2831
        %v3281 = vunpack.c.l.b16 %v2832
        %v3282 = vunpack.c.h.b16 %v2832
        %v3283 = vunpack.c.l.b16 %v2833
        %v3284 = vunpack.c.h.b16 %v2833
        %v3285 = vunpack.c.l.b16 %v2834
        %v3286 = vunpack.c.h.b16 %v2834
        %v3287 = vunpack.c.l.b16 %v2835
        %v3288 = vunpack.c.h.b16 %v2835
        %v3289 = vunpack.c.l.b16 %v2836
        %v3290 = vunpack.c.h.b16 %v2836
        %v3291 = vpack.c.b16 %v3037, %v3035
        %v3292 = vpack.c.b16 %v3038, %v3036
        %v3293 = vpack.c.b16 %v3041, %v3039
        %v3294 = vpack.c.b16 %v3042, %v3040
        %v3295 = vpack.c.b16 %v3045, %v3043
        %v3296 = vpack.c.b16 %v3046, %v3044
        %v3297 = vpack.c.b16 %v3049, %v3047
        %v3298 = vpack.c.b16 %v3050, %v3048
        %v3299 = vpack.c.b16 %v3053, %v3051
        %v3300 = vpack.c.b16 %v3054, %v3052
        %v3301 = vpack.c.b16 %v3057, %v3055
        %v3302 = vpack.c.b16 %v3058, %v3056
        %v3303 = vpack.c.b16 %v3061, %v3059
        %v3304 = vpack.c.b16 %v3062, %v3060
        %v3305 = vpack.c.b16 %v3065, %v3063
        %v3306 = vpack.c.b16 %v3066, %v3064
        %v3307 = vpack.c.b16 %v3069, %v3067
        %v3308 = vpack.c.b16 %v3070, %v3068
        %v3309 = vpack.c.b16 %v3073, %v3071
        %v3310 = vpack.c.b16 %v3074, %v3072
        %v3311 = vpack.c.b16 %v3077, %v3075
        %v3312 = vpack.c.b16 %v3078, %v3076
        %v3313 = vpack.c.b16 %v3081, %v3079
        %v3314 = vpack.c.b16 %v3082, %v3080
        %v3315 = vpack.c.b16 %v3085, %v3083
        %v3316 = vpack.c.b16 %v3086, %v3084
        %v3317 = vpack.c.b16 %v3089, %v3087
        %v3318 = vpack.c.b16 %v3090, %v3088
        %v3319 = vpack.c.b16 %v3093, %v3091
        %v3320 = vpack.c.b16 %v3094, %v3092
        %v3321 = vpack.c.b16 %v3097, %v3095
        %v3322 = vpack.c.b16 %v3098, %v3096
        %v3323 = vpack.c.b16 %v3101, %v3099
        %v3324 = vpack.c.b16 %v3102, %v3100
        %v3325 = vpack.c.b16 %v3105, %v3103
        %v3326 = vpack.c.b16 %v3106, %v3104
        %v3327 = vpack.c.b16 %v3109, %v3107
        %v3328 = vpack.c.b16 %v3110, %v3108
        %v3329 = vpack.c.b16 %v3113, %v3111
        %v3330 = vpack.c.b16 %v3114, %v3112
        %v3331 = vpack.c.b16 %v3117, %v3115
        %v3332 = vpack.c.b16 %v3118, %v3116
        %v3333 = vpack.c.b16 %v3121, %v3119
        %v3334 = vpack.c.b16 %v3122, %v3120
        %v3335 = vpack.c.b16 %v3125, %v3123
        %v3336 = vpack.c.b16 %v3126, %v3124
        %v3337 = vpack.c.b16 %v3129, %v3127
        %v3338 = vpack.c.b16 %v3130, %v3128
        %v3339 = vpack.c.b16 %v3133, %v3131
        %v3340 = vpack.c.b16 %v3134, %v3132
        %v3341 = vpack.c.b16 %v3137, %v3135
        %v3342 = vpack.c.b16 %v3138, %v3136
        %v3343 = vpack.c.b16 %v3141, %v3139
        %v3344 = vpack.c.b16 %v3142, %v3140
        %v3345 = vpack.c.b16 %v3145, %v3143
        %v3346 = vpack.c.b16 %v3146, %v3144
        %v3347 = vpack.c.b16 %v3149, %v3147
        %v3348 = vpack.c.b16 %v3150, %v3148
        %v3349 = vpack.c.b16 %v3153, %v3151
        %v3350 = vpack.c.b16 %v3154, %v3152
        %v3351 = vpack.c.b16 %v3157, %v3155
        %v3352 = vpack.c.b16 %v3158, %v3156
        %v3353 = vpack.c.b16 %v3161, %v3159
        %v3354 = vpack.c.b16 %v3162, %v3160
        %v3355 = vpack.c.b16 %v3165, %v3163
        %v3356 = vpack.c.b16 %v3166, %v3164
        %v3357 = vpack.c.b16 %v3169, %v3167
        %v3358 = vpack.c.b16 %v3170, %v3168
        %v3359 = vpack.c.b16 %v3173, %v3171
        %v3360 = vpack.c.b16 %v3174, %v3172
        %v3361 = vpack.c.b16 %v3177, %v3175
        %v3362 = vpack.c.b16 %v3178, %v3176
        %v3363 = vpack.c.b16 %v3181, %v3179
        %v3364 = vpack.c.b16 %v3182, %v3180
        %v3365 = vpack.c.b16 %v3185, %v3183
        %v3366 = vpack.c.b16 %v3186, %v3184
        %v3367 = vpack.c.b16 %v3189, %v3187
        %v3368 = vpack.c.b16 %v3190, %v3188
        %v3369 = vpack.c.b16 %v3193, %v3191
        %v3370 = vpack.c.b16 %v3194, %v3192
        %v3371 = vpack.c.b16 %v3197, %v3195
        %v3372 = vpack.c.b16 %v3198, %v3196
        %v3373 = vpack.c.b16 %v3201, %v3199
        %v3374 = vpack.c.b16 %v3202, %v3200
        %v3375 = vpack.c.b16 %v3205, %v3203
        %v3376 = vpack.c.b16 %v3206, %v3204
        %v3377 = vpack.c.b16 %v3209, %v3207
        %v3378 = vpack.c.b16 %v3210, %v3208
        %v3379 = vpack.c.b16 %v3213, %v3211
        %v3380 = vpack.c.b16 %v3214, %v3212
        %v3381 = vpack.c.b16 %v3217, %v3215
        %v3382 = vpack.c.b16 %v3218, %v3216
        %v3383 = vpack.c.b16 %v3221, %v3219
        %v3384 = vpack.c.b16 %v3222, %v3220
        %v3385 = vpack.c.b16 %v3225, %v3223
        %v3386 = vpack.c.b16 %v3226, %v3224
        %v3387 = vpack.c.b16 %v3229, %v3227
        %v3388 = vpack.c.b16 %v3230, %v3228
        %v3389 = vpack.c.b16 %v3233, %v3231
        %v3390 = vpack.c.b16 %v3234, %v3232
        %v3391 = vpack.c.b16 %v3237, %v3235
        %v3392 = vpack.c.b16 %v3238, %v3236
        %v3393 = vpack.c.b16 %v3241, %v3239
        %v3394 = vpack.c.b16 %v3242, %v3240
        %v3395 = vpack.c.b16 %v3245, %v3243
        %v3396 = vpack.c.b16 %v3246, %v3244
        %v3397 = vpack.c.b16 %v3249, %v3247
        %v3398 = vpack.c.b16 %v3250, %v3248
        %v3399 = vpack.c.b16 %v3253, %v3251
        %v3400 = vpack.c.b16 %v3254, %v3252
        %v3401 = vpack.c.b16 %v3257, %v3255
        %v3402 = vpack.c.b16 %v3258, %v3256
        %v3403 = vpack.c.b16 %v3261, %v3259
        %v3404 = vpack.c.b16 %v3262, %v3260
        %v3405 = vpack.c.b16 %v3265, %v3263
        %v3406 = vpack.c.b16 %v3266, %v3264
        %v3407 = vpack.c.b16 %v3269, %v3267
        %v3408 = vpack.c.b16 %v3270, %v3268
        %v3409 = vpack.c.b16 %v3273, %v3271
        %v3410 = vpack.c.b16 %v3274, %v3272
        %v3411 = vpack.c.b16 %v3277, %v3275
        %v3412 = vpack.c.b16 %v3278, %v3276
        %v3413 = vpack.c.b16 %v3281, %v3279
        %v3414 = vpack.c.b16 %v3282, %v3280
        %v3415 = vpack.c.b16 %v3285, %v3283
        %v3416 = vpack.c.b16 %v3286, %v3284
        %v3417 = vpack.c.b16 %v3289, %v3287
        %v3418 = vpack.c.b16 %v3290, %v3288
        %3547 = vmatprep.subr.bf16.mxu0 %v3292
        %3548 = vmatpush1.bf16.msra.mxu0 %v3291
        %3549 = vmatprep.subr.bf16.mxu0 %v3294
        %3550 = vmatpush1.bf16.msra.mxu0 %v3293
        %3551 = vmatprep.subr.bf16.mxu0 %v3296
        %3552 = vmatpush1.bf16.msra.mxu0 %v3295
        %3553 = vmatprep.subr.bf16.mxu0 %v3298
        %3554 = vmatpush1.bf16.msra.mxu0 %v3297
        %3555 = vmatprep.subr.bf16.mxu0 %v3300
        %3556 = vmatpush1.bf16.msra.mxu0 %v3299
        %3557 = vmatprep.subr.bf16.mxu0 %v3302
        %3558 = vmatpush1.bf16.msra.mxu0 %v3301
        %3559 = vmatprep.subr.bf16.mxu0 %v3304
        %3560 = vmatpush1.bf16.msra.mxu0 %v3303
        %3561 = vmatprep.subr.bf16.mxu0 %v3306
        %3562 = vmatpush1.bf16.msra.mxu0 %v3305
        %3563 = vmatprep.subr.bf16.mxu0 %v3308
        %3564 = vmatpush1.bf16.msra.mxu0 %v3307
        %3565 = vmatprep.subr.bf16.mxu0 %v3310
        %3566 = vmatpush1.bf16.msra.mxu0 %v3309
        %3567 = vmatprep.subr.bf16.mxu0 %v3312
        %3568 = vmatpush1.bf16.msra.mxu0 %v3311
        %3569 = vmatprep.subr.bf16.mxu0 %v3314
        %3570 = vmatpush1.bf16.msra.mxu0 %v3313
        %3571 = vmatprep.subr.bf16.mxu0 %v3316
        %3572 = vmatpush1.bf16.msra.mxu0 %v3315
        %3573 = vmatprep.subr.bf16.mxu0 %v3318
        %3574 = vmatpush1.bf16.msra.mxu0 %v3317
        %3575 = vmatprep.subr.bf16.mxu0 %v3320
        %3576 = vmatpush1.bf16.msra.mxu0 %v3319
        %3577 = vmatprep.subr.bf16.mxu0 %v3322
        %3578 = vmatpush1.bf16.msra.mxu0 %v3321
        %3579 = vmatprep.mubr.bf16.mxu0 %v2887
        %3580 = vmatmul.mubr.bf16.gmra.mrb[0].mxu0 %v2873
        %v3581 = vpop.f32.mrb[0].mxu0
        %v3582 = vadd.f32 %v2842, %v3581
        %v3583 = vpop.f32.mrb[0].mxu0
        %v3584 = vadd.f32 %v2846, %v3583
        %v3585 = vpop.f32.mrb[0].mxu0
        %v3586 = vpop.f32.mrb[0].mxu0
        %3587 = vdwg.mxu0
        %3588 = vmatprep.subr.bf16.mxu0 %v3324
        %3589 = vmatpush1.bf16.msra.mxu0 %v3323
        %3590 = vmatprep.subr.bf16.mxu0 %v3326
        %3591 = vmatpush1.bf16.msra.mxu0 %v3325
        %3592 = vmatprep.subr.bf16.mxu0 %v3328
        %3593 = vmatpush1.bf16.msra.mxu0 %v3327
        %3594 = vmatprep.subr.bf16.mxu0 %v3330
        %3595 = vmatpush1.bf16.msra.mxu0 %v3329
        %3596 = vmatprep.subr.bf16.mxu0 %v3332
        %3597 = vmatpush1.bf16.msra.mxu0 %v3331
        %3598 = vmatprep.subr.bf16.mxu0 %v3334
        %3599 = vmatpush1.bf16.msra.mxu0 %v3333
        %3600 = vmatprep.subr.bf16.mxu0 %v3336
        %3601 = vmatpush1.bf16.msra.mxu0 %v3335
        %3602 = vmatprep.subr.bf16.mxu0 %v3338
        %3603 = vmatpush1.bf16.msra.mxu0 %v3337
        %3604 = vmatprep.subr.bf16.mxu0 %v3340
        %3605 = vmatpush1.bf16.msra.mxu0 %v3339
        %3606 = vmatprep.subr.bf16.mxu0 %v3342
        %3607 = vmatpush1.bf16.msra.mxu0 %v3341
        %3608 = vmatprep.subr.bf16.mxu0 %v3344
        %3609 = vmatpush1.bf16.msra.mxu0 %v3343
        %3610 = vmatprep.subr.bf16.mxu0 %v3346
        %3611 = vmatpush1.bf16.msra.mxu0 %v3345
        %3612 = vmatprep.subr.bf16.mxu0 %v3348
        %3613 = vmatpush1.bf16.msra.mxu0 %v3347
        %3614 = vmatprep.subr.bf16.mxu0 %v3350
        %3615 = vmatpush1.bf16.msra.mxu0 %v3349
        %3616 = vmatprep.subr.bf16.mxu0 %v3352
        %3617 = vmatpush1.bf16.msra.mxu0 %v3351
        %3618 = vmatprep.subr.bf16.mxu0 %v3354
        %3619 = vmatpush1.bf16.msra.mxu0 %v3353
        %3620 = vmatprep.mubr.bf16.mxu0 %v2897
        %3621 = vmatmul.mubr.bf16.gmra.mrb[0].mxu0 %v2895
        %v3622 = vpop.f32.mrb[0].mxu0
        %v3623 = vadd.f32 %v3582, %v3622
        %v3624 = vpop.f32.mrb[0].mxu0
        %v3625 = vadd.f32 %v3584, %v3624
        %v3626 = vpop.f32.mrb[0].mxu0
        %v3627 = vpop.f32.mrb[0].mxu0
        %3628 = vdwg.mxu0
        %3629 = vmatprep.subr.bf16.mxu0 %v3356
        %3630 = vmatpush1.bf16.msra.mxu0 %v3355
        %3631 = vmatprep.subr.bf16.mxu0 %v3358
        %3632 = vmatpush1.bf16.msra.mxu0 %v3357
        %3633 = vmatprep.subr.bf16.mxu0 %v3360
        %3634 = vmatpush1.bf16.msra.mxu0 %v3359
        %3635 = vmatprep.subr.bf16.mxu0 %v3362
        %3636 = vmatpush1.bf16.msra.mxu0 %v3361
        %3637 = vmatprep.subr.bf16.mxu0 %v3364
        %3638 = vmatpush1.bf16.msra.mxu0 %v3363
        %3639 = vmatprep.subr.bf16.mxu0 %v3366
        %3640 = vmatpush1.bf16.msra.mxu0 %v3365
        %3641 = vmatprep.subr.bf16.mxu0 %v3368
        %3642 = vmatpush1.bf16.msra.mxu0 %v3367
        %3643 = vmatprep.subr.bf16.mxu0 %v3370
        %3644 = vmatpush1.bf16.msra.mxu0 %v3369
        %3645 = vmatprep.subr.bf16.mxu0 %v3372
        %3646 = vmatpush1.bf16.msra.mxu0 %v3371
        %3647 = vmatprep.subr.bf16.mxu0 %v3374
        %3648 = vmatpush1.bf16.msra.mxu0 %v3373
        %3649 = vmatprep.subr.bf16.mxu0 %v3376
        %3650 = vmatpush1.bf16.msra.mxu0 %v3375
        %3651 = vmatprep.subr.bf16.mxu0 %v3378
        %3652 = vmatpush1.bf16.msra.mxu0 %v3377
        %3653 = vmatprep.subr.bf16.mxu0 %v3380
        %3654 = vmatpush1.bf16.msra.mxu0 %v3379
        %3655 = vmatprep.subr.bf16.mxu0 %v3382
        %3656 = vmatpush1.bf16.msra.mxu0 %v3381
        %3657 = vmatprep.subr.bf16.mxu0 %v3384
        %3658 = vmatpush1.bf16.msra.mxu0 %v3383
        %3659 = vmatprep.subr.bf16.mxu0 %v3386
        %3660 = vmatpush1.bf16.msra.mxu0 %v3385
        %3661 = vmatprep.mubr.bf16.mxu0 %v2894
        %3662 = vmatmul.mubr.bf16.gmra.mrb[0].mxu0 %v2880
        %v3663 = vpop.f32.mrb[0].mxu0
        %v3664 = vadd.f32 %v3623, %v3663
        %v3665 = vpop.f32.mrb[0].mxu0
        %v3666 = vadd.f32 %v3625, %v3665
        %v3667 = vpop.f32.mrb[0].mxu0
        %v3668 = vpop.f32.mrb[0].mxu0
        %3669 = vdwg.mxu0
        %3670 = vmatprep.subr.bf16.mxu0 %v3388
        %3671 = vmatpush1.bf16.msra.mxu0 %v3387
        %3672 = vmatprep.subr.bf16.mxu0 %v3390
        %3673 = vmatpush1.bf16.msra.mxu0 %v3389
        %3674 = vmatprep.subr.bf16.mxu0 %v3392
        %3675 = vmatpush1.bf16.msra.mxu0 %v3391
        %3676 = vmatprep.subr.bf16.mxu0 %v3394
        %3677 = vmatpush1.bf16.msra.mxu0 %v3393
        %3678 = vmatprep.subr.bf16.mxu0 %v3396
        %3679 = vmatpush1.bf16.msra.mxu0 %v3395
        %3680 = vmatprep.subr.bf16.mxu0 %v3398
        %3681 = vmatpush1.bf16.msra.mxu0 %v3397
        %3682 = vmatprep.subr.bf16.mxu0 %v3400
        %3683 = vmatpush1.bf16.msra.mxu0 %v3399
        %3684 = vmatprep.subr.bf16.mxu0 %v3402
        %3685 = vmatpush1.bf16.msra.mxu0 %v3401
        %3686 = vmatprep.subr.bf16.mxu0 %v3404
        %3687 = vmatpush1.bf16.msra.mxu0 %v3403
        %3688 = vmatprep.subr.bf16.mxu0 %v3406
        %3689 = vmatpush1.bf16.msra.mxu0 %v3405
        %3690 = vmatprep.subr.bf16.mxu0 %v3408
        %3691 = vmatpush1.bf16.msra.mxu0 %v3407
        %3692 = vmatprep.subr.bf16.mxu0 %v3410
        %3693 = vmatpush1.bf16.msra.mxu0 %v3409
        %3694 = vmatprep.subr.bf16.mxu0 %v3412
        %3695 = vmatpush1.bf16.msra.mxu0 %v3411
        %3696 = vmatprep.subr.bf16.mxu0 %v3414
        %3697 = vmatpush1.bf16.msra.mxu0 %v3413
        %3698 = vmatprep.subr.bf16.mxu0 %v3416
        %3699 = vmatpush1.bf16.msra.mxu0 %v3415
        %3700 = vmatprep.subr.bf16.mxu0 %v3418
        %3701 = vmatpush1.bf16.msra.mxu0 %v3417
        %3702 = vmatprep.mubr.bf16.mxu0 %v2898
        %3703 = vmatmul.mubr.bf16.gmra.mrb[0].mxu0 %v2896
        %v3704 = vpop.f32.mrb[0].mxu0
        %v3705 = vadd.f32 %v3664, %v3704
        %v3706 = vpop.f32.mrb[0].mxu0
        %v3707 = vadd.f32 %v3666, %v3706
        %v3708 = vpop.f32.mrb[0].mxu0
        %v3709 = vpop.f32.mrb[0].mxu0
        %3710 = vdwg.mxu0
        %v3711 = vsub.f32 0.0, %v3705
        %v3712 = vsub.f32 0.0, %v3707
        %v3713 = vmul.f32 %v3711, 1.442695
        %v3714 = vpow.pop %v3713
        %v3715 = vmul.f32 %v3712, 1.442695
        %v3716 = vpow.pop %v3715
        %v3717 = vadd.f32 %v3714, 1.0
        %v3718 = vadd.f32 %v3716, 1.0
        %v3719 = vrcp.pop %v3717
        %v3720 = vrcp.pop %v3718
        %v3723 = vcombine.low %v3719, %v3720
        %v3725 = vunpack.c.l.s4 1983009808
        %v3726 = vunpack.c.0.s8 %v3725
        %v3727 = vlaneseq
        %v3728 = vshrl.u32 %v3727, 7
        %v3729 = vsub.s32 %v3726, %v3728
        %v3730 = vrot.slane %v3723, %v3729
        %3732 = vst [vmem:[%s460] sm:$0xf] %v3730
        %s3733 = sand.u32 %s234, 1
        %s3734 = scalar_lea.sflag [#allocation5], %s3733
        %s3735 = sand.u32 %s234, 1
        %s3736 = smul.addr %s3735, 4
        %s3737 = scalar_lea.vmem [#allocation16], %s3736
        // Predicated region
        $region93: #{tpu_custom_call.1} parent=55 // pred_check
          %p3738 = pneg %p244
        $region94: #{tpu_custom_call.1} parent=55 // pred_check_branch
          %3740 = sbr.rel (%p3738) target = $region96
        $region95: #{tpu_custom_call.1} parent=55 // pred_region
          %s3741 = smul.u32 2, %s27
          %s3743 = ssub.s32 64, 64
          %3744 = vsyncadd %s3734, %s3743
          %s3745 = smul.addr %s3741, 32
          %s3746 = scalar_lea.hbm %s9, %s3745
          %s3748 = sshll.u32 %s3737, 4
          %s3749 = int_to_ptr.vmem [resolvable:$true] %s3748
          %3751 = dma.vmem_to_hbm [thread:$0]  %s3749, 64, %s3746, %s3734
        $region96: #{tpu_custom_call.1} parent=55 // pred_fallthru
          _
      $region56: #{tpu_custom_call.1} parent=5 // pred_fallthru
        _
      %p3752 = scmp.le.s32.totalorder 2, %s22
      // Predicated region
      $region97: #{tpu_custom_call.1} parent=5 // pred_check
        %p3753 = pneg %p3752
      $region98: #{tpu_custom_call.1} parent=5 // pred_check_branch
        %3755 = sbr.rel (%p3753) target = $region100
      $region99: #{tpu_custom_call.1} parent=5 // pred_region
        %s3756 = ssub.s32 %s22, 2
        // Predicated region
        $region101: #{tpu_custom_call.1} parent=99 // pred_check
          %p3757 = pneg %p250
        $region102: #{tpu_custom_call.1} parent=99 // pred_check_branch
          %3759 = sbr.rel (%p3757) target = $region104
        $region103: #{tpu_custom_call.1} parent=99 // pred_region
          %s3760 = sand.u32 %s235, 1
          %s3761 = scalar_lea.sflag [#allocation5], %s3760
          %s3762 = sand.u32 %s235, 1
          %s3763 = smul.addr %s3762, 4
          %s3764 = scalar_lea.vmem [#allocation16], %s3763
          %3765 = dma.done %s3761, 64
        $region104: #{tpu_custom_call.1} parent=99 // pred_fallthru
          _
      $region100: #{tpu_custom_call.1} parent=5 // pred_fallthru
        _
    $region6: #{tpu_custom_call.1} parent=1 // loop_footer
      %s26 = sadd.s32 1, %s22
    $region7: #{tpu_custom_call.1} parent=1 // loop_footer_branch
      %21 = sbr.rel target = $region3
    $region8: #{tpu_custom_call.1} parent=1 // loop_exit
      _
    %3766 = vsyncpa [#allocation4], 1
    %s3767 = scalar_lea.sflag [#allocation4], 1
    %3768 = vsyncpa %s3767, 1
    %3769 = vsyncpa [#allocation7], 1
    %3770 = vsyncpa [#allocation10], 1
    %3771 = vsyncpa [#allocation13], 1
    %3772 = vsyncpa [#allocation5], 1
    %s3773 = scalar_lea.sflag [#allocation5], 1
    %3774 = vsyncpa %s3773, 1

</llo_original>
